<compile_context>
chip_gen: v7x
topology: tpu7x:2x2x1
jax: 0.10.0
libtpu: 0.0.40
codegen_flags: <defaults>
</compile_context>

<pallas_src>
import functools

import jax
import jax.numpy as jnp
from jax.experimental import pallas as pl
from jax.experimental.pallas import tpu as pltpu

# ----------------------------- configuration --------------------------------
B = 2              # batch
N = 4096           # number of input events (original: raw event stream)
NEVENT = 128       # sampled anchors          (original: 750)
NSAMPLE = 16       # ball-query group size    (original: 160)
RADIUS = 0.1       # ball-query radius        (original: 0.1)
DIM = (256, 256)   # quantization grid of Surface_Event_Sample
EMBED = 16         # embedding_size of the classifier head
EPS = 1e-5
CPAD = 128                    # conv channel dims are zero-padded to one lane width
VMEM_STEP_BUDGET = 8 << 20    # target per-grid-step working set (bytes)
VMEM_LIMIT = 32 << 20         # explicit scoped-VMEM limit (v5e default is only 16 MiB)


# ============================ Pallas kernels =================================
def _conv1(xm, w1_ref, cin):
    """1x1 conv, no bias (bias is absorbed by the following BatchNorm mean).

    xm: [R, cin_pad] (f32 for the VPU path, bf16 for the 128-wide MXU path).
    """
    if cin <= 4:
        w1 = w1_ref[...].astype(jnp.float32)          # (cin, CPAD)
        h = xm[:, 0:1] * w1[0:1, :]
        for c in range(1, cin):
            h = h + xm[:, c:c + 1] * w1[c:c + 1, :]
        return h
    return jnp.dot(xm, w1_ref[...], preferred_element_type=jnp.float32)


def _tile_stats(h, sum_ref, m2_ref):
    """Per-tile sum + centered M2 (Chan/Welford partials, combined in XLA)."""
    inv = 1.0 / h.shape[0]
    s = jnp.sum(h, axis=0, keepdims=True)             # (1, CPAD)
    d = h - s * inv
    sum_ref[0] = s
    m2_ref[0] = jnp.sum(d * d, axis=0, keepdims=True)


def efe_stats1_kernel(cin, x_ref, w1_ref, sum_ref, m2_ref):
    """Pass 1: conv1 and BN1 partial statistics for one row tile."""
    xs = x_ref[...]
    gp, kt, cp = xs.shape
    h1 = _conv1(xs.reshape(gp * kt, cp), w1_ref, cin)
    _tile_stats(h1, sum_ref, m2_ref)


def efe_stats2_kernel(cin, x_ref, w1_ref, sc1_ref, sh1_ref, w2_ref, sum_ref, m2_ref):
    """Pass 2: conv1 -> BN1 -> ReLU -> conv2 and BN2 partial statistics."""
    xs = x_ref[...]
    gp, kt, cp = xs.shape
    h1 = _conv1(xs.reshape(gp * kt, cp), w1_ref, cin)
    h1 = jnp.maximum(h1 * sc1_ref[...] + sh1_ref[...], 0.0)
    h2 = jnp.dot(h1.astype(jnp.bfloat16), w2_ref[...],
                 preferred_element_type=jnp.float32)
    _tile_stats(h2, sum_ref, m2_ref)


def efe_apply_kernel(cin, x_ref, w1_ref, sc1_ref, sh1_ref, w2_ref,
                     sc2_ref, sh2_ref, out_ref):
    """Pass 3: full chain + max over the (chunk of the) group axis, lane-dense out."""
    xs = x_ref[...]
    gp, kt, cp = xs.shape
    h1 = _conv1(xs.reshape(gp * kt, cp), w1_ref, cin)
    h1 = jnp.maximum(h1 * sc1_ref[...] + sh1_ref[...], 0.0)
    h2 = jnp.dot(h1.astype(jnp.bfloat16), w2_ref[...],
                 preferred_element_type=jnp.float32)
    h2 = jnp.maximum(h2 * sc2_ref[...] + sh2_ref[...], 0.0)
    # TODO(synk): when kt % 8 != 0 this reshape is a relayout copy, not a view.
    out_ref[...] = jnp.max(h2.reshape(gp, kt, CPAD), axis=1, keepdims=True)


def ball_query_kernel(radius_sq, n_total, new_ref, xyt_ref, out_ref):
    """Fused square_distance + radius mask of research_circle (int32 candidates).

    new_ref: [1, S, 2]   anchors
    xyt_ref: [1, 2, Nt]  events, pre-transposed so N sits on lanes
    out_ref: [1, S, Nt]  int32: column index if inside the ball, else N
    """
    a = new_ref[0]                     # (S, 2)
    bt = xyt_ref[0]                    # (2, Nt)
    ax, ay = a[:, 0:1], a[:, 1:2]
    bx, by = bt[0:1, :], bt[1:2, :]
    d = -2.0 * (ax * bx + ay * by) + (ax * ax + ay * ay) + (bx * bx + by * by)
    s, nt = d.shape
    col = jax.lax.broadcasted_iota(jnp.int32, (s, nt), 1) + pl.program_id(1) * nt
    out_ref[0] = jnp.where(d > radius_sq, n_total, col)


# ============================ tiling helpers =================================
def _largest_divisor_leq(n, cap, step=1):
    """Largest d with d | n, d <= cap, d % step == 0 (None if no such d)."""
    best = None
    for d in range(1, int(min(n, cap)) + 1):
        if n % d == 0 and d % step == 0:
            best = d
    return best


def _pick_tiles(g, k, cin_pad, in_itemsize):
    """(groups_per_tile, K rows per tile) with a VMEM-budget-driven row count."""
    per_row = (cin_pad * in_itemsize * 2      # input tile, double buffered
               + CPAD * 4 * 2                 # h1 / h2 f32 intermediates
               + CPAD * 2)                    # bf16 copy of h1 for the MXU
    rows = int(max(512, min(2048, VMEM_STEP_BUDGET // per_row)))
    if g * k <= rows:
        return g, k                           # whole problem in one grid step
    if k > rows:
        # K-tiling (group_all layers, G = batch): one group-chunk per tile.
        kt = _largest_divisor_leq(k, rows, step=8)
        if kt is None or kt < 64:
            kt = _largest_divisor_leq(k, rows, step=1)
        if kt is None or kt < 64:
            # TODO(synk): masked-tail K tiling for awkward (prime / odd) K.
            kt = k
        return 1, kt
    gp = _largest_divisor_leq(g, max(1, rows // k), step=1)
    return (gp if gp is not None else 1), k


def _pick_lane_tile(n, target=2048):
    """N-tile for the ball-query kernel: multiple of 128 dividing N, else full N."""
    if n <= target:
        return n
    for t in range(target - target % 128, 0, -128):
        if n % t == 0:
            return t
    return n


# ============================ Pallas wrappers ================================
def _bn_scale_shift(tile_sum, tile_m2, n_tile, n_total, gamma, beta):
    """Combine per-tile (sum, centered-M2) partials; fold BN (training-mode,
    biased var) + affine into a single per-channel scale/shift."""
    mean = jnp.sum(tile_sum, axis=0) / n_total                    # (CPAD,)
    tile_mean = tile_sum / n_tile
    m2 = (jnp.sum(tile_m2, axis=0)
          + n_tile * jnp.sum((tile_mean - mean) ** 2, axis=0))
    var = m2 / n_total
    scale = gamma.reshape(-1) * jax.lax.rsqrt(var + EPS)
    shift = beta.reshape(-1) - mean * scale
    return scale.reshape(1, CPAD), shift.reshape(1, CPAD)


def efe_mlp(x4d, p, c2):
    """AERNet_EFE shared MLP: [B, S, K, cin] channels-last -> [B, S, c2]."""
    b, s, k, cin = x4d.shape
    g = b * s
    wide = cin > 4
    cin_pad = p["w1"].shape[0]                 # 128 on the MXU path, cin otherwise
    x3 = x4d.reshape(g, k, cin)
    if wide:
        # lane-dense loads + native K=128 MXU contraction; bf16 halves input DMA.
        x3 = jnp.pad(x3, ((0, 0), (0, 0), (0, cin_pad - cin))).astype(jnp.bfloat16)
    gp, kt = _pick_tiles(g, k, cin_pad, 2 if wide else 4)
    nk = k // kt
    if nk > 1:                                 # materialize the K-split as row tiles
        x3 = x3.reshape(g * nk, kt, x3.shape[-1])
    t = (g * nk) // gp
    rows_tile = gp * kt
    rows_total = g * k

    cparams = pltpu.CompilerParams(dimension_semantics=("parallel",),
                                   vmem_limit_bytes=VMEM_LIMIT)
    x_spec = pl.BlockSpec((gp, kt, x3.shape[-1]), lambda i: (i, 0, 0))
    w1_spec = pl.BlockSpec(p["w1"].shape, lambda i: (0, 0))
    w2_spec = pl.BlockSpec((CPAD, CPAD), lambda i: (0, 0))
    vec_spec = pl.BlockSpec((1, CPAD), lambda i: (0, 0))
    stat_spec = pl.BlockSpec((1, 1, CPAD), lambda i: (i, 0, 0))
    stat_shape = jax.ShapeDtypeStruct((t, 1, CPAD), jnp.float32)

    # ---- pass 1: conv1 BN statistics (per-tile partials, combined in XLA) ----
    s1, m1 = pl.pallas_call(
        functools.partial(efe_stats1_kernel, cin),
        out_shape=(stat_shape, stat_shape),
        grid=(t,),
        in_specs=[x_spec, w1_spec],
        out_specs=(stat_spec, stat_spec),
        compiler_params=cparams,
    )(x3, p["w1"])
    sc1, sh1 = _bn_scale_shift(s1[:, 0], m1[:, 0], rows_tile, rows_total,
                               p["g1"], p["be1"])

    # ---- pass 2: conv2 BN statistics ----
    s2, m2 = pl.pallas_call(
        functools.partial(efe_stats2_kernel, cin),
        out_shape=(stat_shape, stat_shape),
        grid=(t,),
        in_specs=[x_spec, w1_spec, vec_spec, vec_spec, w2_spec],
        out_specs=(stat_spec, stat_spec),
        compiler_params=cparams,
    )(x3, p["w1"], sc1, sh1, p["w2"])
    sc2, sh2 = _bn_scale_shift(s2[:, 0], m2[:, 0], rows_tile, rows_total,
                               p["g2"], p["be2"])

    # ---- pass 3: full chain + per-group / per-chunk max, lane-dense output ----
    out = pl.pallas_call(
        functools.partial(efe_apply_kernel, cin),
        out_shape=jax.ShapeDtypeStruct((g * nk, 1, CPAD), jnp.float32),
        grid=(t,),
        in_specs=[x_spec, w1_spec, vec_spec, vec_spec, w2_spec, vec_spec, vec_spec],
        out_specs=pl.BlockSpec((gp, 1, CPAD), lambda i: (i, 0, 0)),
        compiler_params=cparams,
    )(x3, p["w1"], sc1, sh1, p["w2"], sc2, sh2)

    out = out[:, 0, :]                         # [G*nk, CPAD]
    if nk > 1:                                 # finish the K-tiled max in XLA (tiny)
        out = jnp.max(out.reshape(g, nk, CPAD), axis=1)
    return out[:, :c2].reshape(b, s, c2)


def pallas_ball_query(new_xy, xy, radius, nsample):
    """research_circle with the distance + radius test fused in a Pallas kernel."""
    b, s_, _ = new_xy.shape
    n = xy.shape[1]
    n_t = _pick_lane_tile(n)
    xy_t = jnp.transpose(xy, (0, 2, 1))        # [B, 2, N]; tiny, done by XLA
    cand = pl.pallas_call(
        functools.partial(ball_query_kernel, radius * radius, n),
        out_shape=jax.ShapeDtypeStruct((b, s_, n), jnp.int32),
        grid=(b, n // n_t),
        in_specs=[pl.BlockSpec((1, s_, 2), lambda i, j: (i, 0, 0)),
                  pl.BlockSpec((1, 2, n_t), lambda i, j: (i, 0, j))],
        out_specs=pl.BlockSpec((1, s_, n_t), lambda i, j: (i, 0, j)),
        compiler_params=pltpu.CompilerParams(
            dimension_semantics=("parallel", "parallel"),
            vmem_limit_bytes=VMEM_LIMIT),
    )(new_xy, xy_t)
    idx = jnp.sort(cand, axis=-1)[:, :, :nsample]
    first = idx[:, :, 0:1]
    return jnp.where(idx == n, jnp.broadcast_to(first, idx.shape), idx)


# ============================ plain-JAX glue =================================
def index_events(events, idx):
    """events [B,N,D], idx [B,...] -> [B,...,D]  (per-batch gather, left to XLA)."""
    return jax.vmap(lambda e, i: e[i])(events, idx)


def surface_event_sample_det(xy, nevent, dim):
    """Deterministic stand-in for Surface_Event_Sample.forward.

    Quantizes events to the voxel grid, keeps events that are the unique (or first)
    occupant of their voxel, then picks `nevent` of them round-robin.
    """
    # TODO(synk): original uses torch.randint + host-side np.unique; the random
    # with-replacement draw is replaced by a deterministic round-robin here.
    w, h = dim
    m = min(dim)
    q = (xy * (m - 1)).astype(jnp.int32)
    cell = q[..., 0] + w * q[..., 1]                       # [B, N]
    n = xy.shape[1]

    def per_batch(cell_b):
        counts = jnp.zeros((w * h,), jnp.int32).at[cell_b].add(1)
        cnt = counts[cell_b]
        first = jnp.full((w * h,), n, jnp.int32).at[cell_b].min(
            jnp.arange(n, dtype=jnp.int32))
        is_first = first[cell_b] == jnp.arange(n, dtype=jnp.int32)
        valid = (cnt == 1) | ((cnt > 1) & is_first)
        order = jnp.argsort(jnp.where(valid, 0, 1).astype(jnp.int32), stable=True)
        nvalid = jnp.maximum(valid.sum(), 1)
        pos = jnp.arange(nevent, dtype=jnp.int32) % nvalid
        return order[pos].astype(jnp.int32)

    return jax.vmap(per_batch)(cell)


# ============================ parameter init =================================
def init_efe_params(key, cin, c1, c2):
    """Conv/BN params: conv weights stored bf16 (MXU-native), output channels
    zero-padded to CPAD, input channels padded to CPAD on the MXU path.
    Conv biases are kept for PyTorch-state parity but are NOT used in compute:
    they are algebraically absorbed by the BatchNorm mean subtraction."""
    k1, k2, k3, k4 = jax.random.split(key, 4)
    cin_pad = cin if cin <= 4 else CPAD

    def pad_to(a, rows):
        return jnp.pad(a, ((0, rows - a.shape[0]), (0, CPAD - a.shape[1])))

    w1 = 0.1 * jax.random.normal(k1, (cin, c1), jnp.float32)
    b1 = 0.1 * jax.random.normal(k2, (1, c1), jnp.float32)
    w2 = 0.1 * jax.random.normal(k3, (c1, c2), jnp.float32)
    b2 = 0.1 * jax.random.normal(k4, (1, c2), jnp.float32)
    return {
        "w1": pad_to(w1, cin_pad).astype(jnp.bfloat16),
        "b1": pad_to(b1, 1),                              # unused (absorbed by BN1)
        "g1": pad_to(jnp.ones((1, c1), jnp.float32), 1),
        "be1": jnp.zeros((1, CPAD), jnp.float32),
        "w2": pad_to(w2, CPAD).astype(jnp.bfloat16),
        "b2": pad_to(b2, 1),                              # unused (absorbed by BN2)
        "g2": pad_to(jnp.ones((1, c2), jnp.float32), 1),
        "be2": jnp.zeros((1, CPAD), jnp.float32),
    }


def init_params(key):
    k1, k2, k3, k4, k5 = jax.random.split(key, 5)
    return {
        "efe1_1": init_efe_params(k1, 2, 32, 64),         # mlp=[32, 64]
        "efe1_3": init_efe_params(k2, 64 + 2, 64, 128),   # mlp=[64, 128]
        "efe2_1": init_efe_params(k3, 2, 32, 64),         # mlp=[32, 64]
        "cls_w": 0.1 * jax.random.normal(k4, (128 + 64, EMBED), jnp.float32),
        "cls_b": 0.1 * jax.random.normal(k5, (1, EMBED), jnp.float32),
    }


# ============================ model forward ==================================
@jax.jit
def get_model_forward(xy_in, params):
    b = xy_in.shape[0]
    xy = xy_in[:, :, :2]                                         # [B, N, 2]

    # ---- efe1_1 : sample & group + shared MLP (group_all=False) -------------
    fps_idx = surface_event_sample_det(xy, NEVENT, DIM)          # [B, NEVENT]
    new_xy = index_events(xy, fps_idx)                           # [B, NEVENT, 2]
    idx = pallas_ball_query(new_xy, xy, RADIUS, NSAMPLE)         # [B, NEVENT, NSAMPLE]
    # TODO(synk): this gather stays in XLA; a PrefetchScalarGridSpec + pl.Element
    # row-gather inside efe_mlp would avoid materializing grouped_xy in HBM.
    grouped_xy = index_events(xy, idx)                           # [B, NEVENT, NSAMPLE, 2]
    grouped_xy_norm = grouped_xy - new_xy[:, :, None, :]
    l1_events = efe_mlp(grouped_xy_norm, params["efe1_1"], 64)   # [B, NEVENT, 64]
    l1_xy = new_xy

    # ---- efe1_3 : group_all over (l1_xy, l1_events) --------------------------
    grouped_all = jnp.concatenate([l1_xy[:, None], l1_events[:, None]], axis=-1)
    l3_events = efe_mlp(grouped_all, params["efe1_3"], 128)      # [B, 1, 128]

    # ---- efe2_1 : group_all over raw xy --------------------------------------
    l4_events = efe_mlp(xy[:, None], params["efe2_1"], 64)       # [B, 1, 64]

    # ---- classifier (tiny [B,192]x[192,E]; left to XLA, launch overhead wins) -
    x = jnp.concatenate([l3_events, l4_events], axis=-1).reshape(b, 128 + 64)
    return x @ params["cls_w"] + params["cls_b"]                 # [B, EMBED]


# ============================ pure-JAX references ============================
def _bn_relu_ref(h, gamma, beta):
    mu = jnp.mean(h, axis=0, keepdims=True)
    var = jnp.mean((h - mu) ** 2, axis=0, keepdims=True)
    return jnp.maximum((h - mu) * jax.lax.rsqrt(var + EPS) * gamma + beta, 0.0)


def efe_mlp_ref(x4d, p, c2):
    """Pure-JAX reference for the fused EFE MLP (same bf16 casts as the kernel)."""
    b, s, k, cin = x4d.shape
    xm = x4d.reshape(b * s * k, cin).astype(jnp.float32)
    if cin <= 4:
        h1 = xm @ p["w1"].astype(jnp.float32)
    else:
        xp = jnp.pad(xm, ((0, 0), (0, p["w1"].shape[0] - cin))).astype(jnp.bfloat16)
        h1 = jnp.dot(xp, p["w1"], preferred_element_type=jnp.float32)
    h1 = _bn_relu_ref(h1, p["g1"], p["be1"])
    h2 = jnp.dot(h1.astype(jnp.bfloat16), p["w2"], preferred_element_type=jnp.float32)
    h2 = _bn_relu_ref(h2, p["g2"], p["be2"])
    return jnp.max(h2.reshape(b * s, k, CPAD), axis=1)[:, :c2].reshape(b, s, c2)


def ball_query_ref(new_xy, xy, radius, nsample):
    b, s_, _ = new_xy.shape
    n = xy.shape[1]
    d = (-2.0 * jnp.einsum("bsc,bnc->bsn", new_xy, xy)
         + jnp.sum(new_xy ** 2, -1)[:, :, None]
         + jnp.sum(xy ** 2, -1)[:, None, :])
    base = jnp.broadcast_to(jnp.arange(n, dtype=jnp.int32), (b, s_, n))
    cand = jnp.where(d > radius * radius, n, base)
    idx = jnp.sort(cand, axis=-1)[:, :, :nsample]
    first = idx[:, :, 0:1]
    return jnp.where(idx == n, jnp.broadcast_to(first, idx.shape), idx)


# ================================= main ======================================
if __name__ == "__main__":
    key = jax.random.PRNGKey(0)
    k_in, k_par = jax.random.split(key)
    xy_in = jax.random.uniform(k_in, (B, N, 2), jnp.float32, 0.0, 1.0)
    params = init_params(k_par)
    TOL = 5e-2

    # ---- per-kernel correctness checks against pure-JAX references ----------
    xy = xy_in[:, :, :2]
    fps_idx = surface_event_sample_det(xy, NEVENT, DIM)
    new_xy = index_events(xy, fps_idx)

    idx = pallas_ball_query(new_xy, xy, RADIUS, NSAMPLE)
    idx_ref = ball_query_ref(new_xy, xy, RADIUS, NSAMPLE)
    mismatch = float(jnp.mean((idx != idx_ref).astype(jnp.float32)))
    assert mismatch < 1e-2, f"ball-query mismatch fraction {mismatch}"

    grouped = index_events(xy, idx) - new_xy[:, :, None, :]
    l1 = efe_mlp(grouped, params["efe1_1"], 64)            # narrow Cin + G-tiling
    l1_ref = efe_mlp_ref(grouped, params["efe1_1"], 64)
    assert float(jnp.max(jnp.abs(l1 - l1_ref))) < TOL

    g_all = jnp.concatenate([new_xy[:, None], l1[:, None]], axis=-1)
    l3 = efe_mlp(g_all, params["efe1_3"], 128)              # wide (pad-to-128) MXU path
    l3_ref = efe_mlp_ref(g_all, params["efe1_3"], 128)
    assert float(jnp.max(jnp.abs(l3 - l3_ref))) < TOL

    l4 = efe_mlp(xy[:, None], params["efe2_1"], 64)         # K-tiling (group_all, K=N)
    l4_ref = efe_mlp_ref(xy[:, None], params["efe2_1"], 64)
    assert float(jnp.max(jnp.abs(l4 - l4_ref))) < TOL

    # ---- full forward --------------------------------------------------------
    out = jax.block_until_ready(get_model_forward(xy_in, params))
    assert out.shape == (B, EMBED)
    assert bool(jnp.all(jnp.isfinite(out)))
    print("KERNEL_OK")
</pallas_src>

<mosaic_0001>
module attributes {stable_mosaic.version = 11 : i64} {
  func.func @ball_query_kernel(%arg0: i32, %arg1: i32, %arg2: memref<1x128x2xf32, #tpu.memory_space<vmem>>, %arg3: memref<1x2x2048xf32, #tpu.memory_space<vmem>>, %arg4: memref<1x128x2048xi32, #tpu.memory_space<vmem>>) attributes {dimension_semantics = [#tpu.dimension_semantics<parallel>, #tpu.dimension_semantics<parallel>], iteration_bounds = array<i64: 2, 2>, scalar_prefetch = 0 : i64, scratch_operands = 0 : i64, tpu.core_type = #tpu.core_type<tc>, window_params = [{transform_indices = @transform_0, window_bounds = array<i64: 1, 128, 2>}, {transform_indices = @transform_1, window_bounds = array<i64: 1, 2, 2048>}, {transform_indices = @transform_2, window_bounds = array<i64: 1, 128, 2048>}]} {
    %c0 = arith.constant 0 : index
    %c0_0 = arith.constant 0 : index
    %c0_1 = arith.constant 0 : index
    %0 = vector.load %arg2[%c0, %c0_0, %c0_1] : memref<1x128x2xf32, #tpu.memory_space<vmem>>, vector<1x128x2xf32>
    %1 = vector.shape_cast %0 : vector<1x128x2xf32> to vector<128x2xf32>
    %c0_2 = arith.constant 0 : index
    %c0_3 = arith.constant 0 : index
    %c0_4 = arith.constant 0 : index
    %2 = vector.load %arg3[%c0_2, %c0_3, %c0_4] : memref<1x2x2048xf32, #tpu.memory_space<vmem>>, vector<1x2x2048xf32>
    %3 = vector.shape_cast %2 : vector<1x2x2048xf32> to vector<2x2048xf32>
    %4 = vector.extract_strided_slice %1 {offsets = [0, 0], sizes = [128, 1], strides = [1, 1]} : vector<128x2xf32> to vector<128x1xf32>
    %5 = vector.extract_strided_slice %1 {offsets = [0, 1], sizes = [128, 1], strides = [1, 1]} : vector<128x2xf32> to vector<128x1xf32>
    %6 = vector.extract_strided_slice %3 {offsets = [0, 0], sizes = [1, 2048], strides = [1, 1]} : vector<2x2048xf32> to vector<1x2048xf32>
    %7 = vector.extract_strided_slice %3 {offsets = [1, 0], sizes = [1, 2048], strides = [1, 1]} : vector<2x2048xf32> to vector<1x2048xf32>
    %8 = vector.broadcast %4 : vector<128x1xf32> to vector<128x2048xf32>
    %9 = vector.broadcast %6 : vector<1x2048xf32> to vector<128x2048xf32>
    %10 = arith.mulf %8, %9 : vector<128x2048xf32>
    %11 = vector.broadcast %5 : vector<128x1xf32> to vector<128x2048xf32>
    %12 = vector.broadcast %7 : vector<1x2048xf32> to vector<128x2048xf32>
    %13 = arith.mulf %11, %12 : vector<128x2048xf32>
    %14 = arith.addf %10, %13 : vector<128x2048xf32>
    %cst = arith.constant -2.000000e+00 : f32
    %15 = vector.broadcast %cst : f32 to vector<128x2048xf32>
    %16 = arith.mulf %15, %14 : vector<128x2048xf32>
    %17 = arith.mulf %4, %4 : vector<128x1xf32>
    %18 = arith.mulf %5, %5 : vector<128x1xf32>
    %19 = arith.addf %17, %18 : vector<128x1xf32>
    %20 = vector.broadcast %19 : vector<128x1xf32> to vector<128x2048xf32>
    %21 = arith.addf %16, %20 : vector<128x2048xf32>
    %22 = arith.mulf %6, %6 : vector<1x2048xf32>
    %23 = arith.mulf %7, %7 : vector<1x2048xf32>
    %24 = arith.addf %22, %23 : vector<1x2048xf32>
    %25 = vector.broadcast %24 : vector<1x2048xf32> to vector<128x2048xf32>
    %26 = arith.addf %21, %25 : vector<128x2048xf32>
    %27 = tpu.iota {dimensions = array<i32: 1>} : vector<128x2048xi32>
    %c2048_i32 = arith.constant 2048 : i32
    %28 = arith.muli %arg1, %c2048_i32 : i32
    %29 = vector.broadcast %28 : i32 to vector<128x2048xi32>
    %30 = arith.addi %27, %29 : vector<128x2048xi32>
    %cst_5 = arith.constant 0.00999999977 : f32
    %31 = vector.broadcast %cst_5 : f32 to vector<128x2048xf32>
    %32 = arith.cmpf ogt, %26, %31 : vector<128x2048xf32>
    %c4096_i32 = arith.constant 4096 : i32
    %33 = vector.broadcast %c4096_i32 : i32 to vector<128x2048xi32>
    %34 = arith.select %32, %33, %30 : vector<128x2048xi1>, vector<128x2048xi32>
    %c0_6 = arith.constant 0 : index
    %c0_7 = arith.constant 0 : index
    %c0_8 = arith.constant 0 : index
    %35 = vector.load %arg4[%c0_6, %c0_7, %c0_8] : memref<1x128x2048xi32, #tpu.memory_space<vmem>>, vector<1x128x2048xi32>
    %36 = vector.shape_cast %35 : vector<1x128x2048xi32> to vector<128x2048xi32>
    %37 = vector.shape_cast %34 : vector<128x2048xi32> to vector<1x128x2048xi32>
    tpu.vector_store %arg4[%c0_6, %c0_7, %c0_8], %37 {strides = array<i32>} : memref<1x128x2048xi32, #tpu.memory_space<vmem>>, vector<1x128x2048xi32>,
    return
  }
  func.func @transform_0(%arg0: i32, %arg1: i32) -> (i32, i32, i32) {
    %c0_i32 = arith.constant 0 : i32
    %c0_i32_0 = arith.constant 0 : i32
    %c0_i32_1 = arith.constant 0 : i32
    return %arg0, %c0_i32, %c0_i32_0 : i32, i32, i32
  }
  func.func @transform_1(%arg0: i32, %arg1: i32) -> (i32, i32, i32) {
    %c0_i32 = arith.constant 0 : i32
    %c0_i32_0 = arith.constant 0 : i32
    return %arg0, %c0_i32, %arg1 : i32, i32, i32
  }
  func.func @transform_2(%arg0: i32, %arg1: i32) -> (i32, i32, i32) {
    %c0_i32 = arith.constant 0 : i32
    %c0_i32_0 = arith.constant 0 : i32
    return %arg0, %c0_i32, %arg1 : i32, i32, i32
  }
}

</mosaic_0001>

<llo_original>
// kernel: tpu_custom_call.1
$region0: #{tpu_custom_call.1}
  #allocation0 [shape = 'u32[]', space=smem, size = 0x4, offset = 0x4, fixed_abs, tag = 'smem constant byte address 0x4 - core index']
  #allocation1 [shape = 'u32[144,128]{1,0:T(1,128)}', space=vmem, size = 0x12000, scoped, tag = 'internal scratch']
  %s0 = inlined_call_operand.vmem [shape: f32[2,128,2], index: 0, kind: input, shape index: {}]
  %s1 = inlined_call_operand.hbm [shape: f32[2,2,4096], index: 1, kind: input, shape index: {}]
  %s2 = inlined_call_operand.hbm [shape: s32[2,128,4096], index: 2, kind: output, shape index: {}]
  %s3 = sld [smem:[#allocation0]]
  $region45: #{tpu_custom_call.1} parent=0
    _
  %s5 = ssub.s32 1, %s3
  %s6 = scalar_select 0, %s5, %s3
  $region1: #{tpu_custom_call.1} parent=0
    #allocation2 [shape = 'u8[32768]{0}', space=vmem, size = 0x8000, scoped, tag = 'input window, operand 1']
    #allocation3 [shape = 's32[2]{0}', space=sflag, size = 0x8, scoped, tag = 'scoped memory for tpu_custom_call.1']
    #allocation4 [shape = 's32[2]{0}', space=sflag, size = 0x8, scoped, tag = 'scoped memory for tpu_custom_call.1']
    #allocation5 [shape = 'u8[2097152]{0}', space=vmem, size = 0x200000, scoped, tag = 'output window, operand 0']
    %7 = vsyncpa [#allocation3], 0
    %s8 = scalar_lea.sflag [#allocation3], 1
    %9 = vsyncpa %s8, 0
    %10 = vsyncpa [#allocation4], 0
    %s11 = scalar_lea.sflag [#allocation4], 1
    %12 = vsyncpa %s11, 0
    loop: start=0, step=1, limit=6
    $region2: #{tpu_custom_call.1} parent=1 // loop_pre_header
      _
    $region3: #{tpu_custom_call.1} parent=1 // loop_header
      %s14 = sphi 0, %s18
      %p15 = scmp.ge.s32.totalorder %s14, 6
      %s21 = sphi 0, %s33
      %s22 = sphi 0, %s29
      %s23 = sphi 0, %s21
      %s24 = sphi 0, %s22
      %s25 = sphi 0, %s23
      %s26 = sphi 0, %s24
      %s36 = sphi 0, %s38
      %s39 = sphi 0, %s36
      %s40 = sphi 0, %s39
      %s56 = sphi 0, %s40
      %s64 = sphi 0, %s66
      %s67 = sphi 0, %s64
      %s68 = sphi 0, %s67
      %s84 = sphi 0, %s68
      %s92 = sphi 0, %s94
      %s95 = sphi 0, %s92
      %s96 = sphi 0, %s95
      %s112 = sphi 0, %s96
    $region4: #{tpu_custom_call.1} parent=1 // loop_header_branch
      %17 = sbr.rel (%p15) target = $region8
    $region5: #{tpu_custom_call.1} parent=1 // loop_body
      %s19 = ssub.s32 %s14, 1
      %s20 = ssub.s32 %s14, 2
      %s27 = sadd.s32 1, %s22
      %p28 = scmp.ge.s32.totalorder %s27, 2
      %s29 = scalar_select %p28, 0, %s27
      %s30 = sadd.s32 1, %s21
      %s31 = scalar_select %p28, %s30, %s21
      %p32 = scmp.ge.s32.totalorder %s31, 2
      %s33 = scalar_select %p32, 0, %s31
      %s34 = ssub.s32 %s21, %s33
      %p35 = scmp.eq.s32.totalorder %s34, 0
      %s37 = sadd.s32 %s36, 1
      %s38 = scalar_select %p35, %s36, %s37
      %p41 = pneg %p35
      %p42 = scmp.eq.s32.totalorder %s14, 3
      %p43 = por %p41, %p42
      %p44 = scmp.ne.s32.totalorder %s36, %s39
      %p45 = scmp.eq.s32.totalorder %s14, 0
      %p46 = por %p44, %p45
      %p47 = scmp.ne.s32.totalorder %s36, %s39
      %p48 = scmp.eq.s32.totalorder %s19, 3
      %p49 = por %p47, %p48
      %p50 = scmp.ne.s32.totalorder %s39, %s40
      %p51 = scmp.eq.s32.totalorder %s19, 0
      %p52 = por %p50, %p51
      %p53 = scmp.ne.s32.totalorder %s39, %s40
      %p54 = scmp.eq.s32.totalorder %s20, 3
      %p55 = por %p53, %p54
      %p57 = scmp.ne.s32.totalorder %s40, %s56
      %p58 = scmp.eq.s32.totalorder %s20, 0
      %p59 = por %p57, %p58
      %s60 = ssub.s32 %s21, %s33
      %s61 = ssub.s32 %s22, %s29
      %s62 = sor.u32 %s60, %s61
      %p63 = scmp.eq.s32.totalorder %s62, 0
      %s65 = sadd.s32 %s64, 1
      %s66 = scalar_select %p63, %s64, %s65
      %p69 = pneg %p63
      %p70 = scmp.eq.s32.totalorder %s14, 3
      %p71 = por %p69, %p70
      %p72 = scmp.ne.s32.totalorder %s64, %s67
      %p73 = scmp.eq.s32.totalorder %s14, 0
      %p74 = por %p72, %p73
      %p75 = scmp.ne.s32.totalorder %s64, %s67
      %p76 = scmp.eq.s32.totalorder %s19, 3
      %p77 = por %p75, %p76
      %p78 = scmp.ne.s32.totalorder %s67, %s68
      %p79 = scmp.eq.s32.totalorder %s19, 0
      %p80 = por %p78, %p79
      %p81 = scmp.ne.s32.totalorder %s67, %s68
      %p82 = scmp.eq.s32.totalorder %s20, 3
      %p83 = por %p81, %p82
      %p85 = scmp.ne.s32.totalorder %s68, %s84
      %p86 = scmp.eq.s32.totalorder %s20, 0
      %p87 = por %p85, %p86
      %s88 = ssub.s32 %s21, %s33
      %s89 = ssub.s32 %s22, %s29
      %s90 = sor.u32 %s88, %s89
      %p91 = scmp.eq.s32.totalorder %s90, 0
      %s93 = sadd.s32 %s92, 1
      %s94 = scalar_select %p91, %s92, %s93
      %p97 = pneg %p91
      %p98 = scmp.eq.s32.totalorder %s14, 3
      %p99 = por %p97, %p98
      %p100 = scmp.ne.s32.totalorder %s92, %s95
      %p101 = scmp.eq.s32.totalorder %s14, 0
      %p102 = por %p100, %p101
      %p103 = scmp.ne.s32.totalorder %s92, %s95
      %p104 = scmp.eq.s32.totalorder %s19, 3
      %p105 = por %p103, %p104
      %p106 = scmp.ne.s32.totalorder %s95, %s96
      %p107 = scmp.eq.s32.totalorder %s19, 0
      %p108 = por %p106, %p107
      %p109 = scmp.ne.s32.totalorder %s95, %s96
      %p110 = scmp.eq.s32.totalorder %s20, 3
      %p111 = por %p109, %p110
      %p113 = scmp.ne.s32.totalorder %s96, %s112
      %p114 = scmp.eq.s32.totalorder %s20, 0
      %p115 = por %p113, %p114
      %p116 = scmp.le.s32.totalorder 1, %s14
      %p117 = scmp.lt.s32.totalorder %s14, 5
      %p118 = pnand %p116, %p117
      %p119 = pneg %p118
      // Predicated region
      $region9: #{tpu_custom_call.1} parent=5 // pred_check
        _
      $region10: #{tpu_custom_call.1} parent=5 // pred_check_branch
        %121 = sbr.rel (%p118) target = $region12
      $region11: #{tpu_custom_call.1} parent=5 // pred_region
        %s122 = ssub.s32 %s14, 1
      $region12: #{tpu_custom_call.1} parent=5 // pred_fallthru
        _
      %p123 = scmp.lt.s32.totalorder %s14, 4
      // Predicated region
      $region13: #{tpu_custom_call.1} parent=5 // pred_check
        %p124 = pneg %p123
      $region14: #{tpu_custom_call.1} parent=5 // pred_check_branch
        %126 = sbr.rel (%p124) target = $region16
      $region15: #{tpu_custom_call.1} parent=5 // pred_region
        // Predicated region
        $region17: #{tpu_custom_call.1} parent=15 // pred_check
          %p127 = pneg %p46
        $region18: #{tpu_custom_call.1} parent=15 // pred_check_branch
          %129 = sbr.rel (%p127) target = $region20
        $region19: #{tpu_custom_call.1} parent=15 // pred_region
          %p130 = scmp.lt.s32.totalorder %s21, 1
          %s131 = scalar_select %p130, %s21, 1
          %s132 = smul.addr %s131, 16
          %s133 = smul.addr %s132, 8
          %s134 = scalar_lea.vmem %s0, %s133
        $region20: #{tpu_custom_call.1} parent=15 // pred_fallthru
          _
        // Predicated region
        $region21: #{tpu_custom_call.1} parent=15 // pred_check
          %p135 = pneg %p74
        $region22: #{tpu_custom_call.1} parent=15 // pred_check_branch
          %137 = sbr.rel (%p135) target = $region24
        $region23: #{tpu_custom_call.1} parent=15 // pred_region
          %s138 = sand.u32 %s64, 1
          %s139 = scalar_lea.sflag [#allocation3], %s138
          %s140 = sand.u32 %s64, 1
          %s141 = smul.addr %s140, 32
          %s142 = scalar_lea.vmem [#allocation2], %s141
          %s143 = smul.u32 16, %s22
          %s145 = ssub.s32 512, 512
          %146 = vsyncadd %s139, %s145
          %s147 = smul.addr %s21, 32
          %s148 = sadd.s32 %s143, %s147
          %s149 = smul.addr %s148, 32
          %s150 = scalar_lea.hbm %s1, %s149
          %s152 = sshll.u32 %s142, 4
          %s153 = int_to_ptr.vmem [resolvable:$true] %s152
          %155 = dma.hbm_to_vmem [thread:$0]  %s150, 512, %s153, %s139
        $region24: #{tpu_custom_call.1} parent=15 // pred_fallthru
          _
      $region16: #{tpu_custom_call.1} parent=5 // pred_fallthru
        _
      %p156 = scmp.le.s32.totalorder 1, %s14
      %p157 = scmp.lt.s32.totalorder %s14, 5
      %p158 = pnand %p156, %p157
      %p159 = pneg %p158
      // Predicated region
      $region25: #{tpu_custom_call.1} parent=5 // pred_check
        _
      $region26: #{tpu_custom_call.1} parent=5 // pred_check_branch
        %161 = sbr.rel (%p158) target = $region28
      $region27: #{tpu_custom_call.1} parent=5 // pred_region
        %s162 = ssub.s32 %s14, 1
        %s163 = sand.u32 %s67, 1
        %s164 = scalar_lea.sflag [#allocation3], %s163
        %s165 = sand.u32 %s67, 1
        %s166 = smul.addr %s165, 32
        %s167 = scalar_lea.vmem [#allocation2], %s166
        // Predicated region
        $region29: #{tpu_custom_call.1} parent=27 // pred_check
          %p168 = pneg %p80
        $region30: #{tpu_custom_call.1} parent=27 // pred_check_branch
          %170 = sbr.rel (%p168) target = $region32
        $region31: #{tpu_custom_call.1} parent=27 // pred_region
          %171 = dma.done %s164, 512
        $region32: #{tpu_custom_call.1} parent=27 // pred_fallthru
          _
        %p172 = scmp.lt.s32.totalorder %s23, 1
        %s173 = scalar_select %p172, %s23, 1
        %s174 = smul.addr %s173, 16
        %s175 = smul.addr %s174, 8
        %s176 = scalar_lea.vmem %s0, %s175
        %p177 = pneg %p52
        %p178 = pneg %p49
        %s179 = sand.u32 %s67, 1
        %s180 = scalar_lea.sflag [#allocation3], %s179
        %s181 = sand.u32 %s67, 1
        %s182 = smul.addr %s181, 32
        %s183 = scalar_lea.vmem [#allocation2], %s182
        %p184 = pneg %p80
        %p185 = pneg %p77
        %p186 = pneg %p108
        %p187 = pneg %p105
        %s188 = sand.u32 %s95, 1
        %s189 = scalar_lea.sflag [#allocation4], %s188
        %s190 = sand.u32 %s95, 1
        %s191 = smul.addr %s190, 2048
        %s192 = scalar_lea.vmem [#allocation5], %s191
        %p193 = scmp.lt.s32.totalorder %s23, 1
        %s194 = scalar_select %p193, %s23, 1
        %s195 = smul.addr %s194, 16
        %s196 = smul.addr %s195, 8
        %s197 = scalar_lea.vmem %s0, %s196
        %s198 = smul.u32 16, %s24
        %s199 = smul.u32 16, %s24
        %v200 = vld [vmem:[%s197] sm:$0xff]
        %v201 = vld [vmem:[%s197 + $0x8] sm:$0xff]
        %v202 = vld [vmem:[%s197 + $0x10] sm:$0xff]
        %v203 = vld [vmem:[%s197 + $0x18] sm:$0xff]
        %v204 = vld [vmem:[%s197 + $0x20] sm:$0xff]
        %v205 = vld [vmem:[%s197 + $0x28] sm:$0xff]
        %v206 = vld [vmem:[%s197 + $0x30] sm:$0xff]
        %v207 = vld [vmem:[%s197 + $0x38] sm:$0xff]
        %v208 = vld [vmem:[%s197 + $0x40] sm:$0xff]
        %v209 = vld [vmem:[%s197 + $0x48] sm:$0xff]
        %v210 = vld [vmem:[%s197 + $0x50] sm:$0xff]
        %v211 = vld [vmem:[%s197 + $0x58] sm:$0xff]
        %v212 = vld [vmem:[%s197 + $0x60] sm:$0xff]
        %v213 = vld [vmem:[%s197 + $0x68] sm:$0xff]
        %v214 = vld [vmem:[%s197 + $0x70] sm:$0xff]
        %v215 = vld [vmem:[%s197 + $0x78] sm:$0xff]
        %v216 = vld [vmem:[%s167] sm:$0xff]
        %v217 = vld [vmem:[%s167 + $0x8] sm:$0xff]
        %v218 = vld [vmem:[%s167 + $0x10] sm:$0xff]
        %v219 = vld [vmem:[%s167 + $0x18] sm:$0xff]
        %221 = vset.pattern.permute.xlu0 0
        %222 = vperm.xlu0 %221, %v200
        %v223 = vpop.permute.xlu0 %222
        %226 = vset.pattern.permute.xlu0 0
        %227 = vperm.xlu0 %226, %v201
        %v228 = vpop.permute.xlu0 %227
        %231 = vset.pattern.permute.xlu0 0
        %232 = vperm.xlu0 %231, %v202
        %v233 = vpop.permute.xlu0 %232
        %236 = vset.pattern.permute.xlu0 0
        %237 = vperm.xlu0 %236, %v203
        %v238 = vpop.permute.xlu0 %237
        %241 = vset.pattern.permute.xlu0 0
        %242 = vperm.xlu0 %241, %v204
        %v243 = vpop.permute.xlu0 %242
        %246 = vset.pattern.permute.xlu0 0
        %247 = vperm.xlu0 %246, %v205
        %v248 = vpop.permute.xlu0 %247
        %251 = vset.pattern.permute.xlu0 0
        %252 = vperm.xlu0 %251, %v206
        %v253 = vpop.permute.xlu0 %252
        %256 = vset.pattern.permute.xlu0 0
        %257 = vperm.xlu0 %256, %v207
        %v258 = vpop.permute.xlu0 %257
        %261 = vset.pattern.permute.xlu0 0
        %262 = vperm.xlu0 %261, %v208
        %v263 = vpop.permute.xlu0 %262
        %266 = vset.pattern.permute.xlu0 0
        %267 = vperm.xlu0 %266, %v209
        %v268 = vpop.permute.xlu0 %267
        %271 = vset.pattern.permute.xlu0 0
        %272 = vperm.xlu0 %271, %v210
        %v273 = vpop.permute.xlu0 %272
        %276 = vset.pattern.permute.xlu0 0
        %277 = vperm.xlu0 %276, %v211
        %v278 = vpop.permute.xlu0 %277
        %281 = vset.pattern.permute.xlu0 0
        %282 = vperm.xlu0 %281, %v212
        %v283 = vpop.permute.xlu0 %282
        %286 = vset.pattern.permute.xlu0 0
        %287 = vperm.xlu0 %286, %v213
        %v288 = vpop.permute.xlu0 %287
        %291 = vset.pattern.permute.xlu0 0
        %292 = vperm.xlu0 %291, %v214
        %v293 = vpop.permute.xlu0 %292
        %296 = vset.pattern.permute.xlu0 0
        %297 = vperm.xlu0 %296, %v215
        %v298 = vpop.permute.xlu0 %297
        %v304 = vlaneseq
        %v305 = vshrl.u32 %v304, 7
        %v306 = vsub.s32 0, %v305
        %v307 = vrot.slane %v216, %v306
        %v308 = vlaneseq
        %v309 = vshrl.u32 %v308, 7
        %v310 = vsub.s32 2, %v309
        %v311 = vrot.slane %v216, %v310
        %v312 = vlaneseq
        %v313 = vshrl.u32 %v312, 7
        %v314 = vsub.s32 4, %v313
        %v315 = vrot.slane %v216, %v314
        %v316 = vlaneseq
        %v317 = vshrl.u32 %v316, 7
        %v318 = vsub.s32 6, %v317
        %v319 = vrot.slane %v216, %v318
        %v320 = vlaneseq
        %v321 = vshrl.u32 %v320, 7
        %v322 = vsub.s32 0, %v321
        %v323 = vrot.slane %v217, %v322
        %v324 = vlaneseq
        %v325 = vshrl.u32 %v324, 7
        %v326 = vsub.s32 2, %v325
        %v327 = vrot.slane %v217, %v326
        %v328 = vlaneseq
        %v329 = vshrl.u32 %v328, 7
        %v330 = vsub.s32 4, %v329
        %v331 = vrot.slane %v217, %v330
        %v332 = vlaneseq
        %v333 = vshrl.u32 %v332, 7
        %v334 = vsub.s32 6, %v333
        %v335 = vrot.slane %v217, %v334
        %v336 = vlaneseq
        %v337 = vshrl.u32 %v336, 7
        %v338 = vsub.s32 0, %v337
        %v339 = vrot.slane %v218, %v338
        %v340 = vlaneseq
        %v341 = vshrl.u32 %v340, 7
        %v342 = vsub.s32 2, %v341
        %v343 = vrot.slane %v218, %v342
        %v344 = vlaneseq
        %v345 = vshrl.u32 %v344, 7
        %v346 = vsub.s32 4, %v345
        %v347 = vrot.slane %v218, %v346
        %v348 = vlaneseq
        %v349 = vshrl.u32 %v348, 7
        %v350 = vsub.s32 6, %v349
        %v351 = vrot.slane %v218, %v350
        %v352 = vlaneseq
        %v353 = vshrl.u32 %v352, 7
        %v354 = vsub.s32 0, %v353
        %v355 = vrot.slane %v219, %v354
        %v356 = vlaneseq
        %v357 = vshrl.u32 %v356, 7
        %v358 = vsub.s32 2, %v357
        %v359 = vrot.slane %v219, %v358
        %v360 = vlaneseq
        %v361 = vshrl.u32 %v360, 7
        %v362 = vsub.s32 4, %v361
        %v363 = vrot.slane %v219, %v362
        %v364 = vlaneseq
        %v365 = vshrl.u32 %v364, 7
        %v366 = vsub.s32 6, %v365
        %v367 = vrot.slane %v219, %v366
        %v384 = vlaneseq
        %v385 = vshrl.u32 %v384, 7
        %v386 = vsub.s32 0, %v385
        %v387 = vrot.slane %v307, %v386
        %v388 = vlaneseq
        %v389 = vshrl.u32 %v388, 7
        %v390 = vsub.s32 0, %v389
        %v391 = vrot.slane %v311, %v390
        %v392 = vlaneseq
        %v393 = vshrl.u32 %v392, 7
        %v394 = vsub.s32 0, %v393
        %v395 = vrot.slane %v315, %v394
        %v396 = vlaneseq
        %v397 = vshrl.u32 %v396, 7
        %v398 = vsub.s32 0, %v397
        %v399 = vrot.slane %v319, %v398
        %v400 = vlaneseq
        %v401 = vshrl.u32 %v400, 7
        %v402 = vsub.s32 0, %v401
        %v403 = vrot.slane %v323, %v402
        %v404 = vlaneseq
        %v405 = vshrl.u32 %v404, 7
        %v406 = vsub.s32 0, %v405
        %v407 = vrot.slane %v327, %v406
        %v408 = vlaneseq
        %v409 = vshrl.u32 %v408, 7
        %v410 = vsub.s32 0, %v409
        %v411 = vrot.slane %v331, %v410
        %v412 = vlaneseq
        %v413 = vshrl.u32 %v412, 7
        %v414 = vsub.s32 0, %v413
        %v415 = vrot.slane %v335, %v414
        %v416 = vlaneseq
        %v417 = vshrl.u32 %v416, 7
        %v418 = vsub.s32 0, %v417
        %v419 = vrot.slane %v339, %v418
        %v420 = vlaneseq
        %v421 = vshrl.u32 %v420, 7
        %v422 = vsub.s32 0, %v421
        %v423 = vrot.slane %v343, %v422
        %v424 = vlaneseq
        %v425 = vshrl.u32 %v424, 7
        %v426 = vsub.s32 0, %v425
        %v427 = vrot.slane %v347, %v426
        %v428 = vlaneseq
        %v429 = vshrl.u32 %v428, 7
        %v430 = vsub.s32 0, %v429
        %v431 = vrot.slane %v351, %v430
        %v432 = vlaneseq
        %v433 = vshrl.u32 %v432, 7
        %v434 = vsub.s32 0, %v433
        %v435 = vrot.slane %v355, %v434
        %v436 = vlaneseq
        %v437 = vshrl.u32 %v436, 7
        %v438 = vsub.s32 0, %v437
        %v439 = vrot.slane %v359, %v438
        %v440 = vlaneseq
        %v441 = vshrl.u32 %v440, 7
        %v442 = vsub.s32 0, %v441
        %v443 = vrot.slane %v363, %v442
        %v444 = vlaneseq
        %v445 = vshrl.u32 %v444, 7
        %v446 = vsub.s32 0, %v445
        %v447 = vrot.slane %v367, %v446
        %v448 = vmul.f32 %v223, %v387
        %v449 = vmul.f32 %v223, %v391
        %v450 = vmul.f32 %v223, %v395
        %v451 = vmul.f32 %v223, %v399
        %v452 = vmul.f32 %v223, %v403
        %v453 = vmul.f32 %v223, %v407
        %v454 = vmul.f32 %v223, %v411
        %v455 = vmul.f32 %v223, %v415
        %v456 = vmul.f32 %v223, %v419
        %v457 = vmul.f32 %v223, %v423
        %v458 = vmul.f32 %v223, %v427
        %v459 = vmul.f32 %v223, %v431
        %v460 = vmul.f32 %v223, %v435
        %v461 = vmul.f32 %v223, %v439
        %v462 = vmul.f32 %v223, %v443
        %v463 = vmul.f32 %v223, %v447
        %v464 = vmul.f32 %v228, %v387
        %v465 = vmul.f32 %v228, %v391
        %v466 = vmul.f32 %v228, %v395
        %v467 = vmul.f32 %v228, %v399
        %v468 = vmul.f32 %v228, %v403
        %v469 = vmul.f32 %v228, %v407
        %v470 = vmul.f32 %v228, %v411
        %v471 = vmul.f32 %v228, %v415
        %v472 = vmul.f32 %v228, %v419
        %v473 = vmul.f32 %v228, %v423
        %v474 = vmul.f32 %v228, %v427
        %v475 = vmul.f32 %v228, %v431
        %v476 = vmul.f32 %v228, %v435
        %v477 = vmul.f32 %v228, %v439
        %v478 = vmul.f32 %v228, %v443
        %v479 = vmul.f32 %v228, %v447
        %v480 = vmul.f32 %v233, %v387
        %v481 = vmul.f32 %v233, %v391
        %v482 = vmul.f32 %v233, %v395
        %v483 = vmul.f32 %v233, %v399
        %v484 = vmul.f32 %v233, %v403
        %v485 = vmul.f32 %v233, %v407
        %v486 = vmul.f32 %v233, %v411
        %v487 = vmul.f32 %v233, %v415
        %v488 = vmul.f32 %v233, %v419
        %v489 = vmul.f32 %v233, %v423
        %v490 = vmul.f32 %v233, %v427
        %v491 = vmul.f32 %v233, %v431
        %v492 = vmul.f32 %v233, %v435
        %v493 = vmul.f32 %v233, %v439
        %v494 = vmul.f32 %v233, %v443
        %v495 = vmul.f32 %v233, %v447
        %v496 = vmul.f32 %v238, %v387
        %v497 = vmul.f32 %v238, %v391
        %v498 = vmul.f32 %v238, %v395
        %v499 = vmul.f32 %v238, %v399
        %v500 = vmul.f32 %v238, %v403
        %v501 = vmul.f32 %v238, %v407
        %v502 = vmul.f32 %v238, %v411
        %v503 = vmul.f32 %v238, %v415
        %v504 = vmul.f32 %v238, %v419
        %v505 = vmul.f32 %v238, %v423
        %v506 = vmul.f32 %v238, %v427
        %v507 = vmul.f32 %v238, %v431
        %v508 = vmul.f32 %v238, %v435
        %v509 = vmul.f32 %v238, %v439
        %v510 = vmul.f32 %v238, %v443
        %v511 = vmul.f32 %v238, %v447
        %v512 = vmul.f32 %v243, %v387
        %v513 = vmul.f32 %v243, %v391
        %v514 = vmul.f32 %v243, %v395
        %v515 = vmul.f32 %v243, %v399
        %v516 = vmul.f32 %v243, %v403
        %v517 = vmul.f32 %v243, %v407
        %v518 = vmul.f32 %v243, %v411
        %v519 = vmul.f32 %v243, %v415
        %v520 = vmul.f32 %v243, %v419
        %v521 = vmul.f32 %v243, %v423
        %v522 = vmul.f32 %v243, %v427
        %v523 = vmul.f32 %v243, %v431
        %v524 = vmul.f32 %v243, %v435
        %v525 = vmul.f32 %v243, %v439
        %v526 = vmul.f32 %v243, %v443
        %v527 = vmul.f32 %v243, %v447
        %v528 = vmul.f32 %v248, %v387
        %v529 = vmul.f32 %v248, %v391
        %v530 = vmul.f32 %v248, %v395
        %v531 = vmul.f32 %v248, %v399
        %v532 = vmul.f32 %v248, %v403
        %v533 = vmul.f32 %v248, %v407
        %v534 = vmul.f32 %v248, %v411
        %v535 = vmul.f32 %v248, %v415
        %v536 = vmul.f32 %v248, %v419
        %v537 = vmul.f32 %v248, %v423
        %v538 = vmul.f32 %v248, %v427
        %v539 = vmul.f32 %v248, %v431
        %v540 = vmul.f32 %v248, %v435
        %v541 = vmul.f32 %v248, %v439
        %v542 = vmul.f32 %v248, %v443
        %v543 = vmul.f32 %v248, %v447
        %v544 = vmul.f32 %v253, %v387
        %v545 = vmul.f32 %v253, %v391
        %v546 = vmul.f32 %v253, %v395
        %v547 = vmul.f32 %v253, %v399
        %v548 = vmul.f32 %v253, %v403
        %v549 = vmul.f32 %v253, %v407
        %v550 = vmul.f32 %v253, %v411
        %v551 = vmul.f32 %v253, %v415
        %v552 = vmul.f32 %v253, %v419
        %v553 = vmul.f32 %v253, %v423
        %v554 = vmul.f32 %v253, %v427
        %v555 = vmul.f32 %v253, %v431
        %v556 = vmul.f32 %v253, %v435
        %v557 = vmul.f32 %v253, %v439
        %v558 = vmul.f32 %v253, %v443
        %v559 = vmul.f32 %v253, %v447
        %v560 = vmul.f32 %v258, %v387
        %v561 = vmul.f32 %v258, %v391
        %v562 = vmul.f32 %v258, %v395
        %v563 = vmul.f32 %v258, %v399
        %v564 = vmul.f32 %v258, %v403
        %v565 = vmul.f32 %v258, %v407
        %v566 = vmul.f32 %v258, %v411
        %v567 = vmul.f32 %v258, %v415
        %v568 = vmul.f32 %v258, %v419
        %v569 = vmul.f32 %v258, %v423
        %v570 = vmul.f32 %v258, %v427
        %v571 = vmul.f32 %v258, %v431
        %v572 = vmul.f32 %v258, %v435
        %v573 = vmul.f32 %v258, %v439
        %v574 = vmul.f32 %v258, %v443
        %v575 = vmul.f32 %v258, %v447
        %v576 = vmul.f32 %v263, %v387
        %v577 = vmul.f32 %v263, %v391
        %v578 = vmul.f32 %v263, %v395
        %v579 = vmul.f32 %v263, %v399
        %v580 = vmul.f32 %v263, %v403
        %v581 = vmul.f32 %v263, %v407
        %v582 = vmul.f32 %v263, %v411
        %v583 = vmul.f32 %v263, %v415
        %v584 = vmul.f32 %v263, %v419
        %v585 = vmul.f32 %v263, %v423
        %v586 = vmul.f32 %v263, %v427
        %v587 = vmul.f32 %v263, %v431
        %v588 = vmul.f32 %v263, %v435
        %v589 = vmul.f32 %v263, %v439
        %v590 = vmul.f32 %v263, %v443
        %v591 = vmul.f32 %v263, %v447
        %v592 = vmul.f32 %v268, %v387
        %v593 = vmul.f32 %v268, %v391
        %v594 = vmul.f32 %v268, %v395
        %v595 = vmul.f32 %v268, %v399
        %v596 = vmul.f32 %v268, %v403
        %v597 = vmul.f32 %v268, %v407
        %v598 = vmul.f32 %v268, %v411
        %v599 = vmul.f32 %v268, %v415
        %v600 = vmul.f32 %v268, %v419
        %v601 = vmul.f32 %v268, %v423
        %v602 = vmul.f32 %v268, %v427
        %v603 = vmul.f32 %v268, %v431
        %v604 = vmul.f32 %v268, %v435
        %v605 = vmul.f32 %v268, %v439
        %v606 = vmul.f32 %v268, %v443
        %v607 = vmul.f32 %v268, %v447
        %v608 = vmul.f32 %v273, %v387
        %v609 = vmul.f32 %v273, %v391
        %v610 = vmul.f32 %v273, %v395
        %v611 = vmul.f32 %v273, %v399
        %v612 = vmul.f32 %v273, %v403
        %v613 = vmul.f32 %v273, %v407
        %v614 = vmul.f32 %v273, %v411
        %v615 = vmul.f32 %v273, %v415
        %v616 = vmul.f32 %v273, %v419
        %v617 = vmul.f32 %v273, %v423
        %v618 = vmul.f32 %v273, %v427
        %v619 = vmul.f32 %v273, %v431
        %v620 = vmul.f32 %v273, %v435
        %v621 = vmul.f32 %v273, %v439
        %v622 = vmul.f32 %v273, %v443
        %v623 = vmul.f32 %v273, %v447
        %v624 = vmul.f32 %v278, %v387
        %v625 = vmul.f32 %v278, %v391
        %v626 = vmul.f32 %v278, %v395
        %v627 = vmul.f32 %v278, %v399
        %v628 = vmul.f32 %v278, %v403
        %v629 = vmul.f32 %v278, %v407
        %v630 = vmul.f32 %v278, %v411
        %v631 = vmul.f32 %v278, %v415
        %v632 = vmul.f32 %v278, %v419
        %v633 = vmul.f32 %v278, %v423
        %v634 = vmul.f32 %v278, %v427
        %v635 = vmul.f32 %v278, %v431
        %v636 = vmul.f32 %v278, %v435
        %v637 = vmul.f32 %v278, %v439
        %v638 = vmul.f32 %v278, %v443
        %v639 = vmul.f32 %v278, %v447
        %v640 = vmul.f32 %v283, %v387
        %v641 = vmul.f32 %v283, %v391
        %v642 = vmul.f32 %v283, %v395
        %v643 = vmul.f32 %v283, %v399
        %v644 = vmul.f32 %v283, %v403
        %v645 = vmul.f32 %v283, %v407
        %v646 = vmul.f32 %v283, %v411
        %v647 = vmul.f32 %v283, %v415
        %v648 = vmul.f32 %v283, %v419
        %v649 = vmul.f32 %v283, %v423
        %v650 = vmul.f32 %v283, %v427
        %v651 = vmul.f32 %v283, %v431
        %v652 = vmul.f32 %v283, %v435
        %v653 = vmul.f32 %v283, %v439
        %v654 = vmul.f32 %v283, %v443
        %v655 = vmul.f32 %v283, %v447
        %v656 = vmul.f32 %v288, %v387
        %v657 = vmul.f32 %v288, %v391
        %v658 = vmul.f32 %v288, %v395
        %v659 = vmul.f32 %v288, %v399
        %v660 = vmul.f32 %v288, %v403
        %v661 = vmul.f32 %v288, %v407
        %v662 = vmul.f32 %v288, %v411
        %v663 = vmul.f32 %v288, %v415
        %v664 = vmul.f32 %v288, %v419
        %v665 = vmul.f32 %v288, %v423
        %v666 = vmul.f32 %v288, %v427
        %v667 = vmul.f32 %v288, %v431
        %v668 = vmul.f32 %v288, %v435
        %v669 = vmul.f32 %v288, %v439
        %v670 = vmul.f32 %v288, %v443
        %v671 = vmul.f32 %v288, %v447
        %v672 = vmul.f32 %v293, %v387
        %v673 = vmul.f32 %v293, %v391
        %v674 = vmul.f32 %v293, %v395
        %v675 = vmul.f32 %v293, %v399
        %v676 = vmul.f32 %v293, %v403
        %v677 = vmul.f32 %v293, %v407
        %v678 = vmul.f32 %v293, %v411
        %v679 = vmul.f32 %v293, %v415
        %v680 = vmul.f32 %v293, %v419
        %v681 = vmul.f32 %v293, %v423
        %v682 = vmul.f32 %v293, %v427
        %v683 = vmul.f32 %v293, %v431
        %v684 = vmul.f32 %v293, %v435
        %v685 = vmul.f32 %v293, %v439
        %v686 = vmul.f32 %v293, %v443
        %v687 = vmul.f32 %v293, %v447
        %v688 = vmul.f32 %v298, %v387
        %v689 = vmul.f32 %v298, %v391
        %v690 = vmul.f32 %v298, %v395
        %v691 = vmul.f32 %v298, %v399
        %v692 = vmul.f32 %v298, %v403
        %v693 = vmul.f32 %v298, %v407
        %v694 = vmul.f32 %v298, %v411
        %v695 = vmul.f32 %v298, %v415
        %v696 = vmul.f32 %v298, %v419
        %v697 = vmul.f32 %v298, %v423
        %v698 = vmul.f32 %v298, %v427
        %v699 = vmul.f32 %v298, %v431
        %v700 = vmul.f32 %v298, %v435
        %v701 = vmul.f32 %v298, %v439
        %v702 = vmul.f32 %v298, %v443
        %v703 = vmul.f32 %v298, %v447
        %704 = vset.pattern.permute.xlu0 1
        %705 = vperm.xlu0 %704, %v200
        %v706 = vpop.permute.xlu0 %705
        %708 = vset.pattern.permute.xlu0 1
        %709 = vperm.xlu0 %708, %v201
        %v710 = vpop.permute.xlu0 %709
        %712 = vset.pattern.permute.xlu0 1
        %713 = vperm.xlu0 %712, %v202
        %v714 = vpop.permute.xlu0 %713
        %716 = vset.pattern.permute.xlu0 1
        %717 = vperm.xlu0 %716, %v203
        %v718 = vpop.permute.xlu0 %717
        %720 = vset.pattern.permute.xlu0 1
        %721 = vperm.xlu0 %720, %v204
        %v722 = vpop.permute.xlu0 %721
        %724 = vset.pattern.permute.xlu0 1
        %725 = vperm.xlu0 %724, %v205
        %v726 = vpop.permute.xlu0 %725
        %728 = vset.pattern.permute.xlu0 1
        %729 = vperm.xlu0 %728, %v206
        %v730 = vpop.permute.xlu0 %729
        %732 = vset.pattern.permute.xlu0 1
        %733 = vperm.xlu0 %732, %v207
        %v734 = vpop.permute.xlu0 %733
        %736 = vset.pattern.permute.xlu0 1
        %737 = vperm.xlu0 %736, %v208
        %v738 = vpop.permute.xlu0 %737
        %740 = vset.pattern.permute.xlu0 1
        %741 = vperm.xlu0 %740, %v209
        %v742 = vpop.permute.xlu0 %741
        %744 = vset.pattern.permute.xlu0 1
        %745 = vperm.xlu0 %744, %v210
        %v746 = vpop.permute.xlu0 %745
        %748 = vset.pattern.permute.xlu0 1
        %749 = vperm.xlu0 %748, %v211
        %v750 = vpop.permute.xlu0 %749
        %752 = vset.pattern.permute.xlu0 1
        %753 = vperm.xlu0 %752, %v212
        %v754 = vpop.permute.xlu0 %753
        %756 = vset.pattern.permute.xlu0 1
        %757 = vperm.xlu0 %756, %v213
        %v758 = vpop.permute.xlu0 %757
        %760 = vset.pattern.permute.xlu0 1
        %761 = vperm.xlu0 %760, %v214
        %v762 = vpop.permute.xlu0 %761
        %764 = vset.pattern.permute.xlu0 1
        %765 = vperm.xlu0 %764, %v215
        %v766 = vpop.permute.xlu0 %765
        %v768 = vlaneseq
        %v769 = vshrl.u32 %v768, 7
        %v770 = vsub.s32 1, %v769
        %v771 = vrot.slane %v216, %v770
        %v772 = vlaneseq
        %v773 = vshrl.u32 %v772, 7
        %v774 = vsub.s32 3, %v773
        %v775 = vrot.slane %v216, %v774
        %v776 = vlaneseq
        %v777 = vshrl.u32 %v776, 7
        %v778 = vsub.s32 5, %v777
        %v779 = vrot.slane %v216, %v778
        %v780 = vlaneseq
        %v781 = vshrl.u32 %v780, 7
        %v782 = vsub.s32 7, %v781
        %v783 = vrot.slane %v216, %v782
        %v784 = vlaneseq
        %v785 = vshrl.u32 %v784, 7
        %v786 = vsub.s32 1, %v785
        %v787 = vrot.slane %v217, %v786
        %v788 = vlaneseq
        %v789 = vshrl.u32 %v788, 7
        %v790 = vsub.s32 3, %v789
        %v791 = vrot.slane %v217, %v790
        %v792 = vlaneseq
        %v793 = vshrl.u32 %v792, 7
        %v794 = vsub.s32 5, %v793
        %v795 = vrot.slane %v217, %v794
        %v796 = vlaneseq
        %v797 = vshrl.u32 %v796, 7
        %v798 = vsub.s32 7, %v797
        %v799 = vrot.slane %v217, %v798
        %v800 = vlaneseq
        %v801 = vshrl.u32 %v800, 7
        %v802 = vsub.s32 1, %v801
        %v803 = vrot.slane %v218, %v802
        %v804 = vlaneseq
        %v805 = vshrl.u32 %v804, 7
        %v806 = vsub.s32 3, %v805
        %v807 = vrot.slane %v218, %v806
        %v808 = vlaneseq
        %v809 = vshrl.u32 %v808, 7
        %v810 = vsub.s32 5, %v809
        %v811 = vrot.slane %v218, %v810
        %v812 = vlaneseq
        %v813 = vshrl.u32 %v812, 7
        %v814 = vsub.s32 7, %v813
        %v815 = vrot.slane %v218, %v814
        %v816 = vlaneseq
        %v817 = vshrl.u32 %v816, 7
        %v818 = vsub.s32 1, %v817
        %v819 = vrot.slane %v219, %v818
        %v820 = vlaneseq
        %v821 = vshrl.u32 %v820, 7
        %v822 = vsub.s32 3, %v821
        %v823 = vrot.slane %v219, %v822
        %v824 = vlaneseq
        %v825 = vshrl.u32 %v824, 7
        %v826 = vsub.s32 5, %v825
        %v827 = vrot.slane %v219, %v826
        %v828 = vlaneseq
        %v829 = vshrl.u32 %v828, 7
        %v830 = vsub.s32 7, %v829
        %v831 = vrot.slane %v219, %v830
        %v848 = vlaneseq
        %v849 = vshrl.u32 %v848, 7
        %v850 = vsub.s32 1, %v849
        %v851 = vrot.slane %v771, %v850
        %v852 = vlaneseq
        %v853 = vshrl.u32 %v852, 7
        %v854 = vsub.s32 1, %v853
        %v855 = vrot.slane %v775, %v854
        %v856 = vlaneseq
        %v857 = vshrl.u32 %v856, 7
        %v858 = vsub.s32 1, %v857
        %v859 = vrot.slane %v779, %v858
        %v860 = vlaneseq
        %v861 = vshrl.u32 %v860, 7
        %v862 = vsub.s32 1, %v861
        %v863 = vrot.slane %v783, %v862
        %v864 = vlaneseq
        %v865 = vshrl.u32 %v864, 7
        %v866 = vsub.s32 1, %v865
        %v867 = vrot.slane %v787, %v866
        %v868 = vlaneseq
        %v869 = vshrl.u32 %v868, 7
        %v870 = vsub.s32 1, %v869
        %v871 = vrot.slane %v791, %v870
        %v872 = vlaneseq
        %v873 = vshrl.u32 %v872, 7
        %v874 = vsub.s32 1, %v873
        %v875 = vrot.slane %v795, %v874
        %v876 = vlaneseq
        %v877 = vshrl.u32 %v876, 7
        %v878 = vsub.s32 1, %v877
        %v879 = vrot.slane %v799, %v878
        %v880 = vlaneseq
        %v881 = vshrl.u32 %v880, 7
        %v882 = vsub.s32 1, %v881
        %v883 = vrot.slane %v803, %v882
        %v884 = vlaneseq
        %v885 = vshrl.u32 %v884, 7
        %v886 = vsub.s32 1, %v885
        %v887 = vrot.slane %v807, %v886
        %v888 = vlaneseq
        %v889 = vshrl.u32 %v888, 7
        %v890 = vsub.s32 1, %v889
        %v891 = vrot.slane %v811, %v890
        %v892 = vlaneseq
        %v893 = vshrl.u32 %v892, 7
        %v894 = vsub.s32 1, %v893
        %v895 = vrot.slane %v815, %v894
        %v896 = vlaneseq
        %v897 = vshrl.u32 %v896, 7
        %v898 = vsub.s32 1, %v897
        %v899 = vrot.slane %v819, %v898
        %v900 = vlaneseq
        %v901 = vshrl.u32 %v900, 7
        %v902 = vsub.s32 1, %v901
        %v903 = vrot.slane %v823, %v902
        %v904 = vlaneseq
        %v905 = vshrl.u32 %v904, 7
        %v906 = vsub.s32 1, %v905
        %v907 = vrot.slane %v827, %v906
        %v908 = vlaneseq
        %v909 = vshrl.u32 %v908, 7
        %v910 = vsub.s32 1, %v909
        %v911 = vrot.slane %v831, %v910
        %v912 = vmul.f32 %v706, %v851
        %v913 = vmul.f32 %v706, %v855
        %v914 = vmul.f32 %v706, %v859
        %v915 = vmul.f32 %v706, %v863
        %v916 = vmul.f32 %v706, %v867
        %v917 = vmul.f32 %v706, %v871
        %v918 = vmul.f32 %v706, %v875
        %v919 = vmul.f32 %v706, %v879
        %v920 = vmul.f32 %v706, %v883
        %v921 = vmul.f32 %v706, %v887
        %v922 = vmul.f32 %v706, %v891
        %v923 = vmul.f32 %v706, %v895
        %v924 = vmul.f32 %v706, %v899
        %v925 = vmul.f32 %v706, %v903
        %v926 = vmul.f32 %v706, %v907
        %v927 = vmul.f32 %v706, %v911
        %v928 = vmul.f32 %v710, %v851
        %v929 = vmul.f32 %v710, %v855
        %v930 = vmul.f32 %v710, %v859
        %v931 = vmul.f32 %v710, %v863
        %v932 = vmul.f32 %v710, %v867
        %v933 = vmul.f32 %v710, %v871
        %v934 = vmul.f32 %v710, %v875
        %v935 = vmul.f32 %v710, %v879
        %v936 = vmul.f32 %v710, %v883
        %v937 = vmul.f32 %v710, %v887
        %v938 = vmul.f32 %v710, %v891
        %v939 = vmul.f32 %v710, %v895
        %v940 = vmul.f32 %v710, %v899
        %v941 = vmul.f32 %v710, %v903
        %v942 = vmul.f32 %v710, %v907
        %v943 = vmul.f32 %v710, %v911
        %v944 = vmul.f32 %v714, %v851
        %v945 = vmul.f32 %v714, %v855
        %v946 = vmul.f32 %v714, %v859
        %v947 = vmul.f32 %v714, %v863
        %v948 = vmul.f32 %v714, %v867
        %v949 = vmul.f32 %v714, %v871
        %v950 = vmul.f32 %v714, %v875
        %v951 = vmul.f32 %v714, %v879
        %v952 = vmul.f32 %v714, %v883
        %v953 = vmul.f32 %v714, %v887
        %v954 = vmul.f32 %v714, %v891
        %v955 = vmul.f32 %v714, %v895
        %v956 = vmul.f32 %v714, %v899
        %v957 = vmul.f32 %v714, %v903
        %v958 = vmul.f32 %v714, %v907
        %v959 = vmul.f32 %v714, %v911
        %v960 = vmul.f32 %v718, %v851
        %v961 = vmul.f32 %v718, %v855
        %v962 = vmul.f32 %v718, %v859
        %v963 = vmul.f32 %v718, %v863
        %v964 = vmul.f32 %v718, %v867
        %v965 = vmul.f32 %v718, %v871
        %v966 = vmul.f32 %v718, %v875
        %v967 = vmul.f32 %v718, %v879
        %v968 = vmul.f32 %v718, %v883
        %v969 = vmul.f32 %v718, %v887
        %v970 = vmul.f32 %v718, %v891
        %v971 = vmul.f32 %v718, %v895
        %v972 = vmul.f32 %v718, %v899
        %v973 = vmul.f32 %v718, %v903
        %v974 = vmul.f32 %v718, %v907
        %v975 = vmul.f32 %v718, %v911
        %v976 = vmul.f32 %v722, %v851
        %v977 = vmul.f32 %v722, %v855
        %v978 = vmul.f32 %v722, %v859
        %v979 = vmul.f32 %v722, %v863
        %v980 = vmul.f32 %v722, %v867
        %v981 = vmul.f32 %v722, %v871
        %v982 = vmul.f32 %v722, %v875
        %v983 = vmul.f32 %v722, %v879
        %v984 = vmul.f32 %v722, %v883
        %v985 = vmul.f32 %v722, %v887
        %v986 = vmul.f32 %v722, %v891
        %v987 = vmul.f32 %v722, %v895
        %v988 = vmul.f32 %v722, %v899
        %v989 = vmul.f32 %v722, %v903
        %v990 = vmul.f32 %v722, %v907
        %v991 = vmul.f32 %v722, %v911
        %v992 = vmul.f32 %v726, %v851
        %v993 = vmul.f32 %v726, %v855
        %v994 = vmul.f32 %v726, %v859
        %v995 = vmul.f32 %v726, %v863
        %v996 = vmul.f32 %v726, %v867
        %v997 = vmul.f32 %v726, %v871
        %v998 = vmul.f32 %v726, %v875
        %v999 = vmul.f32 %v726, %v879
        %v1000 = vmul.f32 %v726, %v883
        %v1001 = vmul.f32 %v726, %v887
        %v1002 = vmul.f32 %v726, %v891
        %v1003 = vmul.f32 %v726, %v895
        %v1004 = vmul.f32 %v726, %v899
        %v1005 = vmul.f32 %v726, %v903
        %v1006 = vmul.f32 %v726, %v907
        %v1007 = vmul.f32 %v726, %v911
        %v1008 = vmul.f32 %v730, %v851
        %v1009 = vmul.f32 %v730, %v855
        %v1010 = vmul.f32 %v730, %v859
        %v1011 = vmul.f32 %v730, %v863
        %v1012 = vmul.f32 %v730, %v867
        %v1013 = vmul.f32 %v730, %v871
        %v1014 = vmul.f32 %v730, %v875
        %v1015 = vmul.f32 %v730, %v879
        %v1016 = vmul.f32 %v730, %v883
        %v1017 = vmul.f32 %v730, %v887
        %v1018 = vmul.f32 %v730, %v891
        %v1019 = vmul.f32 %v730, %v895
        %v1020 = vmul.f32 %v730, %v899
        %v1021 = vmul.f32 %v730, %v903
        %v1022 = vmul.f32 %v730, %v907
        %v1023 = vmul.f32 %v730, %v911
        %v1024 = vmul.f32 %v734, %v851
        %v1025 = vmul.f32 %v734, %v855
        %v1026 = vmul.f32 %v734, %v859
        %v1027 = vmul.f32 %v734, %v863
        %v1028 = vmul.f32 %v734, %v867
        %v1029 = vmul.f32 %v734, %v871
        %v1030 = vmul.f32 %v734, %v875
        %v1031 = vmul.f32 %v734, %v879
        %v1032 = vmul.f32 %v734, %v883
        %v1033 = vmul.f32 %v734, %v887
        %v1034 = vmul.f32 %v734, %v891
        %v1035 = vmul.f32 %v734, %v895
        %v1036 = vmul.f32 %v734, %v899
        %v1037 = vmul.f32 %v734, %v903
        %v1038 = vmul.f32 %v734, %v907
        %v1039 = vmul.f32 %v734, %v911
        %v1040 = vmul.f32 %v738, %v851
        %v1041 = vmul.f32 %v738, %v855
        %v1042 = vmul.f32 %v738, %v859
        %v1043 = vmul.f32 %v738, %v863
        %v1044 = vmul.f32 %v738, %v867
        %v1045 = vmul.f32 %v738, %v871
        %v1046 = vmul.f32 %v738, %v875
        %v1047 = vmul.f32 %v738, %v879
        %v1048 = vmul.f32 %v738, %v883
        %v1049 = vmul.f32 %v738, %v887
        %v1050 = vmul.f32 %v738, %v891
        %v1051 = vmul.f32 %v738, %v895
        %v1052 = vmul.f32 %v738, %v899
        %v1053 = vmul.f32 %v738, %v903
        %v1054 = vmul.f32 %v738, %v907
        %v1055 = vmul.f32 %v738, %v911
        %v1056 = vmul.f32 %v742, %v851
        %v1057 = vmul.f32 %v742, %v855
        %v1058 = vmul.f32 %v742, %v859
        %v1059 = vmul.f32 %v742, %v863
        %v1060 = vmul.f32 %v742, %v867
        %v1061 = vmul.f32 %v742, %v871
        %v1062 = vmul.f32 %v742, %v875
        %v1063 = vmul.f32 %v742, %v879
        %v1064 = vmul.f32 %v742, %v883
        %v1065 = vmul.f32 %v742, %v887
        %v1066 = vmul.f32 %v742, %v891
        %v1067 = vmul.f32 %v742, %v895
        %v1068 = vmul.f32 %v742, %v899
        %v1069 = vmul.f32 %v742, %v903
        %v1070 = vmul.f32 %v742, %v907
        %v1071 = vmul.f32 %v742, %v911
        %v1072 = vmul.f32 %v746, %v851
        %v1073 = vmul.f32 %v746, %v855
        %v1074 = vmul.f32 %v746, %v859
        %v1075 = vmul.f32 %v746, %v863
        %v1076 = vmul.f32 %v746, %v867
        %v1077 = vmul.f32 %v746, %v871
        %v1078 = vmul.f32 %v746, %v875
        %v1079 = vmul.f32 %v746, %v879
        %v1080 = vmul.f32 %v746, %v883
        %v1081 = vmul.f32 %v746, %v887
        %v1082 = vmul.f32 %v746, %v891
        %v1083 = vmul.f32 %v746, %v895
        %v1084 = vmul.f32 %v746, %v899
        %v1085 = vmul.f32 %v746, %v903
        %v1086 = vmul.f32 %v746, %v907
        %v1087 = vmul.f32 %v746, %v911
        %v1088 = vmul.f32 %v750, %v851
        %v1089 = vmul.f32 %v750, %v855
        %v1090 = vmul.f32 %v750, %v859
        %v1091 = vmul.f32 %v750, %v863
        %v1092 = vmul.f32 %v750, %v867
        %v1093 = vmul.f32 %v750, %v871
        %v1094 = vmul.f32 %v750, %v875
        %v1095 = vmul.f32 %v750, %v879
        %v1096 = vmul.f32 %v750, %v883
        %v1097 = vmul.f32 %v750, %v887
        %v1098 = vmul.f32 %v750, %v891
        %v1099 = vmul.f32 %v750, %v895
        %v1100 = vmul.f32 %v750, %v899
        %v1101 = vmul.f32 %v750, %v903
        %v1102 = vmul.f32 %v750, %v907
        %v1103 = vmul.f32 %v750, %v911
        %v1104 = vmul.f32 %v754, %v851
        %v1105 = vmul.f32 %v754, %v855
        %v1106 = vmul.f32 %v754, %v859
        %v1107 = vmul.f32 %v754, %v863
        %v1108 = vmul.f32 %v754, %v867
        %v1109 = vmul.f32 %v754, %v871
        %v1110 = vmul.f32 %v754, %v875
        %v1111 = vmul.f32 %v754, %v879
        %v1112 = vmul.f32 %v754, %v883
        %v1113 = vmul.f32 %v754, %v887
        %v1114 = vmul.f32 %v754, %v891
        %v1115 = vmul.f32 %v754, %v895
        %v1116 = vmul.f32 %v754, %v899
        %v1117 = vmul.f32 %v754, %v903
        %v1118 = vmul.f32 %v754, %v907
        %v1119 = vmul.f32 %v754, %v911
        %v1120 = vmul.f32 %v758, %v851
        %v1121 = vmul.f32 %v758, %v855
        %v1122 = vmul.f32 %v758, %v859
        %v1123 = vmul.f32 %v758, %v863
        %v1124 = vmul.f32 %v758, %v867
        %v1125 = vmul.f32 %v758, %v871
        %v1126 = vmul.f32 %v758, %v875
        %v1127 = vmul.f32 %v758, %v879
        %v1128 = vmul.f32 %v758, %v883
        %v1129 = vmul.f32 %v758, %v887
        %v1130 = vmul.f32 %v758, %v891
        %v1131 = vmul.f32 %v758, %v895
        %v1132 = vmul.f32 %v758, %v899
        %v1133 = vmul.f32 %v758, %v903
        %v1134 = vmul.f32 %v758, %v907
        %v1135 = vmul.f32 %v758, %v911
        %v1136 = vmul.f32 %v762, %v851
        %v1137 = vmul.f32 %v762, %v855
        %v1138 = vmul.f32 %v762, %v859
        %v1139 = vmul.f32 %v762, %v863
        %v1140 = vmul.f32 %v762, %v867
        %v1141 = vmul.f32 %v762, %v871
        %v1142 = vmul.f32 %v762, %v875
        %v1143 = vmul.f32 %v762, %v879
        %v1144 = vmul.f32 %v762, %v883
        %v1145 = vmul.f32 %v762, %v887
        %v1146 = vmul.f32 %v762, %v891
        %v1147 = vmul.f32 %v762, %v895
        %v1148 = vmul.f32 %v762, %v899
        %v1149 = vmul.f32 %v762, %v903
        %v1150 = vmul.f32 %v762, %v907
        %v1151 = vmul.f32 %v762, %v911
        %v1152 = vmul.f32 %v766, %v851
        %v1153 = vmul.f32 %v766, %v855
        %v1154 = vmul.f32 %v766, %v859
        %v1155 = vmul.f32 %v766, %v863
        %v1156 = vmul.f32 %v766, %v867
        %v1157 = vmul.f32 %v766, %v871
        %v1158 = vmul.f32 %v766, %v875
        %v1159 = vmul.f32 %v766, %v879
        %v1160 = vmul.f32 %v766, %v883
        %v1161 = vmul.f32 %v766, %v887
        %v1162 = vmul.f32 %v766, %v891
        %v1163 = vmul.f32 %v766, %v895
        %v1164 = vmul.f32 %v766, %v899
        %v1165 = vmul.f32 %v766, %v903
        %v1166 = vmul.f32 %v766, %v907
        %v1167 = vmul.f32 %v766, %v911
        %v1168 = vadd.f32 %v448, %v912
        %v1169 = vadd.f32 %v449, %v913
        %v1170 = vadd.f32 %v450, %v914
        %v1171 = vadd.f32 %v451, %v915
        %v1172 = vadd.f32 %v452, %v916
        %v1173 = vadd.f32 %v453, %v917
        %v1174 = vadd.f32 %v454, %v918
        %v1175 = vadd.f32 %v455, %v919
        %v1176 = vadd.f32 %v456, %v920
        %v1177 = vadd.f32 %v457, %v921
        %v1178 = vadd.f32 %v458, %v922
        %v1179 = vadd.f32 %v459, %v923
        %v1180 = vadd.f32 %v460, %v924
        %v1181 = vadd.f32 %v461, %v925
        %v1182 = vadd.f32 %v462, %v926
        %v1183 = vadd.f32 %v463, %v927
        %v1184 = vadd.f32 %v464, %v928
        %v1185 = vadd.f32 %v465, %v929
        %v1186 = vadd.f32 %v466, %v930
        %v1187 = vadd.f32 %v467, %v931
        %v1188 = vadd.f32 %v468, %v932
        %v1189 = vadd.f32 %v469, %v933
        %v1190 = vadd.f32 %v470, %v934
        %v1191 = vadd.f32 %v471, %v935
        %v1192 = vadd.f32 %v472, %v936
        %v1193 = vadd.f32 %v473, %v937
        %v1194 = vadd.f32 %v474, %v938
        %v1195 = vadd.f32 %v475, %v939
        %v1196 = vadd.f32 %v476, %v940
        %v1197 = vadd.f32 %v477, %v941
        %v1198 = vadd.f32 %v478, %v942
        %v1199 = vadd.f32 %v479, %v943
        %v1200 = vadd.f32 %v480, %v944
        %v1201 = vadd.f32 %v481, %v945
        %v1202 = vadd.f32 %v482, %v946
        %v1203 = vadd.f32 %v483, %v947
        %v1204 = vadd.f32 %v484, %v948
        %v1205 = vadd.f32 %v485, %v949
        %v1206 = vadd.f32 %v486, %v950
        %v1207 = vadd.f32 %v487, %v951
        %v1208 = vadd.f32 %v488, %v952
        %v1209 = vadd.f32 %v489, %v953
        %v1210 = vadd.f32 %v490, %v954
        %v1211 = vadd.f32 %v491, %v955
        %v1212 = vadd.f32 %v492, %v956
        %v1213 = vadd.f32 %v493, %v957
        %v1214 = vadd.f32 %v494, %v958
        %v1215 = vadd.f32 %v495, %v959
        %v1216 = vadd.f32 %v496, %v960
        %v1217 = vadd.f32 %v497, %v961
        %v1218 = vadd.f32 %v498, %v962
        %v1219 = vadd.f32 %v499, %v963
        %v1220 = vadd.f32 %v500, %v964
        %v1221 = vadd.f32 %v501, %v965
        %v1222 = vadd.f32 %v502, %v966
        %v1223 = vadd.f32 %v503, %v967
        %v1224 = vadd.f32 %v504, %v968
        %v1225 = vadd.f32 %v505, %v969
        %v1226 = vadd.f32 %v506, %v970
        %v1227 = vadd.f32 %v507, %v971
        %v1228 = vadd.f32 %v508, %v972
        %v1229 = vadd.f32 %v509, %v973
        %v1230 = vadd.f32 %v510, %v974
        %v1231 = vadd.f32 %v511, %v975
        %v1232 = vadd.f32 %v512, %v976
        %v1233 = vadd.f32 %v513, %v977
        %v1234 = vadd.f32 %v514, %v978
        %v1235 = vadd.f32 %v515, %v979
        %v1236 = vadd.f32 %v516, %v980
        %v1237 = vadd.f32 %v517, %v981
        %v1238 = vadd.f32 %v518, %v982
        %v1239 = vadd.f32 %v519, %v983
        %v1240 = vadd.f32 %v520, %v984
        %v1241 = vadd.f32 %v521, %v985
        %v1242 = vadd.f32 %v522, %v986
        %v1243 = vadd.f32 %v523, %v987
        %v1244 = vadd.f32 %v524, %v988
        %v1245 = vadd.f32 %v525, %v989
        %v1246 = vadd.f32 %v526, %v990
        %v1247 = vadd.f32 %v527, %v991
        %v1248 = vadd.f32 %v528, %v992
        %v1249 = vadd.f32 %v529, %v993
        %v1250 = vadd.f32 %v530, %v994
        %v1251 = vadd.f32 %v531, %v995
        %v1252 = vadd.f32 %v532, %v996
        %v1253 = vadd.f32 %v533, %v997
        %v1254 = vadd.f32 %v534, %v998
        %v1255 = vadd.f32 %v535, %v999
        %v1256 = vadd.f32 %v536, %v1000
        %v1257 = vadd.f32 %v537, %v1001
        %v1258 = vadd.f32 %v538, %v1002
        %v1259 = vadd.f32 %v539, %v1003
        %v1260 = vadd.f32 %v540, %v1004
        %v1261 = vadd.f32 %v541, %v1005
        %v1262 = vadd.f32 %v542, %v1006
        %v1263 = vadd.f32 %v543, %v1007
        %v1264 = vadd.f32 %v544, %v1008
        %v1265 = vadd.f32 %v545, %v1009
        %v1266 = vadd.f32 %v546, %v1010
        %v1267 = vadd.f32 %v547, %v1011
        %v1268 = vadd.f32 %v548, %v1012
        %v1269 = vadd.f32 %v549, %v1013
        %v1270 = vadd.f32 %v550, %v1014
        %v1271 = vadd.f32 %v551, %v1015
        %v1272 = vadd.f32 %v552, %v1016
        %v1273 = vadd.f32 %v553, %v1017
        %v1274 = vadd.f32 %v554, %v1018
        %v1275 = vadd.f32 %v555, %v1019
        %v1276 = vadd.f32 %v556, %v1020
        %v1277 = vadd.f32 %v557, %v1021
        %v1278 = vadd.f32 %v558, %v1022
        %v1279 = vadd.f32 %v559, %v1023
        %v1280 = vadd.f32 %v560, %v1024
        %v1281 = vadd.f32 %v561, %v1025
        %v1282 = vadd.f32 %v562, %v1026
        %v1283 = vadd.f32 %v563, %v1027
        %v1284 = vadd.f32 %v564, %v1028
        %v1285 = vadd.f32 %v565, %v1029
        %v1286 = vadd.f32 %v566, %v1030
        %v1287 = vadd.f32 %v567, %v1031
        %v1288 = vadd.f32 %v568, %v1032
        %v1289 = vadd.f32 %v569, %v1033
        %v1290 = vadd.f32 %v570, %v1034
        %v1291 = vadd.f32 %v571, %v1035
        %v1292 = vadd.f32 %v572, %v1036
        %v1293 = vadd.f32 %v573, %v1037
        %v1294 = vadd.f32 %v574, %v1038
        %v1295 = vadd.f32 %v575, %v1039
        %v1296 = vadd.f32 %v576, %v1040
        %v1297 = vadd.f32 %v577, %v1041
        %v1298 = vadd.f32 %v578, %v1042
        %v1299 = vadd.f32 %v579, %v1043
        %v1300 = vadd.f32 %v580, %v1044
        %v1301 = vadd.f32 %v581, %v1045
        %v1302 = vadd.f32 %v582, %v1046
        %v1303 = vadd.f32 %v583, %v1047
        %v1304 = vadd.f32 %v584, %v1048
        %v1305 = vadd.f32 %v585, %v1049
        %v1306 = vadd.f32 %v586, %v1050
        %v1307 = vadd.f32 %v587, %v1051
        %v1308 = vadd.f32 %v588, %v1052
        %v1309 = vadd.f32 %v589, %v1053
        %v1310 = vadd.f32 %v590, %v1054
        %v1311 = vadd.f32 %v591, %v1055
        %v1312 = vadd.f32 %v592, %v1056
        %v1313 = vadd.f32 %v593, %v1057
        %v1314 = vadd.f32 %v594, %v1058
        %v1315 = vadd.f32 %v595, %v1059
        %v1316 = vadd.f32 %v596, %v1060
        %v1317 = vadd.f32 %v597, %v1061
        %v1318 = vadd.f32 %v598, %v1062
        %v1319 = vadd.f32 %v599, %v1063
        %v1320 = vadd.f32 %v600, %v1064
        %v1321 = vadd.f32 %v601, %v1065
        %v1322 = vadd.f32 %v602, %v1066
        %v1323 = vadd.f32 %v603, %v1067
        %v1324 = vadd.f32 %v604, %v1068
        %v1325 = vadd.f32 %v605, %v1069
        %v1326 = vadd.f32 %v606, %v1070
        %v1327 = vadd.f32 %v607, %v1071
        %v1328 = vadd.f32 %v608, %v1072
        %v1329 = vadd.f32 %v609, %v1073
        %v1330 = vadd.f32 %v610, %v1074
        %v1331 = vadd.f32 %v611, %v1075
        %v1332 = vadd.f32 %v612, %v1076
        %v1333 = vadd.f32 %v613, %v1077
        %v1334 = vadd.f32 %v614, %v1078
        %v1335 = vadd.f32 %v615, %v1079
        %v1336 = vadd.f32 %v616, %v1080
        %v1337 = vadd.f32 %v617, %v1081
        %v1338 = vadd.f32 %v618, %v1082
        %v1339 = vadd.f32 %v619, %v1083
        %v1340 = vadd.f32 %v620, %v1084
        %v1341 = vadd.f32 %v621, %v1085
        %v1342 = vadd.f32 %v622, %v1086
        %v1343 = vadd.f32 %v623, %v1087
        %v1344 = vadd.f32 %v624, %v1088
        %v1345 = vadd.f32 %v625, %v1089
        %v1346 = vadd.f32 %v626, %v1090
        %v1347 = vadd.f32 %v627, %v1091
        %v1348 = vadd.f32 %v628, %v1092
        %v1349 = vadd.f32 %v629, %v1093
        %v1350 = vadd.f32 %v630, %v1094
        %v1351 = vadd.f32 %v631, %v1095
        %v1352 = vadd.f32 %v632, %v1096
        %v1353 = vadd.f32 %v633, %v1097
        %v1354 = vadd.f32 %v634, %v1098
        %v1355 = vadd.f32 %v635, %v1099
        %v1356 = vadd.f32 %v636, %v1100
        %v1357 = vadd.f32 %v637, %v1101
        %v1358 = vadd.f32 %v638, %v1102
        %v1359 = vadd.f32 %v639, %v1103
        %v1360 = vadd.f32 %v640, %v1104
        %v1361 = vadd.f32 %v641, %v1105
        %v1362 = vadd.f32 %v642, %v1106
        %v1363 = vadd.f32 %v643, %v1107
        %v1364 = vadd.f32 %v644, %v1108
        %v1365 = vadd.f32 %v645, %v1109
        %v1366 = vadd.f32 %v646, %v1110
        %v1367 = vadd.f32 %v647, %v1111
        %v1368 = vadd.f32 %v648, %v1112
        %v1369 = vadd.f32 %v649, %v1113
        %v1370 = vadd.f32 %v650, %v1114
        %v1371 = vadd.f32 %v651, %v1115
        %v1372 = vadd.f32 %v652, %v1116
        %v1373 = vadd.f32 %v653, %v1117
        %v1374 = vadd.f32 %v654, %v1118
        %v1375 = vadd.f32 %v655, %v1119
        %v1376 = vadd.f32 %v656, %v1120
        %v1377 = vadd.f32 %v657, %v1121
        %v1378 = vadd.f32 %v658, %v1122
        %v1379 = vadd.f32 %v659, %v1123
        %v1380 = vadd.f32 %v660, %v1124
        %v1381 = vadd.f32 %v661, %v1125
        %v1382 = vadd.f32 %v662, %v1126
        %v1383 = vadd.f32 %v663, %v1127
        %v1384 = vadd.f32 %v664, %v1128
        %v1385 = vadd.f32 %v665, %v1129
        %v1386 = vadd.f32 %v666, %v1130
        %v1387 = vadd.f32 %v667, %v1131
        %v1388 = vadd.f32 %v668, %v1132
        %v1389 = vadd.f32 %v669, %v1133
        %v1390 = vadd.f32 %v670, %v1134
        %v1391 = vadd.f32 %v671, %v1135
        %v1392 = vadd.f32 %v672, %v1136
        %v1393 = vadd.f32 %v673, %v1137
        %v1394 = vadd.f32 %v674, %v1138
        %v1395 = vadd.f32 %v675, %v1139
        %v1396 = vadd.f32 %v676, %v1140
        %v1397 = vadd.f32 %v677, %v1141
        %v1398 = vadd.f32 %v678, %v1142
        %v1399 = vadd.f32 %v679, %v1143
        %v1400 = vadd.f32 %v680, %v1144
        %v1401 = vadd.f32 %v681, %v1145
        %v1402 = vadd.f32 %v682, %v1146
        %v1403 = vadd.f32 %v683, %v1147
        %v1404 = vadd.f32 %v684, %v1148
        %v1405 = vadd.f32 %v685, %v1149
        %v1406 = vadd.f32 %v686, %v1150
        %v1407 = vadd.f32 %v687, %v1151
        %v1408 = vadd.f32 %v688, %v1152
        %v1409 = vadd.f32 %v689, %v1153
        %v1410 = vadd.f32 %v690, %v1154
        %v1411 = vadd.f32 %v691, %v1155
        %v1412 = vadd.f32 %v692, %v1156
        %v1413 = vadd.f32 %v693, %v1157
        %v1414 = vadd.f32 %v694, %v1158
        %v1415 = vadd.f32 %v695, %v1159
        %v1416 = vadd.f32 %v696, %v1160
        %v1417 = vadd.f32 %v697, %v1161
        %v1418 = vadd.f32 %v698, %v1162
        %v1419 = vadd.f32 %v699, %v1163
        %v1420 = vadd.f32 %v700, %v1164
        %v1421 = vadd.f32 %v701, %v1165
        %v1422 = vadd.f32 %v702, %v1166
        %v1423 = vadd.f32 %v703, %v1167
        %v1424 = vmul.f32 %v1168, -2.0
        %v1425 = vmul.f32 %v1169, -2.0
        %v1426 = vmul.f32 %v1170, -2.0
        %v1427 = vmul.f32 %v1171, -2.0
        %v1428 = vmul.f32 %v1172, -2.0
        %v1429 = vmul.f32 %v1173, -2.0
        %v1430 = vmul.f32 %v1174, -2.0
        %v1431 = vmul.f32 %v1175, -2.0
        %v1432 = vmul.f32 %v1176, -2.0
        %v1433 = vmul.f32 %v1177, -2.0
        %v1434 = vmul.f32 %v1178, -2.0
        %v1435 = vmul.f32 %v1179, -2.0
        %v1436 = vmul.f32 %v1180, -2.0
        %v1437 = vmul.f32 %v1181, -2.0
        %v1438 = vmul.f32 %v1182, -2.0
        %v1439 = vmul.f32 %v1183, -2.0
        %v1440 = vmul.f32 %v1184, -2.0
        %v1441 = vmul.f32 %v1185, -2.0
        %v1442 = vmul.f32 %v1186, -2.0
        %v1443 = vmul.f32 %v1187, -2.0
        %v1444 = vmul.f32 %v1188, -2.0
        %v1445 = vmul.f32 %v1189, -2.0
        %v1446 = vmul.f32 %v1190, -2.0
        %v1447 = vmul.f32 %v1191, -2.0
        %v1448 = vmul.f32 %v1192, -2.0
        %v1449 = vmul.f32 %v1193, -2.0
        %v1450 = vmul.f32 %v1194, -2.0
        %v1451 = vmul.f32 %v1195, -2.0
        %v1452 = vmul.f32 %v1196, -2.0
        %v1453 = vmul.f32 %v1197, -2.0
        %v1454 = vmul.f32 %v1198, -2.0
        %v1455 = vmul.f32 %v1199, -2.0
        %v1456 = vmul.f32 %v1200, -2.0
        %v1457 = vmul.f32 %v1201, -2.0
        %v1458 = vmul.f32 %v1202, -2.0
        %v1459 = vmul.f32 %v1203, -2.0
        %v1460 = vmul.f32 %v1204, -2.0
        %v1461 = vmul.f32 %v1205, -2.0
        %v1462 = vmul.f32 %v1206, -2.0
        %v1463 = vmul.f32 %v1207, -2.0
        %v1464 = vmul.f32 %v1208, -2.0
        %v1465 = vmul.f32 %v1209, -2.0
        %v1466 = vmul.f32 %v1210, -2.0
        %v1467 = vmul.f32 %v1211, -2.0
        %v1468 = vmul.f32 %v1212, -2.0
        %v1469 = vmul.f32 %v1213, -2.0
        %v1470 = vmul.f32 %v1214, -2.0
        %v1471 = vmul.f32 %v1215, -2.0
        %v1472 = vmul.f32 %v1216, -2.0
        %v1473 = vmul.f32 %v1217, -2.0
        %v1474 = vmul.f32 %v1218, -2.0
        %v1475 = vmul.f32 %v1219, -2.0
        %v1476 = vmul.f32 %v1220, -2.0
        %v1477 = vmul.f32 %v1221, -2.0
        %v1478 = vmul.f32 %v1222, -2.0
        %v1479 = vmul.f32 %v1223, -2.0
        %v1480 = vmul.f32 %v1224, -2.0
        %v1481 = vmul.f32 %v1225, -2.0
        %v1482 = vmul.f32 %v1226, -2.0
        %v1483 = vmul.f32 %v1227, -2.0
        %v1484 = vmul.f32 %v1228, -2.0
        %v1485 = vmul.f32 %v1229, -2.0
        %v1486 = vmul.f32 %v1230, -2.0
        %v1487 = vmul.f32 %v1231, -2.0
        %v1488 = vmul.f32 %v1232, -2.0
        %v1489 = vmul.f32 %v1233, -2.0
        %v1490 = vmul.f32 %v1234, -2.0
        %v1491 = vmul.f32 %v1235, -2.0
        %v1492 = vmul.f32 %v1236, -2.0
        %v1493 = vmul.f32 %v1237, -2.0
        %v1494 = vmul.f32 %v1238, -2.0
        %v1495 = vmul.f32 %v1239, -2.0
        %v1496 = vmul.f32 %v1240, -2.0
        %v1497 = vmul.f32 %v1241, -2.0
        %v1498 = vmul.f32 %v1242, -2.0
        %v1499 = vmul.f32 %v1243, -2.0
        %v1500 = vmul.f32 %v1244, -2.0
        %v1501 = vmul.f32 %v1245, -2.0
        %v1502 = vmul.f32 %v1246, -2.0
        %v1503 = vmul.f32 %v1247, -2.0
        %v1504 = vmul.f32 %v1248, -2.0
        %v1505 = vmul.f32 %v1249, -2.0
        %v1506 = vmul.f32 %v1250, -2.0
        %v1507 = vmul.f32 %v1251, -2.0
        %v1508 = vmul.f32 %v1252, -2.0
        %v1509 = vmul.f32 %v1253, -2.0
        %v1510 = vmul.f32 %v1254, -2.0
        %v1511 = vmul.f32 %v1255, -2.0
        %v1512 = vmul.f32 %v1256, -2.0
        %v1513 = vmul.f32 %v1257, -2.0
        %v1514 = vmul.f32 %v1258, -2.0
        %v1515 = vmul.f32 %v1259, -2.0
        %v1516 = vmul.f32 %v1260, -2.0
        %v1517 = vmul.f32 %v1261, -2.0
        %v1518 = vmul.f32 %v1262, -2.0
        %v1519 = vmul.f32 %v1263, -2.0
        %v1520 = vmul.f32 %v1264, -2.0
        %v1521 = vmul.f32 %v1265, -2.0
        %v1522 = vmul.f32 %v1266, -2.0
        %v1523 = vmul.f32 %v1267, -2.0
        %v1524 = vmul.f32 %v1268, -2.0
        %v1525 = vmul.f32 %v1269, -2.0
        %v1526 = vmul.f32 %v1270, -2.0
        %v1527 = vmul.f32 %v1271, -2.0
        %v1528 = vmul.f32 %v1272, -2.0
        %v1529 = vmul.f32 %v1273, -2.0
        %v1530 = vmul.f32 %v1274, -2.0
        %v1531 = vmul.f32 %v1275, -2.0
        %v1532 = vmul.f32 %v1276, -2.0
        %v1533 = vmul.f32 %v1277, -2.0
        %v1534 = vmul.f32 %v1278, -2.0
        %v1535 = vmul.f32 %v1279, -2.0
        %v1536 = vmul.f32 %v1280, -2.0
        %v1537 = vmul.f32 %v1281, -2.0
        %v1538 = vmul.f32 %v1282, -2.0
        %v1539 = vmul.f32 %v1283, -2.0
        %v1540 = vmul.f32 %v1284, -2.0
        %v1541 = vmul.f32 %v1285, -2.0
        %v1542 = vmul.f32 %v1286, -2.0
        %v1543 = vmul.f32 %v1287, -2.0
        %v1544 = vmul.f32 %v1288, -2.0
        %v1545 = vmul.f32 %v1289, -2.0
        %v1546 = vmul.f32 %v1290, -2.0
        %v1547 = vmul.f32 %v1291, -2.0
        %v1548 = vmul.f32 %v1292, -2.0
        %v1549 = vmul.f32 %v1293, -2.0
        %v1550 = vmul.f32 %v1294, -2.0
        %v1551 = vmul.f32 %v1295, -2.0
        %v1552 = vmul.f32 %v1296, -2.0
        %v1553 = vmul.f32 %v1297, -2.0
        %v1554 = vmul.f32 %v1298, -2.0
        %v1555 = vmul.f32 %v1299, -2.0
        %v1556 = vmul.f32 %v1300, -2.0
        %v1557 = vmul.f32 %v1301, -2.0
        %v1558 = vmul.f32 %v1302, -2.0
        %v1559 = vmul.f32 %v1303, -2.0
        %v1560 = vmul.f32 %v1304, -2.0
        %v1561 = vmul.f32 %v1305, -2.0
        %v1562 = vmul.f32 %v1306, -2.0
        %v1563 = vmul.f32 %v1307, -2.0
        %v1564 = vmul.f32 %v1308, -2.0
        %v1565 = vmul.f32 %v1309, -2.0
        %v1566 = vmul.f32 %v1310, -2.0
        %v1567 = vmul.f32 %v1311, -2.0
        %v1568 = vmul.f32 %v1312, -2.0
        %v1569 = vmul.f32 %v1313, -2.0
        %v1570 = vmul.f32 %v1314, -2.0
        %v1571 = vmul.f32 %v1315, -2.0
        %v1572 = vmul.f32 %v1316, -2.0
        %v1573 = vmul.f32 %v1317, -2.0
        %v1574 = vmul.f32 %v1318, -2.0
        %v1575 = vmul.f32 %v1319, -2.0
        %v1576 = vmul.f32 %v1320, -2.0
        %v1577 = vmul.f32 %v1321, -2.0
        %v1578 = vmul.f32 %v1322, -2.0
        %v1579 = vmul.f32 %v1323, -2.0
        %v1580 = vmul.f32 %v1324, -2.0
        %v1581 = vmul.f32 %v1325, -2.0
        %v1582 = vmul.f32 %v1326, -2.0
        %v1583 = vmul.f32 %v1327, -2.0
        %v1584 = vmul.f32 %v1328, -2.0
        %v1585 = vmul.f32 %v1329, -2.0
        %v1586 = vmul.f32 %v1330, -2.0
        %v1587 = vmul.f32 %v1331, -2.0
        %v1588 = vmul.f32 %v1332, -2.0
        %v1589 = vmul.f32 %v1333, -2.0
        %v1590 = vmul.f32 %v1334, -2.0
        %v1591 = vmul.f32 %v1335, -2.0
        %v1592 = vmul.f32 %v1336, -2.0
        %v1593 = vmul.f32 %v1337, -2.0
        %v1594 = vmul.f32 %v1338, -2.0
        %v1595 = vmul.f32 %v1339, -2.0
        %v1596 = vmul.f32 %v1340, -2.0
        %v1597 = vmul.f32 %v1341, -2.0
        %v1598 = vmul.f32 %v1342, -2.0
        %v1599 = vmul.f32 %v1343, -2.0
        %v1600 = vmul.f32 %v1344, -2.0
        %v1601 = vmul.f32 %v1345, -2.0
        %v1602 = vmul.f32 %v1346, -2.0
        %v1603 = vmul.f32 %v1347, -2.0
        %v1604 = vmul.f32 %v1348, -2.0
        %v1605 = vmul.f32 %v1349, -2.0
        %v1606 = vmul.f32 %v1350, -2.0
        %v1607 = vmul.f32 %v1351, -2.0
        %v1608 = vmul.f32 %v1352, -2.0
        %v1609 = vmul.f32 %v1353, -2.0
        %v1610 = vmul.f32 %v1354, -2.0
        %v1611 = vmul.f32 %v1355, -2.0
        %v1612 = vmul.f32 %v1356, -2.0
        %v1613 = vmul.f32 %v1357, -2.0
        %v1614 = vmul.f32 %v1358, -2.0
        %v1615 = vmul.f32 %v1359, -2.0
        %v1616 = vmul.f32 %v1360, -2.0
        %v1617 = vmul.f32 %v1361, -2.0
        %v1618 = vmul.f32 %v1362, -2.0
        %v1619 = vmul.f32 %v1363, -2.0
        %v1620 = vmul.f32 %v1364, -2.0
        %v1621 = vmul.f32 %v1365, -2.0
        %v1622 = vmul.f32 %v1366, -2.0
        %v1623 = vmul.f32 %v1367, -2.0
        %v1624 = vmul.f32 %v1368, -2.0
        %v1625 = vmul.f32 %v1369, -2.0
        %v1626 = vmul.f32 %v1370, -2.0
        %v1627 = vmul.f32 %v1371, -2.0
        %v1628 = vmul.f32 %v1372, -2.0
        %v1629 = vmul.f32 %v1373, -2.0
        %v1630 = vmul.f32 %v1374, -2.0
        %v1631 = vmul.f32 %v1375, -2.0
        %v1632 = vmul.f32 %v1376, -2.0
        %v1633 = vmul.f32 %v1377, -2.0
        %v1634 = vmul.f32 %v1378, -2.0
        %v1635 = vmul.f32 %v1379, -2.0
        %v1636 = vmul.f32 %v1380, -2.0
        %v1637 = vmul.f32 %v1381, -2.0
        %v1638 = vmul.f32 %v1382, -2.0
        %v1639 = vmul.f32 %v1383, -2.0
        %v1640 = vmul.f32 %v1384, -2.0
        %v1641 = vmul.f32 %v1385, -2.0
        %v1642 = vmul.f32 %v1386, -2.0
        %v1643 = vmul.f32 %v1387, -2.0
        %v1644 = vmul.f32 %v1388, -2.0
        %v1645 = vmul.f32 %v1389, -2.0
        %v1646 = vmul.f32 %v1390, -2.0
        %v1647 = vmul.f32 %v1391, -2.0
        %v1648 = vmul.f32 %v1392, -2.0
        %v1649 = vmul.f32 %v1393, -2.0
        %v1650 = vmul.f32 %v1394, -2.0
        %v1651 = vmul.f32 %v1395, -2.0
        %v1652 = vmul.f32 %v1396, -2.0
        %v1653 = vmul.f32 %v1397, -2.0
        %v1654 = vmul.f32 %v1398, -2.0
        %v1655 = vmul.f32 %v1399, -2.0
        %v1656 = vmul.f32 %v1400, -2.0
        %v1657 = vmul.f32 %v1401, -2.0
        %v1658 = vmul.f32 %v1402, -2.0
        %v1659 = vmul.f32 %v1403, -2.0
        %v1660 = vmul.f32 %v1404, -2.0
        %v1661 = vmul.f32 %v1405, -2.0
        %v1662 = vmul.f32 %v1406, -2.0
        %v1663 = vmul.f32 %v1407, -2.0
        %v1664 = vmul.f32 %v1408, -2.0
        %v1665 = vmul.f32 %v1409, -2.0
        %v1666 = vmul.f32 %v1410, -2.0
        %v1667 = vmul.f32 %v1411, -2.0
        %v1668 = vmul.f32 %v1412, -2.0
        %v1669 = vmul.f32 %v1413, -2.0
        %v1670 = vmul.f32 %v1414, -2.0
        %v1671 = vmul.f32 %v1415, -2.0
        %v1672 = vmul.f32 %v1416, -2.0
        %v1673 = vmul.f32 %v1417, -2.0
        %v1674 = vmul.f32 %v1418, -2.0
        %v1675 = vmul.f32 %v1419, -2.0
        %v1676 = vmul.f32 %v1420, -2.0
        %v1677 = vmul.f32 %v1421, -2.0
        %v1678 = vmul.f32 %v1422, -2.0
        %v1679 = vmul.f32 %v1423, -2.0
        %v1680 = vmul.f32 %v200, %v200
        %v1681 = vmul.f32 %v201, %v201
        %v1682 = vmul.f32 %v202, %v202
        %v1683 = vmul.f32 %v203, %v203
        %v1684 = vmul.f32 %v204, %v204
        %v1685 = vmul.f32 %v205, %v205
        %v1686 = vmul.f32 %v206, %v206
        %v1687 = vmul.f32 %v207, %v207
        %v1688 = vmul.f32 %v208, %v208
        %v1689 = vmul.f32 %v209, %v209
        %v1690 = vmul.f32 %v210, %v210
        %v1691 = vmul.f32 %v211, %v211
        %v1692 = vmul.f32 %v212, %v212
        %v1693 = vmul.f32 %v213, %v213
        %v1694 = vmul.f32 %v214, %v214
        %v1695 = vmul.f32 %v215, %v215
        %1712 = vrot.lane.b32.xlu0 %v1680, 127
        %v1713 = vpop.permute.xlu0 %1712
        %1714 = vrot.lane.b32.xlu0 %v1681, 127
        %v1715 = vpop.permute.xlu0 %1714
        %1716 = vrot.lane.b32.xlu0 %v1682, 127
        %v1717 = vpop.permute.xlu0 %1716
        %1718 = vrot.lane.b32.xlu0 %v1683, 127
        %v1719 = vpop.permute.xlu0 %1718
        %1720 = vrot.lane.b32.xlu0 %v1684, 127
        %v1721 = vpop.permute.xlu0 %1720
        %1722 = vrot.lane.b32.xlu0 %v1685, 127
        %v1723 = vpop.permute.xlu0 %1722
        %1724 = vrot.lane.b32.xlu0 %v1686, 127
        %v1725 = vpop.permute.xlu0 %1724
        %1726 = vrot.lane.b32.xlu0 %v1687, 127
        %v1727 = vpop.permute.xlu0 %1726
        %1728 = vrot.lane.b32.xlu0 %v1688, 127
        %v1729 = vpop.permute.xlu0 %1728
        %1730 = vrot.lane.b32.xlu0 %v1689, 127
        %v1731 = vpop.permute.xlu0 %1730
        %1732 = vrot.lane.b32.xlu0 %v1690, 127
        %v1733 = vpop.permute.xlu0 %1732
        %1734 = vrot.lane.b32.xlu0 %v1691, 127
        %v1735 = vpop.permute.xlu0 %1734
        %1736 = vrot.lane.b32.xlu0 %v1692, 127
        %v1737 = vpop.permute.xlu0 %1736
        %1738 = vrot.lane.b32.xlu0 %v1693, 127
        %v1739 = vpop.permute.xlu0 %1738
        %1740 = vrot.lane.b32.xlu0 %v1694, 127
        %v1741 = vpop.permute.xlu0 %1740
        %1742 = vrot.lane.b32.xlu0 %v1695, 127
        %v1743 = vpop.permute.xlu0 %1742
        %v1760 = vadd.f32 %v1680, %v1713
        %v1761 = vadd.f32 %v1681, %v1715
        %v1762 = vadd.f32 %v1682, %v1717
        %v1763 = vadd.f32 %v1683, %v1719
        %v1764 = vadd.f32 %v1684, %v1721
        %v1765 = vadd.f32 %v1685, %v1723
        %v1766 = vadd.f32 %v1686, %v1725
        %v1767 = vadd.f32 %v1687, %v1727
        %v1768 = vadd.f32 %v1688, %v1729
        %v1769 = vadd.f32 %v1689, %v1731
        %v1770 = vadd.f32 %v1690, %v1733
        %v1771 = vadd.f32 %v1691, %v1735
        %v1772 = vadd.f32 %v1692, %v1737
        %v1773 = vadd.f32 %v1693, %v1739
        %v1774 = vadd.f32 %v1694, %v1741
        %v1775 = vadd.f32 %v1695, %v1743
        %1777 = vset.pattern.permute.xlu0 0
        %1778 = vperm.xlu0 %1777, %v1760
        %v1779 = vpop.permute.xlu0 %1778
        %1782 = vset.pattern.permute.xlu0 0
        %1783 = vperm.xlu0 %1782, %v1761
        %v1784 = vpop.permute.xlu0 %1783
        %1787 = vset.pattern.permute.xlu0 0
        %1788 = vperm.xlu0 %1787, %v1762
        %v1789 = vpop.permute.xlu0 %1788
        %1792 = vset.pattern.permute.xlu0 0
        %1793 = vperm.xlu0 %1792, %v1763
        %v1794 = vpop.permute.xlu0 %1793
        %1797 = vset.pattern.permute.xlu0 0
        %1798 = vperm.xlu0 %1797, %v1764
        %v1799 = vpop.permute.xlu0 %1798
        %1802 = vset.pattern.permute.xlu0 0
        %1803 = vperm.xlu0 %1802, %v1765
        %v1804 = vpop.permute.xlu0 %1803
        %1807 = vset.pattern.permute.xlu0 0
        %1808 = vperm.xlu0 %1807, %v1766
        %v1809 = vpop.permute.xlu0 %1808
        %1812 = vset.pattern.permute.xlu0 0
        %1813 = vperm.xlu0 %1812, %v1767
        %v1814 = vpop.permute.xlu0 %1813
        %1817 = vset.pattern.permute.xlu0 0
        %1818 = vperm.xlu0 %1817, %v1768
        %v1819 = vpop.permute.xlu0 %1818
        %1822 = vset.pattern.permute.xlu0 0
        %1823 = vperm.xlu0 %1822, %v1769
        %v1824 = vpop.permute.xlu0 %1823
        %1827 = vset.pattern.permute.xlu0 0
        %1828 = vperm.xlu0 %1827, %v1770
        %v1829 = vpop.permute.xlu0 %1828
        %1832 = vset.pattern.permute.xlu0 0
        %1833 = vperm.xlu0 %1832, %v1771
        %v1834 = vpop.permute.xlu0 %1833
        %1837 = vset.pattern.permute.xlu0 0
        %1838 = vperm.xlu0 %1837, %v1772
        %v1839 = vpop.permute.xlu0 %1838
        %1842 = vset.pattern.permute.xlu0 0
        %1843 = vperm.xlu0 %1842, %v1773
        %v1844 = vpop.permute.xlu0 %1843
        %1847 = vset.pattern.permute.xlu0 0
        %1848 = vperm.xlu0 %1847, %v1774
        %v1849 = vpop.permute.xlu0 %1848
        %1852 = vset.pattern.permute.xlu0 0
        %1853 = vperm.xlu0 %1852, %v1775
        %v1854 = vpop.permute.xlu0 %1853
        %v1856 = vadd.f32 %v1424, %v1779
        %v1857 = vadd.f32 %v1425, %v1779
        %v1858 = vadd.f32 %v1426, %v1779
        %v1859 = vadd.f32 %v1427, %v1779
        %v1860 = vadd.f32 %v1428, %v1779
        %v1861 = vadd.f32 %v1429, %v1779
        %v1862 = vadd.f32 %v1430, %v1779
        %v1863 = vadd.f32 %v1431, %v1779
        %v1864 = vadd.f32 %v1432, %v1779
        %v1865 = vadd.f32 %v1433, %v1779
        %v1866 = vadd.f32 %v1434, %v1779
        %v1867 = vadd.f32 %v1435, %v1779
        %v1868 = vadd.f32 %v1436, %v1779
        %v1869 = vadd.f32 %v1437, %v1779
        %v1870 = vadd.f32 %v1438, %v1779
        %v1871 = vadd.f32 %v1439, %v1779
        %v1872 = vadd.f32 %v1440, %v1784
        %v1873 = vadd.f32 %v1441, %v1784
        %v1874 = vadd.f32 %v1442, %v1784
        %v1875 = vadd.f32 %v1443, %v1784
        %v1876 = vadd.f32 %v1444, %v1784
        %v1877 = vadd.f32 %v1445, %v1784
        %v1878 = vadd.f32 %v1446, %v1784
        %v1879 = vadd.f32 %v1447, %v1784
        %v1880 = vadd.f32 %v1448, %v1784
        %v1881 = vadd.f32 %v1449, %v1784
        %v1882 = vadd.f32 %v1450, %v1784
        %v1883 = vadd.f32 %v1451, %v1784
        %v1884 = vadd.f32 %v1452, %v1784
        %v1885 = vadd.f32 %v1453, %v1784
        %v1886 = vadd.f32 %v1454, %v1784
        %v1887 = vadd.f32 %v1455, %v1784
        %v1888 = vadd.f32 %v1456, %v1789
        %v1889 = vadd.f32 %v1457, %v1789
        %v1890 = vadd.f32 %v1458, %v1789
        %v1891 = vadd.f32 %v1459, %v1789
        %v1892 = vadd.f32 %v1460, %v1789
        %v1893 = vadd.f32 %v1461, %v1789
        %v1894 = vadd.f32 %v1462, %v1789
        %v1895 = vadd.f32 %v1463, %v1789
        %v1896 = vadd.f32 %v1464, %v1789
        %v1897 = vadd.f32 %v1465, %v1789
        %v1898 = vadd.f32 %v1466, %v1789
        %v1899 = vadd.f32 %v1467, %v1789
        %v1900 = vadd.f32 %v1468, %v1789
        %v1901 = vadd.f32 %v1469, %v1789
        %v1902 = vadd.f32 %v1470, %v1789
        %v1903 = vadd.f32 %v1471, %v1789
        %v1904 = vadd.f32 %v1472, %v1794
        %v1905 = vadd.f32 %v1473, %v1794
        %v1906 = vadd.f32 %v1474, %v1794
        %v1907 = vadd.f32 %v1475, %v1794
        %v1908 = vadd.f32 %v1476, %v1794
        %v1909 = vadd.f32 %v1477, %v1794
        %v1910 = vadd.f32 %v1478, %v1794
        %v1911 = vadd.f32 %v1479, %v1794
        %v1912 = vadd.f32 %v1480, %v1794
        %v1913 = vadd.f32 %v1481, %v1794
        %v1914 = vadd.f32 %v1482, %v1794
        %v1915 = vadd.f32 %v1483, %v1794
        %v1916 = vadd.f32 %v1484, %v1794
        %v1917 = vadd.f32 %v1485, %v1794
        %v1918 = vadd.f32 %v1486, %v1794
        %v1919 = vadd.f32 %v1487, %v1794
        %v1920 = vadd.f32 %v1488, %v1799
        %v1921 = vadd.f32 %v1489, %v1799
        %v1922 = vadd.f32 %v1490, %v1799
        %v1923 = vadd.f32 %v1491, %v1799
        %v1924 = vadd.f32 %v1492, %v1799
        %v1925 = vadd.f32 %v1493, %v1799
        %v1926 = vadd.f32 %v1494, %v1799
        %v1927 = vadd.f32 %v1495, %v1799
        %v1928 = vadd.f32 %v1496, %v1799
        %v1929 = vadd.f32 %v1497, %v1799
        %v1930 = vadd.f32 %v1498, %v1799
        %v1931 = vadd.f32 %v1499, %v1799
        %v1932 = vadd.f32 %v1500, %v1799
        %v1933 = vadd.f32 %v1501, %v1799
        %v1934 = vadd.f32 %v1502, %v1799
        %v1935 = vadd.f32 %v1503, %v1799
        %v1936 = vadd.f32 %v1504, %v1804
        %v1937 = vadd.f32 %v1505, %v1804
        %v1938 = vadd.f32 %v1506, %v1804
        %v1939 = vadd.f32 %v1507, %v1804
        %v1940 = vadd.f32 %v1508, %v1804
        %v1941 = vadd.f32 %v1509, %v1804
        %v1942 = vadd.f32 %v1510, %v1804
        %v1943 = vadd.f32 %v1511, %v1804
        %v1944 = vadd.f32 %v1512, %v1804
        %v1945 = vadd.f32 %v1513, %v1804
        %v1946 = vadd.f32 %v1514, %v1804
        %v1947 = vadd.f32 %v1515, %v1804
        %v1948 = vadd.f32 %v1516, %v1804
        %v1949 = vadd.f32 %v1517, %v1804
        %v1950 = vadd.f32 %v1518, %v1804
        %v1951 = vadd.f32 %v1519, %v1804
        %v1952 = vadd.f32 %v1520, %v1809
        %v1953 = vadd.f32 %v1521, %v1809
        %v1954 = vadd.f32 %v1522, %v1809
        %v1955 = vadd.f32 %v1523, %v1809
        %v1956 = vadd.f32 %v1524, %v1809
        %v1957 = vadd.f32 %v1525, %v1809
        %v1958 = vadd.f32 %v1526, %v1809
        %v1959 = vadd.f32 %v1527, %v1809
        %v1960 = vadd.f32 %v1528, %v1809
        %v1961 = vadd.f32 %v1529, %v1809
        %v1962 = vadd.f32 %v1530, %v1809
        %v1963 = vadd.f32 %v1531, %v1809
        %v1964 = vadd.f32 %v1532, %v1809
        %v1965 = vadd.f32 %v1533, %v1809
        %v1966 = vadd.f32 %v1534, %v1809
        %v1967 = vadd.f32 %v1535, %v1809
        %v1968 = vadd.f32 %v1536, %v1814
        %v1969 = vadd.f32 %v1537, %v1814
        %v1970 = vadd.f32 %v1538, %v1814
        %v1971 = vadd.f32 %v1539, %v1814
        %v1972 = vadd.f32 %v1540, %v1814
        %v1973 = vadd.f32 %v1541, %v1814
        %v1974 = vadd.f32 %v1542, %v1814
        %v1975 = vadd.f32 %v1543, %v1814
        %v1976 = vadd.f32 %v1544, %v1814
        %v1977 = vadd.f32 %v1545, %v1814
        %v1978 = vadd.f32 %v1546, %v1814
        %v1979 = vadd.f32 %v1547, %v1814
        %v1980 = vadd.f32 %v1548, %v1814
        %v1981 = vadd.f32 %v1549, %v1814
        %v1982 = vadd.f32 %v1550, %v1814
        %v1983 = vadd.f32 %v1551, %v1814
        %v1984 = vadd.f32 %v1552, %v1819
        %v1985 = vadd.f32 %v1553, %v1819
        %v1986 = vadd.f32 %v1554, %v1819
        %v1987 = vadd.f32 %v1555, %v1819
        %v1988 = vadd.f32 %v1556, %v1819
        %v1989 = vadd.f32 %v1557, %v1819
        %v1990 = vadd.f32 %v1558, %v1819
        %v1991 = vadd.f32 %v1559, %v1819
        %v1992 = vadd.f32 %v1560, %v1819
        %v1993 = vadd.f32 %v1561, %v1819
        %v1994 = vadd.f32 %v1562, %v1819
        %v1995 = vadd.f32 %v1563, %v1819
        %v1996 = vadd.f32 %v1564, %v1819
        %v1997 = vadd.f32 %v1565, %v1819
        %v1998 = vadd.f32 %v1566, %v1819
        %v1999 = vadd.f32 %v1567, %v1819
        %v2000 = vadd.f32 %v1568, %v1824
        %v2001 = vadd.f32 %v1569, %v1824
        %v2002 = vadd.f32 %v1570, %v1824
        %v2003 = vadd.f32 %v1571, %v1824
        %v2004 = vadd.f32 %v1572, %v1824
        %v2005 = vadd.f32 %v1573, %v1824
        %v2006 = vadd.f32 %v1574, %v1824
        %v2007 = vadd.f32 %v1575, %v1824
        %v2008 = vadd.f32 %v1576, %v1824
        %v2009 = vadd.f32 %v1577, %v1824
        %v2010 = vadd.f32 %v1578, %v1824
        %v2011 = vadd.f32 %v1579, %v1824
        %v2012 = vadd.f32 %v1580, %v1824
        %v2013 = vadd.f32 %v1581, %v1824
        %v2014 = vadd.f32 %v1582, %v1824
        %v2015 = vadd.f32 %v1583, %v1824
        %v2016 = vadd.f32 %v1584, %v1829
        %v2017 = vadd.f32 %v1585, %v1829
        %v2018 = vadd.f32 %v1586, %v1829
        %v2019 = vadd.f32 %v1587, %v1829
        %v2020 = vadd.f32 %v1588, %v1829
        %v2021 = vadd.f32 %v1589, %v1829
        %v2022 = vadd.f32 %v1590, %v1829
        %v2023 = vadd.f32 %v1591, %v1829
        %v2024 = vadd.f32 %v1592, %v1829
        %v2025 = vadd.f32 %v1593, %v1829
        %v2026 = vadd.f32 %v1594, %v1829
        %v2027 = vadd.f32 %v1595, %v1829
        %v2028 = vadd.f32 %v1596, %v1829
        %v2029 = vadd.f32 %v1597, %v1829
        %v2030 = vadd.f32 %v1598, %v1829
        %v2031 = vadd.f32 %v1599, %v1829
        %v2032 = vadd.f32 %v1600, %v1834
        %v2033 = vadd.f32 %v1601, %v1834
        %v2034 = vadd.f32 %v1602, %v1834
        %v2035 = vadd.f32 %v1603, %v1834
        %v2036 = vadd.f32 %v1604, %v1834
        %v2037 = vadd.f32 %v1605, %v1834
        %v2038 = vadd.f32 %v1606, %v1834
        %v2039 = vadd.f32 %v1607, %v1834
        %v2040 = vadd.f32 %v1608, %v1834
        %v2041 = vadd.f32 %v1609, %v1834
        %v2042 = vadd.f32 %v1610, %v1834
        %v2043 = vadd.f32 %v1611, %v1834
        %v2044 = vadd.f32 %v1612, %v1834
        %v2045 = vadd.f32 %v1613, %v1834
        %v2046 = vadd.f32 %v1614, %v1834
        %v2047 = vadd.f32 %v1615, %v1834
        %v2048 = vadd.f32 %v1616, %v1839
        %v2049 = vadd.f32 %v1617, %v1839
        %v2050 = vadd.f32 %v1618, %v1839
        %v2051 = vadd.f32 %v1619, %v1839
        %v2052 = vadd.f32 %v1620, %v1839
        %v2053 = vadd.f32 %v1621, %v1839
        %v2054 = vadd.f32 %v1622, %v1839
        %v2055 = vadd.f32 %v1623, %v1839
        %v2056 = vadd.f32 %v1624, %v1839
        %v2057 = vadd.f32 %v1625, %v1839
        %v2058 = vadd.f32 %v1626, %v1839
        %v2059 = vadd.f32 %v1627, %v1839
        %v2060 = vadd.f32 %v1628, %v1839
        %v2061 = vadd.f32 %v1629, %v1839
        %v2062 = vadd.f32 %v1630, %v1839
        %v2063 = vadd.f32 %v1631, %v1839
        %v2064 = vadd.f32 %v1632, %v1844
        %v2065 = vadd.f32 %v1633, %v1844
        %v2066 = vadd.f32 %v1634, %v1844
        %v2067 = vadd.f32 %v1635, %v1844
        %v2068 = vadd.f32 %v1636, %v1844
        %v2069 = vadd.f32 %v1637, %v1844
        %v2070 = vadd.f32 %v1638, %v1844
        %v2071 = vadd.f32 %v1639, %v1844
        %v2072 = vadd.f32 %v1640, %v1844
        %v2073 = vadd.f32 %v1641, %v1844
        %v2074 = vadd.f32 %v1642, %v1844
        %v2075 = vadd.f32 %v1643, %v1844
        %v2076 = vadd.f32 %v1644, %v1844
        %v2077 = vadd.f32 %v1645, %v1844
        %v2078 = vadd.f32 %v1646, %v1844
        %v2079 = vadd.f32 %v1647, %v1844
        %v2080 = vadd.f32 %v1648, %v1849
        %v2081 = vadd.f32 %v1649, %v1849
        %v2082 = vadd.f32 %v1650, %v1849
        %v2083 = vadd.f32 %v1651, %v1849
        %v2084 = vadd.f32 %v1652, %v1849
        %v2085 = vadd.f32 %v1653, %v1849
        %v2086 = vadd.f32 %v1654, %v1849
        %v2087 = vadd.f32 %v1655, %v1849
        %v2088 = vadd.f32 %v1656, %v1849
        %v2089 = vadd.f32 %v1657, %v1849
        %v2090 = vadd.f32 %v1658, %v1849
        %v2091 = vadd.f32 %v1659, %v1849
        %v2092 = vadd.f32 %v1660, %v1849
        %v2093 = vadd.f32 %v1661, %v1849
        %v2094 = vadd.f32 %v1662, %v1849
        %v2095 = vadd.f32 %v1663, %v1849
        %v2096 = vadd.f32 %v1664, %v1854
        %v2097 = vadd.f32 %v1665, %v1854
        %v2098 = vadd.f32 %v1666, %v1854
        %v2099 = vadd.f32 %v1667, %v1854
        %v2100 = vadd.f32 %v1668, %v1854
        %v2101 = vadd.f32 %v1669, %v1854
        %v2102 = vadd.f32 %v1670, %v1854
        %v2103 = vadd.f32 %v1671, %v1854
        %v2104 = vadd.f32 %v1672, %v1854
        %v2105 = vadd.f32 %v1673, %v1854
        %v2106 = vadd.f32 %v1674, %v1854
        %v2107 = vadd.f32 %v1675, %v1854
        %v2108 = vadd.f32 %v1676, %v1854
        %v2109 = vadd.f32 %v1677, %v1854
        %v2110 = vadd.f32 %v1678, %v1854
        %v2111 = vadd.f32 %v1679, %v1854
        %v2112 = vmul.f32 %v216, %v216
        %v2113 = vmul.f32 %v217, %v217
        %v2114 = vmul.f32 %v218, %v218
        %v2115 = vmul.f32 %v219, %v219
        %v2120 = vrot.slane %v2112, 7
        %v2121 = vrot.slane %v2120, 2
        %v2122 = vrot.slane %v2113, 7
        %v2123 = vrot.slane %v2122, 2
        %v2124 = vrot.slane %v2114, 7
        %v2125 = vrot.slane %v2124, 2
        %v2126 = vrot.slane %v2115, 7
        %v2127 = vrot.slane %v2126, 2
        %v2132 = vadd.f32 %v2112, %v2121
        %v2133 = vadd.f32 %v2113, %v2123
        %v2134 = vadd.f32 %v2114, %v2125
        %v2135 = vadd.f32 %v2115, %v2127
        %v2140 = vlaneseq
        %v2141 = vshrl.u32 %v2140, 7
        %v2142 = vsub.s32 0, %v2141
        %v2143 = vrot.slane %v2132, %v2142
        %v2144 = vlaneseq
        %v2145 = vshrl.u32 %v2144, 7
        %v2146 = vsub.s32 2, %v2145
        %v2147 = vrot.slane %v2132, %v2146
        %v2148 = vlaneseq
        %v2149 = vshrl.u32 %v2148, 7
        %v2150 = vsub.s32 4, %v2149
        %v2151 = vrot.slane %v2132, %v2150
        %v2152 = vlaneseq
        %v2153 = vshrl.u32 %v2152, 7
        %v2154 = vsub.s32 6, %v2153
        %v2155 = vrot.slane %v2132, %v2154
        %v2156 = vlaneseq
        %v2157 = vshrl.u32 %v2156, 7
        %v2158 = vsub.s32 0, %v2157
        %v2159 = vrot.slane %v2133, %v2158
        %v2160 = vlaneseq
        %v2161 = vshrl.u32 %v2160, 7
        %v2162 = vsub.s32 2, %v2161
        %v2163 = vrot.slane %v2133, %v2162
        %v2164 = vlaneseq
        %v2165 = vshrl.u32 %v2164, 7
        %v2166 = vsub.s32 4, %v2165
        %v2167 = vrot.slane %v2133, %v2166
        %v2168 = vlaneseq
        %v2169 = vshrl.u32 %v2168, 7
        %v2170 = vsub.s32 6, %v2169
        %v2171 = vrot.slane %v2133, %v2170
        %v2172 = vlaneseq
        %v2173 = vshrl.u32 %v2172, 7
        %v2174 = vsub.s32 0, %v2173
        %v2175 = vrot.slane %v2134, %v2174
        %v2176 = vlaneseq
        %v2177 = vshrl.u32 %v2176, 7
        %v2178 = vsub.s32 2, %v2177
        %v2179 = vrot.slane %v2134, %v2178
        %v2180 = vlaneseq
        %v2181 = vshrl.u32 %v2180, 7
        %v2182 = vsub.s32 4, %v2181
        %v2183 = vrot.slane %v2134, %v2182
        %v2184 = vlaneseq
        %v2185 = vshrl.u32 %v2184, 7
        %v2186 = vsub.s32 6, %v2185
        %v2187 = vrot.slane %v2134, %v2186
        %v2188 = vlaneseq
        %v2189 = vshrl.u32 %v2188, 7
        %v2190 = vsub.s32 0, %v2189
        %v2191 = vrot.slane %v2135, %v2190
        %v2192 = vlaneseq
        %v2193 = vshrl.u32 %v2192, 7
        %v2194 = vsub.s32 2, %v2193
        %v2195 = vrot.slane %v2135, %v2194
        %v2196 = vlaneseq
        %v2197 = vshrl.u32 %v2196, 7
        %v2198 = vsub.s32 4, %v2197
        %v2199 = vrot.slane %v2135, %v2198
        %v2200 = vlaneseq
        %v2201 = vshrl.u32 %v2200, 7
        %v2202 = vsub.s32 6, %v2201
        %v2203 = vrot.slane %v2135, %v2202
        %v2220 = vlaneseq
        %v2221 = vshrl.u32 %v2220, 7
        %v2222 = vsub.s32 0, %v2221
        %v2223 = vrot.slane %v2143, %v2222
        %v2224 = vlaneseq
        %v2225 = vshrl.u32 %v2224, 7
        %v2226 = vsub.s32 0, %v2225
        %v2227 = vrot.slane %v2147, %v2226
        %v2228 = vlaneseq
        %v2229 = vshrl.u32 %v2228, 7
        %v2230 = vsub.s32 0, %v2229
        %v2231 = vrot.slane %v2151, %v2230
        %v2232 = vlaneseq
        %v2233 = vshrl.u32 %v2232, 7
        %v2234 = vsub.s32 0, %v2233
        %v2235 = vrot.slane %v2155, %v2234
        %v2236 = vlaneseq
        %v2237 = vshrl.u32 %v2236, 7
        %v2238 = vsub.s32 0, %v2237
        %v2239 = vrot.slane %v2159, %v2238
        %v2240 = vlaneseq
        %v2241 = vshrl.u32 %v2240, 7
        %v2242 = vsub.s32 0, %v2241
        %v2243 = vrot.slane %v2163, %v2242
        %v2244 = vlaneseq
        %v2245 = vshrl.u32 %v2244, 7
        %v2246 = vsub.s32 0, %v2245
        %v2247 = vrot.slane %v2167, %v2246
        %v2248 = vlaneseq
        %v2249 = vshrl.u32 %v2248, 7
        %v2250 = vsub.s32 0, %v2249
        %v2251 = vrot.slane %v2171, %v2250
        %v2252 = vlaneseq
        %v2253 = vshrl.u32 %v2252, 7
        %v2254 = vsub.s32 0, %v2253
        %v2255 = vrot.slane %v2175, %v2254
        %v2256 = vlaneseq
        %v2257 = vshrl.u32 %v2256, 7
        %v2258 = vsub.s32 0, %v2257
        %v2259 = vrot.slane %v2179, %v2258
        %v2260 = vlaneseq
        %v2261 = vshrl.u32 %v2260, 7
        %v2262 = vsub.s32 0, %v2261
        %v2263 = vrot.slane %v2183, %v2262
        %v2264 = vlaneseq
        %v2265 = vshrl.u32 %v2264, 7
        %v2266 = vsub.s32 0, %v2265
        %v2267 = vrot.slane %v2187, %v2266
        %v2268 = vlaneseq
        %v2269 = vshrl.u32 %v2268, 7
        %v2270 = vsub.s32 0, %v2269
        %v2271 = vrot.slane %v2191, %v2270
        %v2272 = vlaneseq
        %v2273 = vshrl.u32 %v2272, 7
        %v2274 = vsub.s32 0, %v2273
        %v2275 = vrot.slane %v2195, %v2274
        %v2276 = vlaneseq
        %v2277 = vshrl.u32 %v2276, 7
        %v2278 = vsub.s32 0, %v2277
        %v2279 = vrot.slane %v2199, %v2278
        %v2280 = vlaneseq
        %v2281 = vshrl.u32 %v2280, 7
        %v2282 = vsub.s32 0, %v2281
        %v2283 = vrot.slane %v2203, %v2282
        %v2284 = vadd.f32 %v1856, %v2223
        %v2285 = vadd.f32 %v1857, %v2227
        %v2286 = vadd.f32 %v1858, %v2231
        %v2287 = vadd.f32 %v1859, %v2235
        %v2288 = vadd.f32 %v1860, %v2239
        %v2289 = vadd.f32 %v1861, %v2243
        %v2290 = vadd.f32 %v1862, %v2247
        %v2291 = vadd.f32 %v1863, %v2251
        %v2292 = vadd.f32 %v1864, %v2255
        %v2293 = vadd.f32 %v1865, %v2259
        %v2294 = vadd.f32 %v1866, %v2263
        %v2295 = vadd.f32 %v1867, %v2267
        %v2296 = vadd.f32 %v1868, %v2271
        %v2297 = vadd.f32 %v1869, %v2275
        %v2298 = vadd.f32 %v1870, %v2279
        %v2299 = vadd.f32 %v1871, %v2283
        %v2300 = vadd.f32 %v1872, %v2223
        %v2301 = vadd.f32 %v1873, %v2227
        %v2302 = vadd.f32 %v1874, %v2231
        %v2303 = vadd.f32 %v1875, %v2235
        %v2304 = vadd.f32 %v1876, %v2239
        %v2305 = vadd.f32 %v1877, %v2243
        %v2306 = vadd.f32 %v1878, %v2247
        %v2307 = vadd.f32 %v1879, %v2251
        %v2308 = vadd.f32 %v1880, %v2255
        %v2309 = vadd.f32 %v1881, %v2259
        %v2310 = vadd.f32 %v1882, %v2263
        %v2311 = vadd.f32 %v1883, %v2267
        %v2312 = vadd.f32 %v1884, %v2271
        %v2313 = vadd.f32 %v1885, %v2275
        %v2314 = vadd.f32 %v1886, %v2279
        %v2315 = vadd.f32 %v1887, %v2283
        %v2316 = vadd.f32 %v1888, %v2223
        %v2317 = vadd.f32 %v1889, %v2227
        %v2318 = vadd.f32 %v1890, %v2231
        %v2319 = vadd.f32 %v1891, %v2235
        %v2320 = vadd.f32 %v1892, %v2239
        %v2321 = vadd.f32 %v1893, %v2243
        %v2322 = vadd.f32 %v1894, %v2247
        %v2323 = vadd.f32 %v1895, %v2251
        %v2324 = vadd.f32 %v1896, %v2255
        %v2325 = vadd.f32 %v1897, %v2259
        %v2326 = vadd.f32 %v1898, %v2263
        %v2327 = vadd.f32 %v1899, %v2267
        %v2328 = vadd.f32 %v1900, %v2271
        %v2329 = vadd.f32 %v1901, %v2275
        %v2330 = vadd.f32 %v1902, %v2279
        %v2331 = vadd.f32 %v1903, %v2283
        %v2332 = vadd.f32 %v1904, %v2223
        %v2333 = vadd.f32 %v1905, %v2227
        %v2334 = vadd.f32 %v1906, %v2231
        %v2335 = vadd.f32 %v1907, %v2235
        %v2336 = vadd.f32 %v1908, %v2239
        %v2337 = vadd.f32 %v1909, %v2243
        %v2338 = vadd.f32 %v1910, %v2247
        %v2339 = vadd.f32 %v1911, %v2251
        %v2340 = vadd.f32 %v1912, %v2255
        %v2341 = vadd.f32 %v1913, %v2259
        %v2342 = vadd.f32 %v1914, %v2263
        %v2343 = vadd.f32 %v1915, %v2267
        %v2344 = vadd.f32 %v1916, %v2271
        %v2345 = vadd.f32 %v1917, %v2275
        %v2346 = vadd.f32 %v1918, %v2279
        %v2347 = vadd.f32 %v1919, %v2283
        %v2348 = vadd.f32 %v1920, %v2223
        %v2349 = vadd.f32 %v1921, %v2227
        %v2350 = vadd.f32 %v1922, %v2231
        %v2351 = vadd.f32 %v1923, %v2235
        %v2352 = vadd.f32 %v1924, %v2239
        %v2353 = vadd.f32 %v1925, %v2243
        %v2354 = vadd.f32 %v1926, %v2247
        %v2355 = vadd.f32 %v1927, %v2251
        %v2356 = vadd.f32 %v1928, %v2255
        %v2357 = vadd.f32 %v1929, %v2259
        %v2358 = vadd.f32 %v1930, %v2263
        %v2359 = vadd.f32 %v1931, %v2267
        %v2360 = vadd.f32 %v1932, %v2271
        %v2361 = vadd.f32 %v1933, %v2275
        %v2362 = vadd.f32 %v1934, %v2279
        %v2363 = vadd.f32 %v1935, %v2283
        %v2364 = vadd.f32 %v1936, %v2223
        %v2365 = vadd.f32 %v1937, %v2227
        %v2366 = vadd.f32 %v1938, %v2231
        %v2367 = vadd.f32 %v1939, %v2235
        %v2368 = vadd.f32 %v1940, %v2239
        %v2369 = vadd.f32 %v1941, %v2243
        %v2370 = vadd.f32 %v1942, %v2247
        %v2371 = vadd.f32 %v1943, %v2251
        %v2372 = vadd.f32 %v1944, %v2255
        %v2373 = vadd.f32 %v1945, %v2259
        %v2374 = vadd.f32 %v1946, %v2263
        %v2375 = vadd.f32 %v1947, %v2267
        %v2376 = vadd.f32 %v1948, %v2271
        %v2377 = vadd.f32 %v1949, %v2275
        %v2378 = vadd.f32 %v1950, %v2279
        %v2379 = vadd.f32 %v1951, %v2283
        %v2380 = vadd.f32 %v1952, %v2223
        %v2381 = vadd.f32 %v1953, %v2227
        %v2382 = vadd.f32 %v1954, %v2231
        %v2383 = vadd.f32 %v1955, %v2235
        %v2384 = vadd.f32 %v1956, %v2239
        %v2385 = vadd.f32 %v1957, %v2243
        %v2386 = vadd.f32 %v1958, %v2247
        %v2387 = vadd.f32 %v1959, %v2251
        %v2388 = vadd.f32 %v1960, %v2255
        %v2389 = vadd.f32 %v1961, %v2259
        %v2390 = vadd.f32 %v1962, %v2263
        %v2391 = vadd.f32 %v1963, %v2267
        %v2392 = vadd.f32 %v1964, %v2271
        %v2393 = vadd.f32 %v1965, %v2275
        %v2394 = vadd.f32 %v1966, %v2279
        %v2395 = vadd.f32 %v1967, %v2283
        %v2396 = vadd.f32 %v1968, %v2223
        %v2397 = vadd.f32 %v1969, %v2227
        %v2398 = vadd.f32 %v1970, %v2231
        %v2399 = vadd.f32 %v1971, %v2235
        %v2400 = vadd.f32 %v1972, %v2239
        %v2401 = vadd.f32 %v1973, %v2243
        %v2402 = vadd.f32 %v1974, %v2247
        %v2403 = vadd.f32 %v1975, %v2251
        %v2404 = vadd.f32 %v1976, %v2255
        %v2405 = vadd.f32 %v1977, %v2259
        %v2406 = vadd.f32 %v1978, %v2263
        %v2407 = vadd.f32 %v1979, %v2267
        %v2408 = vadd.f32 %v1980, %v2271
        %v2409 = vadd.f32 %v1981, %v2275
        %v2410 = vadd.f32 %v1982, %v2279
        %v2411 = vadd.f32 %v1983, %v2283
        %v2412 = vadd.f32 %v1984, %v2223
        %v2413 = vadd.f32 %v1985, %v2227
        %v2414 = vadd.f32 %v1986, %v2231
        %v2415 = vadd.f32 %v1987, %v2235
        %v2416 = vadd.f32 %v1988, %v2239
        %v2417 = vadd.f32 %v1989, %v2243
        %v2418 = vadd.f32 %v1990, %v2247
        %v2419 = vadd.f32 %v1991, %v2251
        %v2420 = vadd.f32 %v1992, %v2255
        %v2421 = vadd.f32 %v1993, %v2259
        %v2422 = vadd.f32 %v1994, %v2263
        %v2423 = vadd.f32 %v1995, %v2267
        %v2424 = vadd.f32 %v1996, %v2271
        %v2425 = vadd.f32 %v1997, %v2275
        %v2426 = vadd.f32 %v1998, %v2279
        %v2427 = vadd.f32 %v1999, %v2283
        %v2428 = vadd.f32 %v2000, %v2223
        %v2429 = vadd.f32 %v2001, %v2227
        %v2430 = vadd.f32 %v2002, %v2231
        %v2431 = vadd.f32 %v2003, %v2235
        %v2432 = vadd.f32 %v2004, %v2239
        %v2433 = vadd.f32 %v2005, %v2243
        %v2434 = vadd.f32 %v2006, %v2247
        %v2435 = vadd.f32 %v2007, %v2251
        %v2436 = vadd.f32 %v2008, %v2255
        %v2437 = vadd.f32 %v2009, %v2259
        %v2438 = vadd.f32 %v2010, %v2263
        %v2439 = vadd.f32 %v2011, %v2267
        %v2440 = vadd.f32 %v2012, %v2271
        %v2441 = vadd.f32 %v2013, %v2275
        %v2442 = vadd.f32 %v2014, %v2279
        %v2443 = vadd.f32 %v2015, %v2283
        %v2444 = vadd.f32 %v2016, %v2223
        %v2445 = vadd.f32 %v2017, %v2227
        %v2446 = vadd.f32 %v2018, %v2231
        %v2447 = vadd.f32 %v2019, %v2235
        %v2448 = vadd.f32 %v2020, %v2239
        %v2449 = vadd.f32 %v2021, %v2243
        %v2450 = vadd.f32 %v2022, %v2247
        %v2451 = vadd.f32 %v2023, %v2251
        %v2452 = vadd.f32 %v2024, %v2255
        %v2453 = vadd.f32 %v2025, %v2259
        %v2454 = vadd.f32 %v2026, %v2263
        %v2455 = vadd.f32 %v2027, %v2267
        %v2456 = vadd.f32 %v2028, %v2271
        %v2457 = vadd.f32 %v2029, %v2275
        %v2458 = vadd.f32 %v2030, %v2279
        %v2459 = vadd.f32 %v2031, %v2283
        %v2460 = vadd.f32 %v2032, %v2223
        %v2461 = vadd.f32 %v2033, %v2227
        %v2462 = vadd.f32 %v2034, %v2231
        %v2463 = vadd.f32 %v2035, %v2235
        %v2464 = vadd.f32 %v2036, %v2239
        %v2465 = vadd.f32 %v2037, %v2243
        %v2466 = vadd.f32 %v2038, %v2247
        %v2467 = vadd.f32 %v2039, %v2251
        %v2468 = vadd.f32 %v2040, %v2255
        %v2469 = vadd.f32 %v2041, %v2259
        %v2470 = vadd.f32 %v2042, %v2263
        %v2471 = vadd.f32 %v2043, %v2267
        %v2472 = vadd.f32 %v2044, %v2271
        %v2473 = vadd.f32 %v2045, %v2275
        %v2474 = vadd.f32 %v2046, %v2279
        %v2475 = vadd.f32 %v2047, %v2283
        %v2476 = vadd.f32 %v2048, %v2223
        %v2477 = vadd.f32 %v2049, %v2227
        %v2478 = vadd.f32 %v2050, %v2231
        %v2479 = vadd.f32 %v2051, %v2235
        %v2480 = vadd.f32 %v2052, %v2239
        %v2481 = vadd.f32 %v2053, %v2243
        %v2482 = vadd.f32 %v2054, %v2247
        %v2483 = vadd.f32 %v2055, %v2251
        %v2484 = vadd.f32 %v2056, %v2255
        %v2485 = vadd.f32 %v2057, %v2259
        %v2486 = vadd.f32 %v2058, %v2263
        %v2487 = vadd.f32 %v2059, %v2267
        %v2488 = vadd.f32 %v2060, %v2271
        %v2489 = vadd.f32 %v2061, %v2275
        %v2490 = vadd.f32 %v2062, %v2279
        %v2491 = vadd.f32 %v2063, %v2283
        %v2492 = vadd.f32 %v2064, %v2223
        %v2493 = vadd.f32 %v2065, %v2227
        %v2494 = vadd.f32 %v2066, %v2231
        %v2495 = vadd.f32 %v2067, %v2235
        %v2496 = vadd.f32 %v2068, %v2239
        %v2497 = vadd.f32 %v2069, %v2243
        %v2498 = vadd.f32 %v2070, %v2247
        %v2499 = vadd.f32 %v2071, %v2251
        %v2500 = vadd.f32 %v2072, %v2255
        %v2501 = vadd.f32 %v2073, %v2259
        %v2502 = vadd.f32 %v2074, %v2263
        %v2503 = vadd.f32 %v2075, %v2267
        %v2504 = vadd.f32 %v2076, %v2271
        %v2505 = vadd.f32 %v2077, %v2275
        %v2506 = vadd.f32 %v2078, %v2279
        %v2507 = vadd.f32 %v2079, %v2283
        %v2508 = vadd.f32 %v2080, %v2223
        %v2509 = vadd.f32 %v2081, %v2227
        %v2510 = vadd.f32 %v2082, %v2231
        %v2511 = vadd.f32 %v2083, %v2235
        %v2512 = vadd.f32 %v2084, %v2239
        %v2513 = vadd.f32 %v2085, %v2243
        %v2514 = vadd.f32 %v2086, %v2247
        %v2515 = vadd.f32 %v2087, %v2251
        %v2516 = vadd.f32 %v2088, %v2255
        %v2517 = vadd.f32 %v2089, %v2259
        %v2518 = vadd.f32 %v2090, %v2263
        %v2519 = vadd.f32 %v2091, %v2267
        %v2520 = vadd.f32 %v2092, %v2271
        %v2521 = vadd.f32 %v2093, %v2275
        %v2522 = vadd.f32 %v2094, %v2279
        %v2523 = vadd.f32 %v2095, %v2283
        %v2524 = vadd.f32 %v2096, %v2223
        %v2525 = vadd.f32 %v2097, %v2227
        %v2526 = vadd.f32 %v2098, %v2231
        %v2527 = vadd.f32 %v2099, %v2235
        %v2528 = vadd.f32 %v2100, %v2239
        %v2529 = vadd.f32 %v2101, %v2243
        %v2530 = vadd.f32 %v2102, %v2247
        %v2531 = vadd.f32 %v2103, %v2251
        %v2532 = vadd.f32 %v2104, %v2255
        %v2533 = vadd.f32 %v2105, %v2259
        %v2534 = vadd.f32 %v2106, %v2263
        %v2535 = vadd.f32 %v2107, %v2267
        %v2536 = vadd.f32 %v2108, %v2271
        %v2537 = vadd.f32 %v2109, %v2275
        %v2538 = vadd.f32 %v2110, %v2279
        %v2539 = vadd.f32 %v2111, %v2283
        %v2540 = vlaneseq
        %v2541 = vand.u32 %v2540, 127
        %v2542 = vadd.s32 %v2541, 128
        %v2543 = vadd.s32 %v2541, 256
        %v2544 = vadd.s32 %v2541, 384
        %v2545 = vadd.s32 %v2541, 512
        %v2546 = vadd.s32 %v2541, 640
        %v2547 = vadd.s32 %v2541, 768
        %v2548 = vadd.s32 %v2541, 896
        %v2549 = vadd.s32 %v2541, 1024
        %v2550 = vadd.s32 %v2541, 1152
        %v2551 = vadd.s32 %v2541, 1280
        %v2552 = vadd.s32 %v2541, 1408
        %v2553 = vadd.s32 %v2541, 1536
        %v2554 = vadd.s32 %v2541, 1664
        %v2555 = vadd.s32 %v2541, 1792
        %v2556 = vadd.s32 %v2541, 1920
        %s2557 = smul.u32 %s24, 2048
        %v2558 = vstv %s2557
        %v2559 = vadd.s32 %v2541, %v2558
        %v2560 = vadd.s32 %v2542, %v2558
        %v2561 = vadd.s32 %v2543, %v2558
        %v2562 = vadd.s32 %v2544, %v2558
        %v2563 = vadd.s32 %v2545, %v2558
        %v2564 = vadd.s32 %v2546, %v2558
        %v2565 = vadd.s32 %v2547, %v2558
        %v2566 = vadd.s32 %v2548, %v2558
        %v2567 = vadd.s32 %v2549, %v2558
        %v2568 = vadd.s32 %v2550, %v2558
        %v2569 = vadd.s32 %v2551, %v2558
        %v2570 = vadd.s32 %v2552, %v2558
        %v2571 = vadd.s32 %v2553, %v2558
        %v2572 = vadd.s32 %v2554, %v2558
        %v2573 = vadd.s32 %v2555, %v2558
        %v2574 = vadd.s32 %v2556, %v2558
        %vm2575 = vcmp.gt.f32.partialorder %v2284, 0.01
        %vm2576 = vcmp.gt.f32.partialorder %v2285, 0.01
        %vm2577 = vcmp.gt.f32.partialorder %v2286, 0.01
        %vm2578 = vcmp.gt.f32.partialorder %v2287, 0.01
        %vm2579 = vcmp.gt.f32.partialorder %v2288, 0.01
        %vm2580 = vcmp.gt.f32.partialorder %v2289, 0.01
        %vm2581 = vcmp.gt.f32.partialorder %v2290, 0.01
        %vm2582 = vcmp.gt.f32.partialorder %v2291, 0.01
        %vm2583 = vcmp.gt.f32.partialorder %v2292, 0.01
        %vm2584 = vcmp.gt.f32.partialorder %v2293, 0.01
        %vm2585 = vcmp.gt.f32.partialorder %v2294, 0.01
        %vm2586 = vcmp.gt.f32.partialorder %v2295, 0.01
        %vm2587 = vcmp.gt.f32.partialorder %v2296, 0.01
        %vm2588 = vcmp.gt.f32.partialorder %v2297, 0.01
        %vm2589 = vcmp.gt.f32.partialorder %v2298, 0.01
        %vm2590 = vcmp.gt.f32.partialorder %v2299, 0.01
        %vm2591 = vcmp.gt.f32.partialorder %v2300, 0.01
        %vm2592 = vcmp.gt.f32.partialorder %v2301, 0.01
        %vm2593 = vcmp.gt.f32.partialorder %v2302, 0.01
        %vm2594 = vcmp.gt.f32.partialorder %v2303, 0.01
        %vm2595 = vcmp.gt.f32.partialorder %v2304, 0.01
        %vm2596 = vcmp.gt.f32.partialorder %v2305, 0.01
        %vm2597 = vcmp.gt.f32.partialorder %v2306, 0.01
        %vm2598 = vcmp.gt.f32.partialorder %v2307, 0.01
        %vm2599 = vcmp.gt.f32.partialorder %v2308, 0.01
        %vm2600 = vcmp.gt.f32.partialorder %v2309, 0.01
        %vm2601 = vcmp.gt.f32.partialorder %v2310, 0.01
        %vm2602 = vcmp.gt.f32.partialorder %v2311, 0.01
        %vm2603 = vcmp.gt.f32.partialorder %v2312, 0.01
        %vm2604 = vcmp.gt.f32.partialorder %v2313, 0.01
        %vm2605 = vcmp.gt.f32.partialorder %v2314, 0.01
        %vm2606 = vcmp.gt.f32.partialorder %v2315, 0.01
        %vm2607 = vcmp.gt.f32.partialorder %v2316, 0.01
        %vm2608 = vcmp.gt.f32.partialorder %v2317, 0.01
        %vm2609 = vcmp.gt.f32.partialorder %v2318, 0.01
        %vm2610 = vcmp.gt.f32.partialorder %v2319, 0.01
        %vm2611 = vcmp.gt.f32.partialorder %v2320, 0.01
        %vm2612 = vcmp.gt.f32.partialorder %v2321, 0.01
        %vm2613 = vcmp.gt.f32.partialorder %v2322, 0.01
        %vm2614 = vcmp.gt.f32.partialorder %v2323, 0.01
        %vm2615 = vcmp.gt.f32.partialorder %v2324, 0.01
        %vm2616 = vcmp.gt.f32.partialorder %v2325, 0.01
        %vm2617 = vcmp.gt.f32.partialorder %v2326, 0.01
        %vm2618 = vcmp.gt.f32.partialorder %v2327, 0.01
        %vm2619 = vcmp.gt.f32.partialorder %v2328, 0.01
        %vm2620 = vcmp.gt.f32.partialorder %v2329, 0.01
        %vm2621 = vcmp.gt.f32.partialorder %v2330, 0.01
        %vm2622 = vcmp.gt.f32.partialorder %v2331, 0.01
        %vm2623 = vcmp.gt.f32.partialorder %v2332, 0.01
        %vm2624 = vcmp.gt.f32.partialorder %v2333, 0.01
        %vm2625 = vcmp.gt.f32.partialorder %v2334, 0.01
        %vm2626 = vcmp.gt.f32.partialorder %v2335, 0.01
        %vm2627 = vcmp.gt.f32.partialorder %v2336, 0.01
        %vm2628 = vcmp.gt.f32.partialorder %v2337, 0.01
        %vm2629 = vcmp.gt.f32.partialorder %v2338, 0.01
        %vm2630 = vcmp.gt.f32.partialorder %v2339, 0.01
        %vm2631 = vcmp.gt.f32.partialorder %v2340, 0.01
        %vm2632 = vcmp.gt.f32.partialorder %v2341, 0.01
        %vm2633 = vcmp.gt.f32.partialorder %v2342, 0.01
        %vm2634 = vcmp.gt.f32.partialorder %v2343, 0.01
        %vm2635 = vcmp.gt.f32.partialorder %v2344, 0.01
        %vm2636 = vcmp.gt.f32.partialorder %v2345, 0.01
        %vm2637 = vcmp.gt.f32.partialorder %v2346, 0.01
        %vm2638 = vcmp.gt.f32.partialorder %v2347, 0.01
        %vm2639 = vcmp.gt.f32.partialorder %v2348, 0.01
        %vm2640 = vcmp.gt.f32.partialorder %v2349, 0.01
        %vm2641 = vcmp.gt.f32.partialorder %v2350, 0.01
        %vm2642 = vcmp.gt.f32.partialorder %v2351, 0.01
        %vm2643 = vcmp.gt.f32.partialorder %v2352, 0.01
        %vm2644 = vcmp.gt.f32.partialorder %v2353, 0.01
        %vm2645 = vcmp.gt.f32.partialorder %v2354, 0.01
        %vm2646 = vcmp.gt.f32.partialorder %v2355, 0.01
        %vm2647 = vcmp.gt.f32.partialorder %v2356, 0.01
        %vm2648 = vcmp.gt.f32.partialorder %v2357, 0.01
        %vm2649 = vcmp.gt.f32.partialorder %v2358, 0.01
        %vm2650 = vcmp.gt.f32.partialorder %v2359, 0.01
        %vm2651 = vcmp.gt.f32.partialorder %v2360, 0.01
        %vm2652 = vcmp.gt.f32.partialorder %v2361, 0.01
        %vm2653 = vcmp.gt.f32.partialorder %v2362, 0.01
        %vm2654 = vcmp.gt.f32.partialorder %v2363, 0.01
        %vm2655 = vcmp.gt.f32.partialorder %v2364, 0.01
        %vm2656 = vcmp.gt.f32.partialorder %v2365, 0.01
        %vm2657 = vcmp.gt.f32.partialorder %v2366, 0.01
        %vm2658 = vcmp.gt.f32.partialorder %v2367, 0.01
        %vm2659 = vcmp.gt.f32.partialorder %v2368, 0.01
        %vm2660 = vcmp.gt.f32.partialorder %v2369, 0.01
        %vm2661 = vcmp.gt.f32.partialorder %v2370, 0.01
        %vm2662 = vcmp.gt.f32.partialorder %v2371, 0.01
        %vm2663 = vcmp.gt.f32.partialorder %v2372, 0.01
        %vm2664 = vcmp.gt.f32.partialorder %v2373, 0.01
        %vm2665 = vcmp.gt.f32.partialorder %v2374, 0.01
        %vm2666 = vcmp.gt.f32.partialorder %v2375, 0.01
        %vm2667 = vcmp.gt.f32.partialorder %v2376, 0.01
        %vm2668 = vcmp.gt.f32.partialorder %v2377, 0.01
        %vm2669 = vcmp.gt.f32.partialorder %v2378, 0.01
        %vm2670 = vcmp.gt.f32.partialorder %v2379, 0.01
        %vm2671 = vcmp.gt.f32.partialorder %v2380, 0.01
        %vm2672 = vcmp.gt.f32.partialorder %v2381, 0.01
        %vm2673 = vcmp.gt.f32.partialorder %v2382, 0.01
        %vm2674 = vcmp.gt.f32.partialorder %v2383, 0.01
        %vm2675 = vcmp.gt.f32.partialorder %v2384, 0.01
        %vm2676 = vcmp.gt.f32.partialorder %v2385, 0.01
        %vm2677 = vcmp.gt.f32.partialorder %v2386, 0.01
        %vm2678 = vcmp.gt.f32.partialorder %v2387, 0.01
        %vm2679 = vcmp.gt.f32.partialorder %v2388, 0.01
        %vm2680 = vcmp.gt.f32.partialorder %v2389, 0.01
        %vm2681 = vcmp.gt.f32.partialorder %v2390, 0.01
        %vm2682 = vcmp.gt.f32.partialorder %v2391, 0.01
        %vm2683 = vcmp.gt.f32.partialorder %v2392, 0.01
        %vm2684 = vcmp.gt.f32.partialorder %v2393, 0.01
        %vm2685 = vcmp.gt.f32.partialorder %v2394, 0.01
        %vm2686 = vcmp.gt.f32.partialorder %v2395, 0.01
        %vm2687 = vcmp.gt.f32.partialorder %v2396, 0.01
        %vm2688 = vcmp.gt.f32.partialorder %v2397, 0.01
        %vm2689 = vcmp.gt.f32.partialorder %v2398, 0.01
        %vm2690 = vcmp.gt.f32.partialorder %v2399, 0.01
        %vm2691 = vcmp.gt.f32.partialorder %v2400, 0.01
        %vm2692 = vcmp.gt.f32.partialorder %v2401, 0.01
        %vm2693 = vcmp.gt.f32.partialorder %v2402, 0.01
        %vm2694 = vcmp.gt.f32.partialorder %v2403, 0.01
        %vm2695 = vcmp.gt.f32.partialorder %v2404, 0.01
        %vm2696 = vcmp.gt.f32.partialorder %v2405, 0.01
        %vm2697 = vcmp.gt.f32.partialorder %v2406, 0.01
        %vm2698 = vcmp.gt.f32.partialorder %v2407, 0.01
        %vm2699 = vcmp.gt.f32.partialorder %v2408, 0.01
        %vm2700 = vcmp.gt.f32.partialorder %v2409, 0.01
        %vm2701 = vcmp.gt.f32.partialorder %v2410, 0.01
        %vm2702 = vcmp.gt.f32.partialorder %v2411, 0.01
        %vm2703 = vcmp.gt.f32.partialorder %v2412, 0.01
        %vm2704 = vcmp.gt.f32.partialorder %v2413, 0.01
        %vm2705 = vcmp.gt.f32.partialorder %v2414, 0.01
        %vm2706 = vcmp.gt.f32.partialorder %v2415, 0.01
        %vm2707 = vcmp.gt.f32.partialorder %v2416, 0.01
        %vm2708 = vcmp.gt.f32.partialorder %v2417, 0.01
        %vm2709 = vcmp.gt.f32.partialorder %v2418, 0.01
        %vm2710 = vcmp.gt.f32.partialorder %v2419, 0.01
        %vm2711 = vcmp.gt.f32.partialorder %v2420, 0.01
        %vm2712 = vcmp.gt.f32.partialorder %v2421, 0.01
        %vm2713 = vcmp.gt.f32.partialorder %v2422, 0.01
        %vm2714 = vcmp.gt.f32.partialorder %v2423, 0.01
        %vm2715 = vcmp.gt.f32.partialorder %v2424, 0.01
        %vm2716 = vcmp.gt.f32.partialorder %v2425, 0.01
        %vm2717 = vcmp.gt.f32.partialorder %v2426, 0.01
        %vm2718 = vcmp.gt.f32.partialorder %v2427, 0.01
        %vm2719 = vcmp.gt.f32.partialorder %v2428, 0.01
        %vm2720 = vcmp.gt.f32.partialorder %v2429, 0.01
        %vm2721 = vcmp.gt.f32.partialorder %v2430, 0.01
        %vm2722 = vcmp.gt.f32.partialorder %v2431, 0.01
        %vm2723 = vcmp.gt.f32.partialorder %v2432, 0.01
        %vm2724 = vcmp.gt.f32.partialorder %v2433, 0.01
        %vm2725 = vcmp.gt.f32.partialorder %v2434, 0.01
        %vm2726 = vcmp.gt.f32.partialorder %v2435, 0.01
        %vm2727 = vcmp.gt.f32.partialorder %v2436, 0.01
        %vm2728 = vcmp.gt.f32.partialorder %v2437, 0.01
        %vm2729 = vcmp.gt.f32.partialorder %v2438, 0.01
        %vm2730 = vcmp.gt.f32.partialorder %v2439, 0.01
        %vm2731 = vcmp.gt.f32.partialorder %v2440, 0.01
        %vm2732 = vcmp.gt.f32.partialorder %v2441, 0.01
        %vm2733 = vcmp.gt.f32.partialorder %v2442, 0.01
        %vm2734 = vcmp.gt.f32.partialorder %v2443, 0.01
        %vm2735 = vcmp.gt.f32.partialorder %v2444, 0.01
        %vm2736 = vcmp.gt.f32.partialorder %v2445, 0.01
        %vm2737 = vcmp.gt.f32.partialorder %v2446, 0.01
        %vm2738 = vcmp.gt.f32.partialorder %v2447, 0.01
        %vm2739 = vcmp.gt.f32.partialorder %v2448, 0.01
        %vm2740 = vcmp.gt.f32.partialorder %v2449, 0.01
        %vm2741 = vcmp.gt.f32.partialorder %v2450, 0.01
        %vm2742 = vcmp.gt.f32.partialorder %v2451, 0.01
        %vm2743 = vcmp.gt.f32.partialorder %v2452, 0.01
        %vm2744 = vcmp.gt.f32.partialorder %v2453, 0.01
        %vm2745 = vcmp.gt.f32.partialorder %v2454, 0.01
        %vm2746 = vcmp.gt.f32.partialorder %v2455, 0.01
        %vm2747 = vcmp.gt.f32.partialorder %v2456, 0.01
        %vm2748 = vcmp.gt.f32.partialorder %v2457, 0.01
        %vm2749 = vcmp.gt.f32.partialorder %v2458, 0.01
        %vm2750 = vcmp.gt.f32.partialorder %v2459, 0.01
        %vm2751 = vcmp.gt.f32.partialorder %v2460, 0.01
        %vm2752 = vcmp.gt.f32.partialorder %v2461, 0.01
        %vm2753 = vcmp.gt.f32.partialorder %v2462, 0.01
        %vm2754 = vcmp.gt.f32.partialorder %v2463, 0.01
        %vm2755 = vcmp.gt.f32.partialorder %v2464, 0.01
        %vm2756 = vcmp.gt.f32.partialorder %v2465, 0.01
        %vm2757 = vcmp.gt.f32.partialorder %v2466, 0.01
        %vm2758 = vcmp.gt.f32.partialorder %v2467, 0.01
        %vm2759 = vcmp.gt.f32.partialorder %v2468, 0.01
        %vm2760 = vcmp.gt.f32.partialorder %v2469, 0.01
        %vm2761 = vcmp.gt.f32.partialorder %v2470, 0.01
        %vm2762 = vcmp.gt.f32.partialorder %v2471, 0.01
        %vm2763 = vcmp.gt.f32.partialorder %v2472, 0.01
        %vm2764 = vcmp.gt.f32.partialorder %v2473, 0.01
        %vm2765 = vcmp.gt.f32.partialorder %v2474, 0.01
        %vm2766 = vcmp.gt.f32.partialorder %v2475, 0.01
        %vm2767 = vcmp.gt.f32.partialorder %v2476, 0.01
        %vm2768 = vcmp.gt.f32.partialorder %v2477, 0.01
        %vm2769 = vcmp.gt.f32.partialorder %v2478, 0.01
        %vm2770 = vcmp.gt.f32.partialorder %v2479, 0.01
        %vm2771 = vcmp.gt.f32.partialorder %v2480, 0.01
        %vm2772 = vcmp.gt.f32.partialorder %v2481, 0.01
        %vm2773 = vcmp.gt.f32.partialorder %v2482, 0.01
        %vm2774 = vcmp.gt.f32.partialorder %v2483, 0.01
        %vm2775 = vcmp.gt.f32.partialorder %v2484, 0.01
        %vm2776 = vcmp.gt.f32.partialorder %v2485, 0.01
        %vm2777 = vcmp.gt.f32.partialorder %v2486, 0.01
        %vm2778 = vcmp.gt.f32.partialorder %v2487, 0.01
        %vm2779 = vcmp.gt.f32.partialorder %v2488, 0.01
        %vm2780 = vcmp.gt.f32.partialorder %v2489, 0.01
        %vm2781 = vcmp.gt.f32.partialorder %v2490, 0.01
        %vm2782 = vcmp.gt.f32.partialorder %v2491, 0.01
        %vm2783 = vcmp.gt.f32.partialorder %v2492, 0.01
        %vm2784 = vcmp.gt.f32.partialorder %v2493, 0.01
        %vm2785 = vcmp.gt.f32.partialorder %v2494, 0.01
        %vm2786 = vcmp.gt.f32.partialorder %v2495, 0.01
        %vm2787 = vcmp.gt.f32.partialorder %v2496, 0.01
        %vm2788 = vcmp.gt.f32.partialorder %v2497, 0.01
        %vm2789 = vcmp.gt.f32.partialorder %v2498, 0.01
        %vm2790 = vcmp.gt.f32.partialorder %v2499, 0.01
        %vm2791 = vcmp.gt.f32.partialorder %v2500, 0.01
        %vm2792 = vcmp.gt.f32.partialorder %v2501, 0.01
        %vm2793 = vcmp.gt.f32.partialorder %v2502, 0.01
        %vm2794 = vcmp.gt.f32.partialorder %v2503, 0.01
        %vm2795 = vcmp.gt.f32.partialorder %v2504, 0.01
        %vm2796 = vcmp.gt.f32.partialorder %v2505, 0.01
        %vm2797 = vcmp.gt.f32.partialorder %v2506, 0.01
        %vm2798 = vcmp.gt.f32.partialorder %v2507, 0.01
        %vm2799 = vcmp.gt.f32.partialorder %v2508, 0.01
        %vm2800 = vcmp.gt.f32.partialorder %v2509, 0.01
        %vm2801 = vcmp.gt.f32.partialorder %v2510, 0.01
        %vm2802 = vcmp.gt.f32.partialorder %v2511, 0.01
        %vm2803 = vcmp.gt.f32.partialorder %v2512, 0.01
        %vm2804 = vcmp.gt.f32.partialorder %v2513, 0.01
        %vm2805 = vcmp.gt.f32.partialorder %v2514, 0.01
        %vm2806 = vcmp.gt.f32.partialorder %v2515, 0.01
        %vm2807 = vcmp.gt.f32.partialorder %v2516, 0.01
        %vm2808 = vcmp.gt.f32.partialorder %v2517, 0.01
        %vm2809 = vcmp.gt.f32.partialorder %v2518, 0.01
        %vm2810 = vcmp.gt.f32.partialorder %v2519, 0.01
        %vm2811 = vcmp.gt.f32.partialorder %v2520, 0.01
        %vm2812 = vcmp.gt.f32.partialorder %v2521, 0.01
        %vm2813 = vcmp.gt.f32.partialorder %v2522, 0.01
        %vm2814 = vcmp.gt.f32.partialorder %v2523, 0.01
        %vm2815 = vcmp.gt.f32.partialorder %v2524, 0.01
        %vm2816 = vcmp.gt.f32.partialorder %v2525, 0.01
        %vm2817 = vcmp.gt.f32.partialorder %v2526, 0.01
        %vm2818 = vcmp.gt.f32.partialorder %v2527, 0.01
        %vm2819 = vcmp.gt.f32.partialorder %v2528, 0.01
        %vm2820 = vcmp.gt.f32.partialorder %v2529, 0.01
        %vm2821 = vcmp.gt.f32.partialorder %v2530, 0.01
        %vm2822 = vcmp.gt.f32.partialorder %v2531, 0.01
        %vm2823 = vcmp.gt.f32.partialorder %v2532, 0.01
        %vm2824 = vcmp.gt.f32.partialorder %v2533, 0.01
        %vm2825 = vcmp.gt.f32.partialorder %v2534, 0.01
        %vm2826 = vcmp.gt.f32.partialorder %v2535, 0.01
        %vm2827 = vcmp.gt.f32.partialorder %v2536, 0.01
        %vm2828 = vcmp.gt.f32.partialorder %v2537, 0.01
        %vm2829 = vcmp.gt.f32.partialorder %v2538, 0.01
        %vm2830 = vcmp.gt.f32.partialorder %v2539, 0.01
        %v2831 = vsel %vm2575, 4096, %v2559
        %v2832 = vsel %vm2576, 4096, %v2560
        %v2833 = vsel %vm2577, 4096, %v2561
        %v2834 = vsel %vm2578, 4096, %v2562
        %v2835 = vsel %vm2579, 4096, %v2563
        %v2836 = vsel %vm2580, 4096, %v2564
        %v2837 = vsel %vm2581, 4096, %v2565
        %v2838 = vsel %vm2582, 4096, %v2566
        %v2839 = vsel %vm2583, 4096, %v2567
        %v2840 = vsel %vm2584, 4096, %v2568
        %v2841 = vsel %vm2585, 4096, %v2569
        %v2842 = vsel %vm2586, 4096, %v2570
        %v2843 = vsel %vm2587, 4096, %v2571
        %v2844 = vsel %vm2588, 4096, %v2572
        %v2845 = vsel %vm2589, 4096, %v2573
        %v2846 = vsel %vm2590, 4096, %v2574
        %v2847 = vsel %vm2591, 4096, %v2559
        %v2848 = vsel %vm2592, 4096, %v2560
        %v2849 = vsel %vm2593, 4096, %v2561
        %v2850 = vsel %vm2594, 4096, %v2562
        %v2851 = vsel %vm2595, 4096, %v2563
        %v2852 = vsel %vm2596, 4096, %v2564
        %v2853 = vsel %vm2597, 4096, %v2565
        %v2854 = vsel %vm2598, 4096, %v2566
        %v2855 = vsel %vm2599, 4096, %v2567
        %v2856 = vsel %vm2600, 4096, %v2568
        %v2857 = vsel %vm2601, 4096, %v2569
        %v2858 = vsel %vm2602, 4096, %v2570
        %v2859 = vsel %vm2603, 4096, %v2571
        %v2860 = vsel %vm2604, 4096, %v2572
        %v2861 = vsel %vm2605, 4096, %v2573
        %v2862 = vsel %vm2606, 4096, %v2574
        %v2863 = vsel %vm2607, 4096, %v2559
        %v2864 = vsel %vm2608, 4096, %v2560
        %v2865 = vsel %vm2609, 4096, %v2561
        %v2866 = vsel %vm2610, 4096, %v2562
        %v2867 = vsel %vm2611, 4096, %v2563
        %v2868 = vsel %vm2612, 4096, %v2564
        %v2869 = vsel %vm2613, 4096, %v2565
        %v2870 = vsel %vm2614, 4096, %v2566
        %v2871 = vsel %vm2615, 4096, %v2567
        %v2872 = vsel %vm2616, 4096, %v2568
        %v2873 = vsel %vm2617, 4096, %v2569
        %v2874 = vsel %vm2618, 4096, %v2570
        %v2875 = vsel %vm2619, 4096, %v2571
        %v2876 = vsel %vm2620, 4096, %v2572
        %v2877 = vsel %vm2621, 4096, %v2573
        %v2878 = vsel %vm2622, 4096, %v2574
        %v2879 = vsel %vm2623, 4096, %v2559
        %v2880 = vsel %vm2624, 4096, %v2560
        %v2881 = vsel %vm2625, 4096, %v2561
        %v2882 = vsel %vm2626, 4096, %v2562
        %v2883 = vsel %vm2627, 4096, %v2563
        %v2884 = vsel %vm2628, 4096, %v2564
        %v2885 = vsel %vm2629, 4096, %v2565
        %v2886 = vsel %vm2630, 4096, %v2566
        %v2887 = vsel %vm2631, 4096, %v2567
        %v2888 = vsel %vm2632, 4096, %v2568
        %v2889 = vsel %vm2633, 4096, %v2569
        %v2890 = vsel %vm2634, 4096, %v2570
        %v2891 = vsel %vm2635, 4096, %v2571
        %v2892 = vsel %vm2636, 4096, %v2572
        %v2893 = vsel %vm2637, 4096, %v2573
        %v2894 = vsel %vm2638, 4096, %v2574
        %v2895 = vsel %vm2639, 4096, %v2559
        %v2896 = vsel %vm2640, 4096, %v2560
        %v2897 = vsel %vm2641, 4096, %v2561
        %v2898 = vsel %vm2642, 4096, %v2562
        %v2899 = vsel %vm2643, 4096, %v2563
        %v2900 = vsel %vm2644, 4096, %v2564
        %v2901 = vsel %vm2645, 4096, %v2565
        %v2902 = vsel %vm2646, 4096, %v2566
        %v2903 = vsel %vm2647, 4096, %v2567
        %v2904 = vsel %vm2648, 4096, %v2568
        %v2905 = vsel %vm2649, 4096, %v2569
        %v2906 = vsel %vm2650, 4096, %v2570
        %v2907 = vsel %vm2651, 4096, %v2571
        %v2908 = vsel %vm2652, 4096, %v2572
        %v2909 = vsel %vm2653, 4096, %v2573
        %v2910 = vsel %vm2654, 4096, %v2574
        %v2911 = vsel %vm2655, 4096, %v2559
        %v2912 = vsel %vm2656, 4096, %v2560
        %v2913 = vsel %vm2657, 4096, %v2561
        %v2914 = vsel %vm2658, 4096, %v2562
        %v2915 = vsel %vm2659, 4096, %v2563
        %v2916 = vsel %vm2660, 4096, %v2564
        %v2917 = vsel %vm2661, 4096, %v2565
        %v2918 = vsel %vm2662, 4096, %v2566
        %v2919 = vsel %vm2663, 4096, %v2567
        %v2920 = vsel %vm2664, 4096, %v2568
        %v2921 = vsel %vm2665, 4096, %v2569
        %v2922 = vsel %vm2666, 4096, %v2570
        %v2923 = vsel %vm2667, 4096, %v2571
        %v2924 = vsel %vm2668, 4096, %v2572
        %v2925 = vsel %vm2669, 4096, %v2573
        %v2926 = vsel %vm2670, 4096, %v2574
        %v2927 = vsel %vm2671, 4096, %v2559
        %v2928 = vsel %vm2672, 4096, %v2560
        %v2929 = vsel %vm2673, 4096, %v2561
        %v2930 = vsel %vm2674, 4096, %v2562
        %v2931 = vsel %vm2675, 4096, %v2563
        %v2932 = vsel %vm2676, 4096, %v2564
        %v2933 = vsel %vm2677, 4096, %v2565
        %v2934 = vsel %vm2678, 4096, %v2566
        %v2935 = vsel %vm2679, 4096, %v2567
        %v2936 = vsel %vm2680, 4096, %v2568
        %v2937 = vsel %vm2681, 4096, %v2569
        %v2938 = vsel %vm2682, 4096, %v2570
        %v2939 = vsel %vm2683, 4096, %v2571
        %v2940 = vsel %vm2684, 4096, %v2572
        %v2941 = vsel %vm2685, 4096, %v2573
        %v2942 = vsel %vm2686, 4096, %v2574
        %v2943 = vsel %vm2687, 4096, %v2559
        %v2944 = vsel %vm2688, 4096, %v2560
        %v2945 = vsel %vm2689, 4096, %v2561
        %v2946 = vsel %vm2690, 4096, %v2562
        %v2947 = vsel %vm2691, 4096, %v2563
        %v2948 = vsel %vm2692, 4096, %v2564
        %v2949 = vsel %vm2693, 4096, %v2565
        %v2950 = vsel %vm2694, 4096, %v2566
        %v2951 = vsel %vm2695, 4096, %v2567
        %v2952 = vsel %vm2696, 4096, %v2568
        %v2953 = vsel %vm2697, 4096, %v2569
        %v2954 = vsel %vm2698, 4096, %v2570
        %v2955 = vsel %vm2699, 4096, %v2571
        %v2956 = vsel %vm2700, 4096, %v2572
        %v2957 = vsel %vm2701, 4096, %v2573
        %v2958 = vsel %vm2702, 4096, %v2574
        %v2959 = vsel %vm2703, 4096, %v2559
        %v2960 = vsel %vm2704, 4096, %v2560
        %v2961 = vsel %vm2705, 4096, %v2561
        %v2962 = vsel %vm2706, 4096, %v2562
        %v2963 = vsel %vm2707, 4096, %v2563
        %v2964 = vsel %vm2708, 4096, %v2564
        %v2965 = vsel %vm2709, 4096, %v2565
        %v2966 = vsel %vm2710, 4096, %v2566
        %v2967 = vsel %vm2711, 4096, %v2567
        %v2968 = vsel %vm2712, 4096, %v2568
        %v2969 = vsel %vm2713, 4096, %v2569
        %v2970 = vsel %vm2714, 4096, %v2570
        %v2971 = vsel %vm2715, 4096, %v2571
        %v2972 = vsel %vm2716, 4096, %v2572
        %v2973 = vsel %vm2717, 4096, %v2573
        %v2974 = vsel %vm2718, 4096, %v2574
        %v2975 = vsel %vm2719, 4096, %v2559
        %v2976 = vsel %vm2720, 4096, %v2560
        %v2977 = vsel %vm2721, 4096, %v2561
        %v2978 = vsel %vm2722, 4096, %v2562
        %v2979 = vsel %vm2723, 4096, %v2563
        %v2980 = vsel %vm2724, 4096, %v2564
        %v2981 = vsel %vm2725, 4096, %v2565
        %v2982 = vsel %vm2726, 4096, %v2566
        %v2983 = vsel %vm2727, 4096, %v2567
        %v2984 = vsel %vm2728, 4096, %v2568
        %v2985 = vsel %vm2729, 4096, %v2569
        %v2986 = vsel %vm2730, 4096, %v2570
        %v2987 = vsel %vm2731, 4096, %v2571
        %v2988 = vsel %vm2732, 4096, %v2572
        %v2989 = vsel %vm2733, 4096, %v2573
        %v2990 = vsel %vm2734, 4096, %v2574
        %v2991 = vsel %vm2735, 4096, %v2559
        %v2992 = vsel %vm2736, 4096, %v2560
        %v2993 = vsel %vm2737, 4096, %v2561
        %v2994 = vsel %vm2738, 4096, %v2562
        %v2995 = vsel %vm2739, 4096, %v2563
        %v2996 = vsel %vm2740, 4096, %v2564
        %v2997 = vsel %vm2741, 4096, %v2565
        %v2998 = vsel %vm2742, 4096, %v2566
        %v2999 = vsel %vm2743, 4096, %v2567
        %v3000 = vsel %vm2744, 4096, %v2568
        %v3001 = vsel %vm2745, 4096, %v2569
        %v3002 = vsel %vm2746, 4096, %v2570
        %v3003 = vsel %vm2747, 4096, %v2571
        %v3004 = vsel %vm2748, 4096, %v2572
        %v3005 = vsel %vm2749, 4096, %v2573
        %v3006 = vsel %vm2750, 4096, %v2574
        %v3007 = vsel %vm2751, 4096, %v2559
        %v3008 = vsel %vm2752, 4096, %v2560
        %v3009 = vsel %vm2753, 4096, %v2561
        %v3010 = vsel %vm2754, 4096, %v2562
        %v3011 = vsel %vm2755, 4096, %v2563
        %v3012 = vsel %vm2756, 4096, %v2564
        %v3013 = vsel %vm2757, 4096, %v2565
        %v3014 = vsel %vm2758, 4096, %v2566
        %v3015 = vsel %vm2759, 4096, %v2567
        %v3016 = vsel %vm2760, 4096, %v2568
        %v3017 = vsel %vm2761, 4096, %v2569
        %v3018 = vsel %vm2762, 4096, %v2570
        %v3019 = vsel %vm2763, 4096, %v2571
        %v3020 = vsel %vm2764, 4096, %v2572
        %v3021 = vsel %vm2765, 4096, %v2573
        %v3022 = vsel %vm2766, 4096, %v2574
        %v3023 = vsel %vm2767, 4096, %v2559
        %v3024 = vsel %vm2768, 4096, %v2560
        %v3025 = vsel %vm2769, 4096, %v2561
        %v3026 = vsel %vm2770, 4096, %v2562
        %v3027 = vsel %vm2771, 4096, %v2563
        %v3028 = vsel %vm2772, 4096, %v2564
        %v3029 = vsel %vm2773, 4096, %v2565
        %v3030 = vsel %vm2774, 4096, %v2566
        %v3031 = vsel %vm2775, 4096, %v2567
        %v3032 = vsel %vm2776, 4096, %v2568
        %v3033 = vsel %vm2777, 4096, %v2569
        %v3034 = vsel %vm2778, 4096, %v2570
        %v3035 = vsel %vm2779, 4096, %v2571
        %v3036 = vsel %vm2780, 4096, %v2572
        %v3037 = vsel %vm2781, 4096, %v2573
        %v3038 = vsel %vm2782, 4096, %v2574
        %v3039 = vsel %vm2783, 4096, %v2559
        %v3040 = vsel %vm2784, 4096, %v2560
        %v3041 = vsel %vm2785, 4096, %v2561
        %v3042 = vsel %vm2786, 4096, %v2562
        %v3043 = vsel %vm2787, 4096, %v2563
        %v3044 = vsel %vm2788, 4096, %v2564
        %v3045 = vsel %vm2789, 4096, %v2565
        %v3046 = vsel %vm2790, 4096, %v2566
        %v3047 = vsel %vm2791, 4096, %v2567
        %v3048 = vsel %vm2792, 4096, %v2568
        %v3049 = vsel %vm2793, 4096, %v2569
        %v3050 = vsel %vm2794, 4096, %v2570
        %v3051 = vsel %vm2795, 4096, %v2571
        %v3052 = vsel %vm2796, 4096, %v2572
        %v3053 = vsel %vm2797, 4096, %v2573
        %v3054 = vsel %vm2798, 4096, %v2574
        %v3055 = vsel %vm2799, 4096, %v2559
        %v3056 = vsel %vm2800, 4096, %v2560
        %v3057 = vsel %vm2801, 4096, %v2561
        %v3058 = vsel %vm2802, 4096, %v2562
        %v3059 = vsel %vm2803, 4096, %v2563
        %v3060 = vsel %vm2804, 4096, %v2564
        %v3061 = vsel %vm2805, 4096, %v2565
        %v3062 = vsel %vm2806, 4096, %v2566
        %v3063 = vsel %vm2807, 4096, %v2567
        %v3064 = vsel %vm2808, 4096, %v2568
        %v3065 = vsel %vm2809, 4096, %v2569
        %v3066 = vsel %vm2810, 4096, %v2570
        %v3067 = vsel %vm2811, 4096, %v2571
        %v3068 = vsel %vm2812, 4096, %v2572
        %v3069 = vsel %vm2813, 4096, %v2573
        %v3070 = vsel %vm2814, 4096, %v2574
        %v3071 = vsel %vm2815, 4096, %v2559
        %v3072 = vsel %vm2816, 4096, %v2560
        %v3073 = vsel %vm2817, 4096, %v2561
        %v3074 = vsel %vm2818, 4096, %v2562
        %v3075 = vsel %vm2819, 4096, %v2563
        %v3076 = vsel %vm2820, 4096, %v2564
        %v3077 = vsel %vm2821, 4096, %v2565
        %v3078 = vsel %vm2822, 4096, %v2566
        %v3079 = vsel %vm2823, 4096, %v2567
        %v3080 = vsel %vm2824, 4096, %v2568
        %v3081 = vsel %vm2825, 4096, %v2569
        %v3082 = vsel %vm2826, 4096, %v2570
        %v3083 = vsel %vm2827, 4096, %v2571
        %v3084 = vsel %vm2828, 4096, %v2572
        %v3085 = vsel %vm2829, 4096, %v2573
        %v3086 = vsel %vm2830, 4096, %v2574
        %3087 = vst [vmem:[%s192] sm:$0xff] %v2831
        %3088 = vst [vmem:[%s192 + $0x8] sm:$0xff] %v2832
        %3089 = vst [vmem:[%s192 + $0x10] sm:$0xff] %v2833
        %3090 = vst [vmem:[%s192 + $0x18] sm:$0xff] %v2834
        %3091 = vst [vmem:[%s192 + $0x20] sm:$0xff] %v2835
        %3092 = vst [vmem:[%s192 + $0x28] sm:$0xff] %v2836
        %3093 = vst [vmem:[%s192 + $0x30] sm:$0xff] %v2837
        %3094 = vst [vmem:[%s192 + $0x38] sm:$0xff] %v2838
        %3095 = vst [vmem:[%s192 + $0x40] sm:$0xff] %v2839
        %3096 = vst [vmem:[%s192 + $0x48] sm:$0xff] %v2840
        %3097 = vst [vmem:[%s192 + $0x50] sm:$0xff] %v2841
        %3098 = vst [vmem:[%s192 + $0x58] sm:$0xff] %v2842
        %3099 = vst [vmem:[%s192 + $0x60] sm:$0xff] %v2843
        %3100 = vst [vmem:[%s192 + $0x68] sm:$0xff] %v2844
        %3101 = vst [vmem:[%s192 + $0x70] sm:$0xff] %v2845
        %3102 = vst [vmem:[%s192 + $0x78] sm:$0xff] %v2846
        %3103 = vst [vmem:[%s192 + $0x80] sm:$0xff] %v2847
        %3104 = vst [vmem:[%s192 + $0x88] sm:$0xff] %v2848
        %3105 = vst [vmem:[%s192 + $0x90] sm:$0xff] %v2849
        %3106 = vst [vmem:[%s192 + $0x98] sm:$0xff] %v2850
        %3107 = vst [vmem:[%s192 + $0xa0] sm:$0xff] %v2851
        %3108 = vst [vmem:[%s192 + $0xa8] sm:$0xff] %v2852
        %3109 = vst [vmem:[%s192 + $0xb0] sm:$0xff] %v2853
        %3110 = vst [vmem:[%s192 + $0xb8] sm:$0xff] %v2854
        %3111 = vst [vmem:[%s192 + $0xc0] sm:$0xff] %v2855
        %3112 = vst [vmem:[%s192 + $0xc8] sm:$0xff] %v2856
        %3113 = vst [vmem:[%s192 + $0xd0] sm:$0xff] %v2857
        %3114 = vst [vmem:[%s192 + $0xd8] sm:$0xff] %v2858
        %3115 = vst [vmem:[%s192 + $0xe0] sm:$0xff] %v2859
        %3116 = vst [vmem:[%s192 + $0xe8] sm:$0xff] %v2860
        %3117 = vst [vmem:[%s192 + $0xf0] sm:$0xff] %v2861
        %3118 = vst [vmem:[%s192 + $0xf8] sm:$0xff] %v2862
        %3119 = vst [vmem:[%s192 + $0x100] sm:$0xff] %v2863
        %3120 = vst [vmem:[%s192 + $0x108] sm:$0xff] %v2864
        %3121 = vst [vmem:[%s192 + $0x110] sm:$0xff] %v2865
        %3122 = vst [vmem:[%s192 + $0x118] sm:$0xff] %v2866
        %3123 = vst [vmem:[%s192 + $0x120] sm:$0xff] %v2867
        %3124 = vst [vmem:[%s192 + $0x128] sm:$0xff] %v2868
        %3125 = vst [vmem:[%s192 + $0x130] sm:$0xff] %v2869
        %3126 = vst [vmem:[%s192 + $0x138] sm:$0xff] %v2870
        %3127 = vst [vmem:[%s192 + $0x140] sm:$0xff] %v2871
        %3128 = vst [vmem:[%s192 + $0x148] sm:$0xff] %v2872
        %3129 = vst [vmem:[%s192 + $0x150] sm:$0xff] %v2873
        %3130 = vst [vmem:[%s192 + $0x158] sm:$0xff] %v2874
        %3131 = vst [vmem:[%s192 + $0x160] sm:$0xff] %v2875
        %3132 = vst [vmem:[%s192 + $0x168] sm:$0xff] %v2876
        %3133 = vst [vmem:[%s192 + $0x170] sm:$0xff] %v2877
        %3134 = vst [vmem:[%s192 + $0x178] sm:$0xff] %v2878
        %3135 = vst [vmem:[%s192 + $0x180] sm:$0xff] %v2879
        %3136 = vst [vmem:[%s192 + $0x188] sm:$0xff] %v2880
        %3137 = vst [vmem:[%s192 + $0x190] sm:$0xff] %v2881
        %3138 = vst [vmem:[%s192 + $0x198] sm:$0xff] %v2882
        %3139 = vst [vmem:[%s192 + $0x1a0] sm:$0xff] %v2883
        %3140 = vst [vmem:[%s192 + $0x1a8] sm:$0xff] %v2884
        %3141 = vst [vmem:[%s192 + $0x1b0] sm:$0xff] %v2885
        %3142 = vst [vmem:[%s192 + $0x1b8] sm:$0xff] %v2886
        %3143 = vst [vmem:[%s192 + $0x1c0] sm:$0xff] %v2887
        %3144 = vst [vmem:[%s192 + $0x1c8] sm:$0xff] %v2888
        %3145 = vst [vmem:[%s192 + $0x1d0] sm:$0xff] %v2889
        %3146 = vst [vmem:[%s192 + $0x1d8] sm:$0xff] %v2890
        %3147 = vst [vmem:[%s192 + $0x1e0] sm:$0xff] %v2891
        %3148 = vst [vmem:[%s192 + $0x1e8] sm:$0xff] %v2892
        %3149 = vst [vmem:[%s192 + $0x1f0] sm:$0xff] %v2893
        %3150 = vst [vmem:[%s192 + $0x1f8] sm:$0xff] %v2894
        %3151 = vst [vmem:[%s192 + $0x200] sm:$0xff] %v2895
        %3152 = vst [vmem:[%s192 + $0x208] sm:$0xff] %v2896
        %3153 = vst [vmem:[%s192 + $0x210] sm:$0xff] %v2897
        %3154 = vst [vmem:[%s192 + $0x218] sm:$0xff] %v2898
        %3155 = vst [vmem:[%s192 + $0x220] sm:$0xff] %v2899
        %3156 = vst [vmem:[%s192 + $0x228] sm:$0xff] %v2900
        %3157 = vst [vmem:[%s192 + $0x230] sm:$0xff] %v2901
        %3158 = vst [vmem:[%s192 + $0x238] sm:$0xff] %v2902
        %3159 = vst [vmem:[%s192 + $0x240] sm:$0xff] %v2903
        %3160 = vst [vmem:[%s192 + $0x248] sm:$0xff] %v2904
        %3161 = vst [vmem:[%s192 + $0x250] sm:$0xff] %v2905
        %3162 = vst [vmem:[%s192 + $0x258] sm:$0xff] %v2906
        %3163 = vst [vmem:[%s192 + $0x260] sm:$0xff] %v2907
        %3164 = vst [vmem:[%s192 + $0x268] sm:$0xff] %v2908
        %3165 = vst [vmem:[%s192 + $0x270] sm:$0xff] %v2909
        %3166 = vst [vmem:[%s192 + $0x278] sm:$0xff] %v2910
        %3167 = vst [vmem:[%s192 + $0x280] sm:$0xff] %v2911
        %3168 = vst [vmem:[%s192 + $0x288] sm:$0xff] %v2912
        %3169 = vst [vmem:[%s192 + $0x290] sm:$0xff] %v2913
        %3170 = vst [vmem:[%s192 + $0x298] sm:$0xff] %v2914
        %3171 = vst [vmem:[%s192 + $0x2a0] sm:$0xff] %v2915
        %3172 = vst [vmem:[%s192 + $0x2a8] sm:$0xff] %v2916
        %3173 = vst [vmem:[%s192 + $0x2b0] sm:$0xff] %v2917
        %3174 = vst [vmem:[%s192 + $0x2b8] sm:$0xff] %v2918
        %3175 = vst [vmem:[%s192 + $0x2c0] sm:$0xff] %v2919
        %3176 = vst [vmem:[%s192 + $0x2c8] sm:$0xff] %v2920
        %3177 = vst [vmem:[%s192 + $0x2d0] sm:$0xff] %v2921
        %3178 = vst [vmem:[%s192 + $0x2d8] sm:$0xff] %v2922
        %3179 = vst [vmem:[%s192 + $0x2e0] sm:$0xff] %v2923
        %3180 = vst [vmem:[%s192 + $0x2e8] sm:$0xff] %v2924
        %3181 = vst [vmem:[%s192 + $0x2f0] sm:$0xff] %v2925
        %3182 = vst [vmem:[%s192 + $0x2f8] sm:$0xff] %v2926
        %3183 = vst [vmem:[%s192 + $0x300] sm:$0xff] %v2927
        %3184 = vst [vmem:[%s192 + $0x308] sm:$0xff] %v2928
        %3185 = vst [vmem:[%s192 + $0x310] sm:$0xff] %v2929
        %3186 = vst [vmem:[%s192 + $0x318] sm:$0xff] %v2930
        %3187 = vst [vmem:[%s192 + $0x320] sm:$0xff] %v2931
        %3188 = vst [vmem:[%s192 + $0x328] sm:$0xff] %v2932
        %3189 = vst [vmem:[%s192 + $0x330] sm:$0xff] %v2933
        %3190 = vst [vmem:[%s192 + $0x338] sm:$0xff] %v2934
        %3191 = vst [vmem:[%s192 + $0x340] sm:$0xff] %v2935
        %3192 = vst [vmem:[%s192 + $0x348] sm:$0xff] %v2936
        %3193 = vst [vmem:[%s192 + $0x350] sm:$0xff] %v2937
        %3194 = vst [vmem:[%s192 + $0x358] sm:$0xff] %v2938
        %3195 = vst [vmem:[%s192 + $0x360] sm:$0xff] %v2939
        %3196 = vst [vmem:[%s192 + $0x368] sm:$0xff] %v2940
        %3197 = vst [vmem:[%s192 + $0x370] sm:$0xff] %v2941
        %3198 = vst [vmem:[%s192 + $0x378] sm:$0xff] %v2942
        %3199 = vst [vmem:[%s192 + $0x380] sm:$0xff] %v2943
        %3200 = vst [vmem:[%s192 + $0x388] sm:$0xff] %v2944
        %3201 = vst [vmem:[%s192 + $0x390] sm:$0xff] %v2945
        %3202 = vst [vmem:[%s192 + $0x398] sm:$0xff] %v2946
        %3203 = vst [vmem:[%s192 + $0x3a0] sm:$0xff] %v2947
        %3204 = vst [vmem:[%s192 + $0x3a8] sm:$0xff] %v2948
        %3205 = vst [vmem:[%s192 + $0x3b0] sm:$0xff] %v2949
        %3206 = vst [vmem:[%s192 + $0x3b8] sm:$0xff] %v2950
        %3207 = vst [vmem:[%s192 + $0x3c0] sm:$0xff] %v2951
        %3208 = vst [vmem:[%s192 + $0x3c8] sm:$0xff] %v2952
        %3209 = vst [vmem:[%s192 + $0x3d0] sm:$0xff] %v2953
        %3210 = vst [vmem:[%s192 + $0x3d8] sm:$0xff] %v2954
        %3211 = vst [vmem:[%s192 + $0x3e0] sm:$0xff] %v2955
        %3212 = vst [vmem:[%s192 + $0x3e8] sm:$0xff] %v2956
        %3213 = vst [vmem:[%s192 + $0x3f0] sm:$0xff] %v2957
        %3214 = vst [vmem:[%s192 + $0x3f8] sm:$0xff] %v2958
        %3215 = vst [vmem:[%s192 + $0x400] sm:$0xff] %v2959
        %3216 = vst [vmem:[%s192 + $0x408] sm:$0xff] %v2960
        %3217 = vst [vmem:[%s192 + $0x410] sm:$0xff] %v2961
        %3218 = vst [vmem:[%s192 + $0x418] sm:$0xff] %v2962
        %3219 = vst [vmem:[%s192 + $0x420] sm:$0xff] %v2963
        %3220 = vst [vmem:[%s192 + $0x428] sm:$0xff] %v2964
        %3221 = vst [vmem:[%s192 + $0x430] sm:$0xff] %v2965
        %3222 = vst [vmem:[%s192 + $0x438] sm:$0xff] %v2966
        %3223 = vst [vmem:[%s192 + $0x440] sm:$0xff] %v2967
        %3224 = vst [vmem:[%s192 + $0x448] sm:$0xff] %v2968
        %3225 = vst [vmem:[%s192 + $0x450] sm:$0xff] %v2969
        %3226 = vst [vmem:[%s192 + $0x458] sm:$0xff] %v2970
        %3227 = vst [vmem:[%s192 + $0x460] sm:$0xff] %v2971
        %3228 = vst [vmem:[%s192 + $0x468] sm:$0xff] %v2972
        %3229 = vst [vmem:[%s192 + $0x470] sm:$0xff] %v2973
        %3230 = vst [vmem:[%s192 + $0x478] sm:$0xff] %v2974
        %3231 = vst [vmem:[%s192 + $0x480] sm:$0xff] %v2975
        %3232 = vst [vmem:[%s192 + $0x488] sm:$0xff] %v2976
        %3233 = vst [vmem:[%s192 + $0x490] sm:$0xff] %v2977
        %3234 = vst [vmem:[%s192 + $0x498] sm:$0xff] %v2978
        %3235 = vst [vmem:[%s192 + $0x4a0] sm:$0xff] %v2979
        %3236 = vst [vmem:[%s192 + $0x4a8] sm:$0xff] %v2980
        %3237 = vst [vmem:[%s192 + $0x4b0] sm:$0xff] %v2981
        %3238 = vst [vmem:[%s192 + $0x4b8] sm:$0xff] %v2982
        %3239 = vst [vmem:[%s192 + $0x4c0] sm:$0xff] %v2983
        %3240 = vst [vmem:[%s192 + $0x4c8] sm:$0xff] %v2984
        %3241 = vst [vmem:[%s192 + $0x4d0] sm:$0xff] %v2985
        %3242 = vst [vmem:[%s192 + $0x4d8] sm:$0xff] %v2986
        %3243 = vst [vmem:[%s192 + $0x4e0] sm:$0xff] %v2987
        %3244 = vst [vmem:[%s192 + $0x4e8] sm:$0xff] %v2988
        %3245 = vst [vmem:[%s192 + $0x4f0] sm:$0xff] %v2989
        %3246 = vst [vmem:[%s192 + $0x4f8] sm:$0xff] %v2990
        %3247 = vst [vmem:[%s192 + $0x500] sm:$0xff] %v2991
        %3248 = vst [vmem:[%s192 + $0x508] sm:$0xff] %v2992
        %3249 = vst [vmem:[%s192 + $0x510] sm:$0xff] %v2993
        %3250 = vst [vmem:[%s192 + $0x518] sm:$0xff] %v2994
        %3251 = vst [vmem:[%s192 + $0x520] sm:$0xff] %v2995
        %3252 = vst [vmem:[%s192 + $0x528] sm:$0xff] %v2996
        %3253 = vst [vmem:[%s192 + $0x530] sm:$0xff] %v2997
        %3254 = vst [vmem:[%s192 + $0x538] sm:$0xff] %v2998
        %3255 = vst [vmem:[%s192 + $0x540] sm:$0xff] %v2999
        %3256 = vst [vmem:[%s192 + $0x548] sm:$0xff] %v3000
        %3257 = vst [vmem:[%s192 + $0x550] sm:$0xff] %v3001
        %3258 = vst [vmem:[%s192 + $0x558] sm:$0xff] %v3002
        %3259 = vst [vmem:[%s192 + $0x560] sm:$0xff] %v3003
        %3260 = vst [vmem:[%s192 + $0x568] sm:$0xff] %v3004
        %3261 = vst [vmem:[%s192 + $0x570] sm:$0xff] %v3005
        %3262 = vst [vmem:[%s192 + $0x578] sm:$0xff] %v3006
        %3263 = vst [vmem:[%s192 + $0x580] sm:$0xff] %v3007
        %3264 = vst [vmem:[%s192 + $0x588] sm:$0xff] %v3008
        %3265 = vst [vmem:[%s192 + $0x590] sm:$0xff] %v3009
        %3266 = vst [vmem:[%s192 + $0x598] sm:$0xff] %v3010
        %3267 = vst [vmem:[%s192 + $0x5a0] sm:$0xff] %v3011
        %3268 = vst [vmem:[%s192 + $0x5a8] sm:$0xff] %v3012
        %3269 = vst [vmem:[%s192 + $0x5b0] sm:$0xff] %v3013
        %3270 = vst [vmem:[%s192 + $0x5b8] sm:$0xff] %v3014
        %3271 = vst [vmem:[%s192 + $0x5c0] sm:$0xff] %v3015
        %3272 = vst [vmem:[%s192 + $0x5c8] sm:$0xff] %v3016
        %3273 = vst [vmem:[%s192 + $0x5d0] sm:$0xff] %v3017
        %3274 = vst [vmem:[%s192 + $0x5d8] sm:$0xff] %v3018
        %3275 = vst [vmem:[%s192 + $0x5e0] sm:$0xff] %v3019
        %3276 = vst [vmem:[%s192 + $0x5e8] sm:$0xff] %v3020
        %3277 = vst [vmem:[%s192 + $0x5f0] sm:$0xff] %v3021
        %3278 = vst [vmem:[%s192 + $0x5f8] sm:$0xff] %v3022
        %3279 = vst [vmem:[%s192 + $0x600] sm:$0xff] %v3023
        %3280 = vst [vmem:[%s192 + $0x608] sm:$0xff] %v3024
        %3281 = vst [vmem:[%s192 + $0x610] sm:$0xff] %v3025
        %3282 = vst [vmem:[%s192 + $0x618] sm:$0xff] %v3026
        %3283 = vst [vmem:[%s192 + $0x620] sm:$0xff] %v3027
        %3284 = vst [vmem:[%s192 + $0x628] sm:$0xff] %v3028
        %3285 = vst [vmem:[%s192 + $0x630] sm:$0xff] %v3029
        %3286 = vst [vmem:[%s192 + $0x638] sm:$0xff] %v3030
        %3287 = vst [vmem:[%s192 + $0x640] sm:$0xff] %v3031
        %3288 = vst [vmem:[%s192 + $0x648] sm:$0xff] %v3032
        %3289 = vst [vmem:[%s192 + $0x650] sm:$0xff] %v3033
        %3290 = vst [vmem:[%s192 + $0x658] sm:$0xff] %v3034
        %3291 = vst [vmem:[%s192 + $0x660] sm:$0xff] %v3035
        %3292 = vst [vmem:[%s192 + $0x668] sm:$0xff] %v3036
        %3293 = vst [vmem:[%s192 + $0x670] sm:$0xff] %v3037
        %3294 = vst [vmem:[%s192 + $0x678] sm:$0xff] %v3038
        %3295 = vst [vmem:[%s192 + $0x680] sm:$0xff] %v3039
        %3296 = vst [vmem:[%s192 + $0x688] sm:$0xff] %v3040
        %3297 = vst [vmem:[%s192 + $0x690] sm:$0xff] %v3041
        %3298 = vst [vmem:[%s192 + $0x698] sm:$0xff] %v3042
        %3299 = vst [vmem:[%s192 + $0x6a0] sm:$0xff] %v3043
        %3300 = vst [vmem:[%s192 + $0x6a8] sm:$0xff] %v3044
        %3301 = vst [vmem:[%s192 + $0x6b0] sm:$0xff] %v3045
        %3302 = vst [vmem:[%s192 + $0x6b8] sm:$0xff] %v3046
        %3303 = vst [vmem:[%s192 + $0x6c0] sm:$0xff] %v3047
        %3304 = vst [vmem:[%s192 + $0x6c8] sm:$0xff] %v3048
        %3305 = vst [vmem:[%s192 + $0x6d0] sm:$0xff] %v3049
        %3306 = vst [vmem:[%s192 + $0x6d8] sm:$0xff] %v3050
        %3307 = vst [vmem:[%s192 + $0x6e0] sm:$0xff] %v3051
        %3308 = vst [vmem:[%s192 + $0x6e8] sm:$0xff] %v3052
        %3309 = vst [vmem:[%s192 + $0x6f0] sm:$0xff] %v3053
        %3310 = vst [vmem:[%s192 + $0x6f8] sm:$0xff] %v3054
        %3311 = vst [vmem:[%s192 + $0x700] sm:$0xff] %v3055
        %3312 = vst [vmem:[%s192 + $0x708] sm:$0xff] %v3056
        %3313 = vst [vmem:[%s192 + $0x710] sm:$0xff] %v3057
        %3314 = vst [vmem:[%s192 + $0x718] sm:$0xff] %v3058
        %3315 = vst [vmem:[%s192 + $0x720] sm:$0xff] %v3059
        %3316 = vst [vmem:[%s192 + $0x728] sm:$0xff] %v3060
        %3317 = vst [vmem:[%s192 + $0x730] sm:$0xff] %v3061
        %3318 = vst [vmem:[%s192 + $0x738] sm:$0xff] %v3062
        %3319 = vst [vmem:[%s192 + $0x740] sm:$0xff] %v3063
        %3320 = vst [vmem:[%s192 + $0x748] sm:$0xff] %v3064
        %3321 = vst [vmem:[%s192 + $0x750] sm:$0xff] %v3065
        %3322 = vst [vmem:[%s192 + $0x758] sm:$0xff] %v3066
        %3323 = vst [vmem:[%s192 + $0x760] sm:$0xff] %v3067
        %3324 = vst [vmem:[%s192 + $0x768] sm:$0xff] %v3068
        %3325 = vst [vmem:[%s192 + $0x770] sm:$0xff] %v3069
        %3326 = vst [vmem:[%s192 + $0x778] sm:$0xff] %v3070
        %3327 = vst [vmem:[%s192 + $0x780] sm:$0xff] %v3071
        %3328 = vst [vmem:[%s192 + $0x788] sm:$0xff] %v3072
        %3329 = vst [vmem:[%s192 + $0x790] sm:$0xff] %v3073
        %3330 = vst [vmem:[%s192 + $0x798] sm:$0xff] %v3074
        %3331 = vst [vmem:[%s192 + $0x7a0] sm:$0xff] %v3075
        %3332 = vst [vmem:[%s192 + $0x7a8] sm:$0xff] %v3076
        %3333 = vst [vmem:[%s192 + $0x7b0] sm:$0xff] %v3077
        %3334 = vst [vmem:[%s192 + $0x7b8] sm:$0xff] %v3078
        %3335 = vst [vmem:[%s192 + $0x7c0] sm:$0xff] %v3079
        %3336 = vst [vmem:[%s192 + $0x7c8] sm:$0xff] %v3080
        %3337 = vst [vmem:[%s192 + $0x7d0] sm:$0xff] %v3081
        %3338 = vst [vmem:[%s192 + $0x7d8] sm:$0xff] %v3082
        %3339 = vst [vmem:[%s192 + $0x7e0] sm:$0xff] %v3083
        %3340 = vst [vmem:[%s192 + $0x7e8] sm:$0xff] %v3084
        %3341 = vst [vmem:[%s192 + $0x7f0] sm:$0xff] %v3085
        %3342 = vst [vmem:[%s192 + $0x7f8] sm:$0xff] %v3086
        %s3343 = sand.u32 %s95, 1
        %s3344 = scalar_lea.sflag [#allocation4], %s3343
        %s3345 = sand.u32 %s95, 1
        %s3346 = smul.addr %s3345, 2048
        %s3347 = scalar_lea.vmem [#allocation5], %s3346
        // Predicated region
        $region33: #{tpu_custom_call.1} parent=27 // pred_check
          %p3348 = pneg %p105
        $region34: #{tpu_custom_call.1} parent=27 // pred_check_branch
          %3350 = sbr.rel (%p3348) target = $region36
        $region35: #{tpu_custom_call.1} parent=27 // pred_region
          %s3351 = smul.u32 16, %s24
          %s3353 = ssub.s32 32768, 32768
          %3354 = vsyncadd %s3344, %s3353
          %s3355 = smul.addr %s23, 512
          %s3356 = sadd.s32 %s3351, %s3355
          %s3357 = smul.addr %s3356, 128
          %s3358 = scalar_lea.hbm %s2, %s3357
          %s3359 = sshll.u32 %s3347, 4
          %s3360 = int_to_ptr.vmem [resolvable:$true] %s3359
          %3365 = dma.vmem_to_hbm [thread:$0]  %s3360, 32768, %s3358, %s3344, 2048, 4096, 128
        $region36: #{tpu_custom_call.1} parent=27 // pred_fallthru
          _
      $region28: #{tpu_custom_call.1} parent=5 // pred_fallthru
        _
      %p3366 = scmp.le.s32.totalorder 2, %s14
      // Predicated region
      $region37: #{tpu_custom_call.1} parent=5 // pred_check
        %p3367 = pneg %p3366
      $region38: #{tpu_custom_call.1} parent=5 // pred_check_branch
        %3369 = sbr.rel (%p3367) target = $region40
      $region39: #{tpu_custom_call.1} parent=5 // pred_region
        %s3370 = ssub.s32 %s14, 2
        // Predicated region
        $region41: #{tpu_custom_call.1} parent=39 // pred_check
          %p3371 = pneg %p111
        $region42: #{tpu_custom_call.1} parent=39 // pred_check_branch
          %3373 = sbr.rel (%p3371) target = $region44
        $region43: #{tpu_custom_call.1} parent=39 // pred_region
          %s3374 = sand.u32 %s96, 1
          %s3375 = scalar_lea.sflag [#allocation4], %s3374
          %s3376 = sand.u32 %s96, 1
          %s3377 = smul.addr %s3376, 2048
          %s3378 = scalar_lea.vmem [#allocation5], %s3377
          %3379 = dma.done %s3375, 32768
        $region44: #{tpu_custom_call.1} parent=39 // pred_fallthru
          _
      $region40: #{tpu_custom_call.1} parent=5 // pred_fallthru
        _
    $region6: #{tpu_custom_call.1} parent=1 // loop_footer
      %s18 = sadd.s32 1, %s14
    $region7: #{tpu_custom_call.1} parent=1 // loop_footer_branch
      %13 = sbr.rel target = $region3
    $region8: #{tpu_custom_call.1} parent=1 // loop_exit
      _
    %3380 = vsyncpa [#allocation3], 1
    %s3381 = scalar_lea.sflag [#allocation3], 1
    %3382 = vsyncpa %s3381, 1
    %3383 = vsyncpa [#allocation4], 1
    %s3384 = scalar_lea.sflag [#allocation4], 1
    %3385 = vsyncpa %s3384, 1

</llo_original>
